<compile_context>
chip_gen: v7x
topology: tpu7x:2x2x1
jax: 0.10.0
libtpu: 0.0.40
codegen_flags: <defaults>
</compile_context>

<pallas_src>
import numpy as np

import jax
import jax.numpy as jnp
from jax.experimental import pallas as pl
from jax.experimental.pallas import tpu as pltpu

NEG_SLOPE = 0.01
BN_EPS = 1e-5


# --------------------------------------------------------------------------
# Fused encoder kernel (single pallas_call, everything VMEM resident)
# --------------------------------------------------------------------------
def _encoder_kernel(*refs):
    in_refs = refs[:-3]
    z_ref, mu_ref, lv_ref = refs[-3:]
    it = iter(in_refs)

    # Layer-0 activation: (N*28, 28) lane-dense slab.
    A = next(it)[...]

    # --- three fused Conv(3x3,s2,p1) -> LeakyReLU -> BatchNorm stages -------
    for _layer in range(3):
        S = next(it)[...]          # (3, N*OH, N*Hin)   0/1 row-selection (H taps)
        M = next(it)[...]          # (3, Win*Cin, OW*Cout) folded conv weights
        bfull = next(it)[...]      # (1, OW*Cout)       conv bias, lane-tiled
        G = next(it)[...]          # (OW*Cout, Cout)    lane -> channel fold
        Gt = next(it)[...]         # (Cout, OW*Cout)    channel -> lane expand
        gamma = next(it)[...]      # (1, Cout)
        betafull = next(it)[...]   # (1, OW*Cout)       BN beta, lane-tiled

        # Conv as 3 big-K matmuls: Y = b + sum_i (S_i @ A) @ M_i
        y = bfull
        for i in range(3):
            xi = jnp.dot(S[i], A, preferred_element_type=jnp.float32)
            y = y + jnp.dot(xi, M[i], preferred_element_type=jnp.float32)

        # LeakyReLU
        y = jnp.where(y >= 0.0, y, NEG_SLOPE * y)

        # BatchNorm2d (training-mode batch statistics, two-pass variance).
        rows = y.shape[0]
        ow = G.shape[0] // G.shape[1]
        inv_cnt = 1.0 / float(rows * ow)

        row_sum = jnp.sum(y, axis=0, keepdims=True)                  # (1, OW*C)
        ch_mean = jnp.dot(row_sum, G,
                          preferred_element_type=jnp.float32) * inv_cnt   # (1, C)
        mean_full = jnp.dot(ch_mean, Gt,
                            preferred_element_type=jnp.float32)           # (1, OW*C)
        d = y - mean_full
        ch_var = jnp.dot(jnp.sum(d * d, axis=0, keepdims=True), G,
                         preferred_element_type=jnp.float32) * inv_cnt    # (1, C)
        scale = gamma * jax.lax.rsqrt(ch_var + BN_EPS)                    # (1, C)
        scale_full = jnp.dot(scale, Gt,
                             preferred_element_type=jnp.float32)          # (1, OW*C)

        # Normalized activation becomes the next layer's lane-dense input.
        A = d * scale_full + betafull

    # --- mu / log_var heads + reparametrization ------------------------------
    Hsel = next(it)[...]           # (4, N, N*4)  picks feature-map row h per n
    Wh = next(it)[...]             # (4, 256, 2L) NCHW-flatten folded, [mu | lv]
    bh = next(it)[...]             # (1, 2L)
    epsv = next(it)[...]           # (N, L)

    ml = bh
    for h in range(4):
        xh = jnp.dot(Hsel[h], A, preferred_element_type=jnp.float32)   # (N, 256)
        ml = ml + jnp.dot(xh, Wh[h], preferred_element_type=jnp.float32)

    L = epsv.shape[1]
    mu = ml[:, :L]
    lv = ml[:, L:]
    z = mu + epsv * jnp.exp(lv * 0.5)

    z_ref[...] = z
    mu_ref[...] = mu
    lv_ref[...] = lv


# --------------------------------------------------------------------------
# Wrapper: build the constant selection / folded-weight matrices (tiny, done
# once at trace time) and launch the single fused kernel.
# --------------------------------------------------------------------------
def _full_spec(shape):
    zeros = (0,) * len(shape)
    return pl.BlockSpec(shape, lambda i, _z=zeros: _z)


def _row_select(n_batch, h_in, oh, i):
    """(N*OH, N*Hin) 0/1 matrix selecting padded row 2*oh+i (zero row if pad)."""
    s = np.zeros((n_batch * oh, n_batch * h_in), np.float32)
    for n in range(n_batch):
        for o in range(oh):
            r = 2 * o + i - 1
            if 0 <= r < h_in:
                s[n * oh + o, n * h_in + r] = 1.0
    return s


def _conv_matrix(w, i, w_in, ow):
    """Fold 3 W-taps + channel mixing of kernel row i into (Win*Cin, OW*Cout)."""
    cout, cin, _, _ = w.shape
    m = jnp.zeros((w_in * cin, ow * cout), jnp.float32)
    for j in range(3):
        r = np.zeros((w_in, ow), np.float32)
        for o in range(ow):
            wc = 2 * o + j - 1
            if 0 <= wc < w_in:
                r[wc, o] = 1.0
        wt = w[:, :, i, j].T.astype(jnp.float32)                    # (Cin, Cout)
        m = m + (r[:, None, :, None] * wt[None, :, None, :]).reshape(
            w_in * cin, ow * cout)
    return m


def encoder_forward(x, params, eps):
    """x: (N, 1, 28, 28) f32, eps: (N, latent) f32.  Returns (z, mu, log_var)."""
    N = x.shape[0]
    assert x.shape[1:] == (1, 28, 28), "Encoder expects (N, 1, 28, 28) inputs"
    L = params["mu"]["w"].shape[0]

    # (Hin, OH, Cin, Cout) per conv layer (square spatial).
    dims = [(28, 14, 1, 16), (14, 7, 16, 32), (7, 4, 32, 64)]

    inputs = [x.astype(jnp.float32).reshape(N * 28, 28)]

    for name, (h_in, oh, cin, cout) in zip(("l1", "l2", "l3"), dims):
        p = params[name]
        s = np.stack([_row_select(N, h_in, oh, i) for i in range(3)], axis=0)
        m = jnp.stack([_conv_matrix(p["w"], i, h_in, oh) for i in range(3)],
                      axis=0)
        bfull = jnp.tile(p["b"].astype(jnp.float32), oh).reshape(1, oh * cout)
        g = np.zeros((oh * cout, cout), np.float32)
        for o in range(oh):
            g[o * cout:(o + 1) * cout, :] = np.eye(cout, dtype=np.float32)
        gamma = p["gamma"].astype(jnp.float32).reshape(1, cout)
        betafull = jnp.tile(p["beta"].astype(jnp.float32), oh).reshape(
            1, oh * cout)
        inputs += [jnp.asarray(s), m, bfull, jnp.asarray(g),
                   jnp.asarray(g.T.copy()), gamma, betafull]

    # Head: fold the NCHW flatten into the weights; one (256, 2L) block per
    # feature-map row h, consumed as 4 K=256 chunks of the K=1024 contraction.
    oh3, c3 = 4, 64
    hsel = np.zeros((4, N, N * oh3), np.float32)
    for h in range(4):
        for n in range(N):
            hsel[h, n, n * oh3 + h] = 1.0

    def head_rows(w, h):                       # (L, 1024) -> (OW3*C3, L)
        wr = w.astype(jnp.float32).reshape(L, c3, oh3, oh3)   # (l, c, h, w)
        return wr[:, :, h, :].transpose(2, 1, 0).reshape(oh3 * c3, L)

    wh = jnp.stack([jnp.concatenate([head_rows(params["mu"]["w"], h),
                                     head_rows(params["log_var"]["w"], h)],
                                    axis=1)
                    for h in range(4)], axis=0)               # (4, 256, 2L)
    bh = jnp.concatenate([params["mu"]["b"],
                          params["log_var"]["b"]]).astype(jnp.float32).reshape(
        1, 2 * L)
    inputs += [jnp.asarray(hsel), wh, bh, eps.astype(jnp.float32)]

    out_shape = tuple(jax.ShapeDtypeStruct((N, L), jnp.float32)
                      for _ in range(3))
    z, mu, log_var = pl.pallas_call(
        _encoder_kernel,
        out_shape=out_shape,
        grid=(1,),
        in_specs=[_full_spec(a.shape) for a in inputs],
        out_specs=tuple(_full_spec((N, L)) for _ in range(3)),
        compiler_params=pltpu.CompilerParams(
            dimension_semantics=("arbitrary",)),
    )(*inputs)
    return z, mu, log_var


# --------------------------------------------------------------------------
# Pure-JAX reference (same forward semantics) and deterministic init
# --------------------------------------------------------------------------
def encoder_reference(x, params, eps):
    prec = jax.lax.Precision.HIGHEST
    h = x
    for layer in ("l1", "l2", "l3"):
        p = params[layer]
        h = jax.lax.conv_general_dilated(
            h, p["w"], window_strides=(2, 2), padding=((1, 1), (1, 1)),
            dimension_numbers=("NCHW", "OIHW", "NCHW"), precision=prec)
        h = h + p["b"].reshape(1, -1, 1, 1)
        h = jnp.where(h >= 0.0, h, NEG_SLOPE * h)
        mean = jnp.mean(h, axis=(0, 2, 3), keepdims=True)
        var = jnp.mean((h - mean) ** 2, axis=(0, 2, 3), keepdims=True)
        h = (h - mean) * jax.lax.rsqrt(var + BN_EPS)
        h = h * p["gamma"].reshape(1, -1, 1, 1) + p["beta"].reshape(1, -1, 1, 1)
    flat = h.reshape(x.shape[0], -1)
    mu = jnp.dot(flat, params["mu"]["w"].T, precision=prec) + params["mu"]["b"]
    lv = (jnp.dot(flat, params["log_var"]["w"].T, precision=prec)
          + params["log_var"]["b"])
    z = mu + eps * jnp.exp(lv * 0.5)
    return z, mu, lv


def init_params(key, latent_dim):
    # TODO(synk): `initialize_weights` from the reference repo is not provided;
    # deterministic synthetic init with matching shapes is used instead.
    conv_shapes = [("l1", 16, 1), ("l2", 32, 16), ("l3", 64, 32)]
    params = {}
    keys = jax.random.split(key, 8)
    ki = 0
    for name, cout, cin in conv_shapes:
        params[name] = {
            "w": 0.05 * jax.random.normal(keys[ki], (cout, cin, 3, 3),
                                          jnp.float32),
            "b": 0.01 * jax.random.normal(keys[ki + 1], (cout,), jnp.float32),
            "gamma": jnp.ones((cout,), jnp.float32),
            "beta": jnp.zeros((cout,), jnp.float32),
        }
        ki += 2
    params["mu"] = {
        "w": 0.02 * jax.random.normal(keys[ki], (latent_dim, 1024), jnp.float32),
        "b": jnp.zeros((latent_dim,), jnp.float32),
    }
    params["log_var"] = {
        "w": 0.02 * jax.random.normal(keys[ki + 1], (latent_dim, 1024),
                                      jnp.float32),
        "b": jnp.zeros((latent_dim,), jnp.float32),
    }
    return params


if __name__ == "__main__":
    key = jax.random.PRNGKey(0)
    k_x, k_p, k_eps = jax.random.split(key, 3)

    BATCH = 2
    LATENT = 8
    x = jax.random.normal(k_x, (BATCH, 1, 28, 28), jnp.float32)
    params = init_params(k_p, LATENT)
    eps = jax.random.normal(k_eps, (BATCH, LATENT), jnp.float32)

    fwd = jax.jit(encoder_forward)
    z, mu, log_var = fwd(x, params, eps)
    jax.block_until_ready((z, mu, log_var))

    assert z.shape == (BATCH, LATENT)
    assert mu.shape == (BATCH, LATENT)
    assert log_var.shape == (BATCH, LATENT)

    # Self-check against a pure-JAX/XLA reference of the same forward pass.
    z_r, mu_r, lv_r = encoder_reference(x, params, eps)
    for got, want in ((z, z_r), (mu, mu_r), (log_var, lv_r)):
        assert bool(jnp.allclose(got, want, rtol=1e-2, atol=1e-2)), (
            "Pallas encoder diverges from the pure-JAX reference")

    print("KERNEL_OK")
</pallas_src>

<mosaic_0001>
module attributes {stable_mosaic.version = 11 : i64} {
  func.func @_encoder_kernel(%arg0: i32, %arg1: memref<56x28xf32, #tpu.memory_space<vmem>>, %arg2: memref<3x28x56xf32, #tpu.memory_space<vmem>>, %arg3: memref<3x28x224xf32, #tpu.memory_space<vmem>>, %arg4: memref<1x224xf32, #tpu.memory_space<vmem>>, %arg5: memref<224x16xf32, #tpu.memory_space<vmem>>, %arg6: memref<16x224xf32, #tpu.memory_space<vmem>>, %arg7: memref<1x16xf32, #tpu.memory_space<vmem>>, %arg8: memref<1x224xf32, #tpu.memory_space<vmem>>, %arg9: memref<3x14x28xf32, #tpu.memory_space<vmem>>, %arg10: memref<3x224x224xf32, #tpu.memory_space<vmem>>, %arg11: memref<1x224xf32, #tpu.memory_space<vmem>>, %arg12: memref<224x32xf32, #tpu.memory_space<vmem>>, %arg13: memref<32x224xf32, #tpu.memory_space<vmem>>, %arg14: memref<1x32xf32, #tpu.memory_space<vmem>>, %arg15: memref<1x224xf32, #tpu.memory_space<vmem>>, %arg16: memref<3x8x14xf32, #tpu.memory_space<vmem>>, %arg17: memref<3x224x256xf32, #tpu.memory_space<vmem>>, %arg18: memref<1x256xf32, #tpu.memory_space<vmem>>, %arg19: memref<256x64xf32, #tpu.memory_space<vmem>>, %arg20: memref<64x256xf32, #tpu.memory_space<vmem>>, %arg21: memref<1x64xf32, #tpu.memory_space<vmem>>, %arg22: memref<1x256xf32, #tpu.memory_space<vmem>>, %arg23: memref<4x2x8xf32, #tpu.memory_space<vmem>>, %arg24: memref<4x256x16xf32, #tpu.memory_space<vmem>>, %arg25: memref<1x16xf32, #tpu.memory_space<vmem>>, %arg26: memref<2x8xf32, #tpu.memory_space<vmem>>, %arg27: memref<2x8xf32, #tpu.memory_space<vmem>>, %arg28: memref<2x8xf32, #tpu.memory_space<vmem>>, %arg29: memref<2x8xf32, #tpu.memory_space<vmem>>) attributes {dimension_semantics = [#tpu.dimension_semantics<arbitrary>], iteration_bounds = array<i64: 1>, scalar_prefetch = 0 : i64, scratch_operands = 0 : i64, tpu.core_type = #tpu.core_type<tc>, window_params = [{pipeline_mode = #tpu.pipeline_mode<synchronous>, transform_indices = @transform_0, window_bounds = array<i64: 56, 28>}, {pipeline_mode = #tpu.pipeline_mode<synchronous>, transform_indices = @transform_1, window_bounds = array<i64: 3, 28, 56>}, {pipeline_mode = #tpu.pipeline_mode<synchronous>, transform_indices = @transform_2, window_bounds = array<i64: 3, 28, 224>}, {pipeline_mode = #tpu.pipeline_mode<synchronous>, transform_indices = @transform_3, window_bounds = array<i64: 1, 224>}, {pipeline_mode = #tpu.pipeline_mode<synchronous>, transform_indices = @transform_4, window_bounds = array<i64: 224, 16>}, {pipeline_mode = #tpu.pipeline_mode<synchronous>, transform_indices = @transform_5, window_bounds = array<i64: 16, 224>}, {pipeline_mode = #tpu.pipeline_mode<synchronous>, transform_indices = @transform_6, window_bounds = array<i64: 1, 16>}, {pipeline_mode = #tpu.pipeline_mode<synchronous>, transform_indices = @transform_7, window_bounds = array<i64: 1, 224>}, {pipeline_mode = #tpu.pipeline_mode<synchronous>, transform_indices = @transform_8, window_bounds = array<i64: 3, 14, 28>}, {pipeline_mode = #tpu.pipeline_mode<synchronous>, transform_indices = @transform_9, window_bounds = array<i64: 3, 224, 224>}, {pipeline_mode = #tpu.pipeline_mode<synchronous>, transform_indices = @transform_10, window_bounds = array<i64: 1, 224>}, {pipeline_mode = #tpu.pipeline_mode<synchronous>, transform_indices = @transform_11, window_bounds = array<i64: 224, 32>}, {pipeline_mode = #tpu.pipeline_mode<synchronous>, transform_indices = @transform_12, window_bounds = array<i64: 32, 224>}, {pipeline_mode = #tpu.pipeline_mode<synchronous>, transform_indices = @transform_13, window_bounds = array<i64: 1, 32>}, {pipeline_mode = #tpu.pipeline_mode<synchronous>, transform_indices = @transform_14, window_bounds = array<i64: 1, 224>}, {pipeline_mode = #tpu.pipeline_mode<synchronous>, transform_indices = @transform_15, window_bounds = array<i64: 3, 8, 14>}, {pipeline_mode = #tpu.pipeline_mode<synchronous>, transform_indices = @transform_16, window_bounds = array<i64: 3, 224, 256>}, {pipeline_mode = #tpu.pipeline_mode<synchronous>, transform_indices = @transform_17, window_bounds = array<i64: 1, 256>}, {pipeline_mode = #tpu.pipeline_mode<synchronous>, transform_indices = @transform_18, window_bounds = array<i64: 256, 64>}, {pipeline_mode = #tpu.pipeline_mode<synchronous>, transform_indices = @transform_19, window_bounds = array<i64: 64, 256>}, {pipeline_mode = #tpu.pipeline_mode<synchronous>, transform_indices = @transform_20, window_bounds = array<i64: 1, 64>}, {pipeline_mode = #tpu.pipeline_mode<synchronous>, transform_indices = @transform_21, window_bounds = array<i64: 1, 256>}, {pipeline_mode = #tpu.pipeline_mode<synchronous>, transform_indices = @transform_22, window_bounds = array<i64: 4, 2, 8>}, {pipeline_mode = #tpu.pipeline_mode<synchronous>, transform_indices = @transform_23, window_bounds = array<i64: 4, 256, 16>}, {pipeline_mode = #tpu.pipeline_mode<synchronous>, transform_indices = @transform_24, window_bounds = array<i64: 1, 16>}, {pipeline_mode = #tpu.pipeline_mode<synchronous>, transform_indices = @transform_25, window_bounds = array<i64: 2, 8>}, {pipeline_mode = #tpu.pipeline_mode<synchronous>, transform_indices = @transform_26, window_bounds = array<i64: 2, 8>}, {pipeline_mode = #tpu.pipeline_mode<synchronous>, transform_indices = @transform_27, window_bounds = array<i64: 2, 8>}, {pipeline_mode = #tpu.pipeline_mode<synchronous>, transform_indices = @transform_28, window_bounds = array<i64: 2, 8>}]} {
    %c0 = arith.constant 0 : index
    %c0_0 = arith.constant 0 : index
    %0 = vector.load %arg1[%c0, %c0_0] : memref<56x28xf32, #tpu.memory_space<vmem>>, vector<56x28xf32>
    %c0_1 = arith.constant 0 : index
    %c0_2 = arith.constant 0 : index
    %c0_3 = arith.constant 0 : index
    %1 = vector.load %arg2[%c0_1, %c0_2, %c0_3] : memref<3x28x56xf32, #tpu.memory_space<vmem>>, vector<3x28x56xf32>
    %c0_4 = arith.constant 0 : index
    %c0_5 = arith.constant 0 : index
    %c0_6 = arith.constant 0 : index
    %2 = vector.load %arg3[%c0_4, %c0_5, %c0_6] : memref<3x28x224xf32, #tpu.memory_space<vmem>>, vector<3x28x224xf32>
    %c0_7 = arith.constant 0 : index
    %c0_8 = arith.constant 0 : index
    %3 = vector.load %arg4[%c0_7, %c0_8] : memref<1x224xf32, #tpu.memory_space<vmem>>, vector<1x224xf32>
    %c0_9 = arith.constant 0 : index
    %c0_10 = arith.constant 0 : index
    %4 = vector.load %arg5[%c0_9, %c0_10] : memref<224x16xf32, #tpu.memory_space<vmem>>, vector<224x16xf32>
    %c0_11 = arith.constant 0 : index
    %c0_12 = arith.constant 0 : index
    %5 = vector.load %arg6[%c0_11, %c0_12] : memref<16x224xf32, #tpu.memory_space<vmem>>, vector<16x224xf32>
    %c0_13 = arith.constant 0 : index
    %c0_14 = arith.constant 0 : index
    %6 = vector.load %arg7[%c0_13, %c0_14] : memref<1x16xf32, #tpu.memory_space<vmem>>, vector<1x16xf32>
    %c0_15 = arith.constant 0 : index
    %c0_16 = arith.constant 0 : index
    %7 = vector.load %arg8[%c0_15, %c0_16] : memref<1x224xf32, #tpu.memory_space<vmem>>, vector<1x224xf32>
    %8 = vector.extract_strided_slice %1 {offsets = [0, 0, 0], sizes = [1, 28, 56], strides = [1, 1, 1]} : vector<3x28x56xf32> to vector<1x28x56xf32>
    %9 = vector.shape_cast %8 : vector<1x28x56xf32> to vector<28x56xf32>
    %cst = arith.constant dense<0.000000e+00> : vector<28x28xf32>
    %10 = tpu.matmul %9, %0, %cst {dimension_numbers = #tpu.dot_dimension_numbers<[1], [0], [0], [1], [0, 0, 1, 1], [], []>} : vector<28x56xf32>, vector<56x28xf32>, vector<28x28xf32> -> vector<28x28xf32>
    %11 = vector.extract_strided_slice %2 {offsets = [0, 0, 0], sizes = [1, 28, 224], strides = [1, 1, 1]} : vector<3x28x224xf32> to vector<1x28x224xf32>
    %12 = vector.shape_cast %11 : vector<1x28x224xf32> to vector<28x224xf32>
    %cst_17 = arith.constant dense<0.000000e+00> : vector<28x224xf32>
    %13 = tpu.matmul %10, %12, %cst_17 {dimension_numbers = #tpu.dot_dimension_numbers<[1], [0], [0], [1], [0, 0, 1, 1], [], []>} : vector<28x28xf32>, vector<28x224xf32>, vector<28x224xf32> -> vector<28x224xf32>
    %14 = vector.broadcast %3 : vector<1x224xf32> to vector<28x224xf32>
    %15 = arith.addf %14, %13 : vector<28x224xf32>
    %16 = vector.extract_strided_slice %1 {offsets = [1, 0, 0], sizes = [1, 28, 56], strides = [1, 1, 1]} : vector<3x28x56xf32> to vector<1x28x56xf32>
    %17 = vector.shape_cast %16 : vector<1x28x56xf32> to vector<28x56xf32>
    %cst_18 = arith.constant dense<0.000000e+00> : vector<28x28xf32>
    %18 = tpu.matmul %17, %0, %cst_18 {dimension_numbers = #tpu.dot_dimension_numbers<[1], [0], [0], [1], [0, 0, 1, 1], [], []>} : vector<28x56xf32>, vector<56x28xf32>, vector<28x28xf32> -> vector<28x28xf32>
    %19 = vector.extract_strided_slice %2 {offsets = [1, 0, 0], sizes = [1, 28, 224], strides = [1, 1, 1]} : vector<3x28x224xf32> to vector<1x28x224xf32>
    %20 = vector.shape_cast %19 : vector<1x28x224xf32> to vector<28x224xf32>
    %cst_19 = arith.constant dense<0.000000e+00> : vector<28x224xf32>
    %21 = tpu.matmul %18, %20, %cst_19 {dimension_numbers = #tpu.dot_dimension_numbers<[1], [0], [0], [1], [0, 0, 1, 1], [], []>} : vector<28x28xf32>, vector<28x224xf32>, vector<28x224xf32> -> vector<28x224xf32>
    %22 = arith.addf %15, %21 : vector<28x224xf32>
    %23 = vector.extract_strided_slice %1 {offsets = [2, 0, 0], sizes = [1, 28, 56], strides = [1, 1, 1]} : vector<3x28x56xf32> to vector<1x28x56xf32>
    %24 = vector.shape_cast %23 : vector<1x28x56xf32> to vector<28x56xf32>
    %cst_20 = arith.constant dense<0.000000e+00> : vector<28x28xf32>
    %25 = tpu.matmul %24, %0, %cst_20 {dimension_numbers = #tpu.dot_dimension_numbers<[1], [0], [0], [1], [0, 0, 1, 1], [], []>} : vector<28x56xf32>, vector<56x28xf32>, vector<28x28xf32> -> vector<28x28xf32>
    %26 = vector.extract_strided_slice %2 {offsets = [2, 0, 0], sizes = [1, 28, 224], strides = [1, 1, 1]} : vector<3x28x224xf32> to vector<1x28x224xf32>
    %27 = vector.shape_cast %26 : vector<1x28x224xf32> to vector<28x224xf32>
    %cst_21 = arith.constant dense<0.000000e+00> : vector<28x224xf32>
    %28 = tpu.matmul %25, %27, %cst_21 {dimension_numbers = #tpu.dot_dimension_numbers<[1], [0], [0], [1], [0, 0, 1, 1], [], []>} : vector<28x28xf32>, vector<28x224xf32>, vector<28x224xf32> -> vector<28x224xf32>
    %29 = arith.addf %22, %28 : vector<28x224xf32>
    %cst_22 = arith.constant 0.000000e+00 : f32
    %30 = vector.broadcast %cst_22 : f32 to vector<28x224xf32>
    %31 = arith.cmpf oge, %29, %30 : vector<28x224xf32>
    %cst_23 = arith.constant 0.00999999977 : f32
    %32 = vector.broadcast %cst_23 : f32 to vector<28x224xf32>
    %33 = arith.mulf %32, %29 : vector<28x224xf32>
    %34 = arith.select %31, %29, %33 : vector<28x224xi1>, vector<28x224xf32>
    %cst_24 = arith.constant dense<0.000000e+00> : vector<224xf32>
    %35 = vector.multi_reduction <add>, %34, %cst_24 [0] : vector<28x224xf32> to vector<224xf32>
    %36 = vector.shape_cast %35 : vector<224xf32> to vector<1x224xf32>
    %cst_25 = arith.constant dense<0.000000e+00> : vector<1x16xf32>
    %37 = tpu.matmul %36, %4, %cst_25 {dimension_numbers = #tpu.dot_dimension_numbers<[1], [0], [0], [1], [0, 0, 1, 1], [], []>} : vector<1x224xf32>, vector<224x16xf32>, vector<1x16xf32> -> vector<1x16xf32>
    %cst_26 = arith.constant 0.00255102036 : f32
    %38 = vector.broadcast %cst_26 : f32 to vector<1x16xf32>
    %39 = arith.mulf %37, %38 : vector<1x16xf32>
    %cst_27 = arith.constant dense<0.000000e+00> : vector<1x224xf32>
    %40 = tpu.matmul %39, %5, %cst_27 {dimension_numbers = #tpu.dot_dimension_numbers<[1], [0], [0], [1], [0, 0, 1, 1], [], []>} : vector<1x16xf32>, vector<16x224xf32>, vector<1x224xf32> -> vector<1x224xf32>
    %41 = vector.broadcast %40 : vector<1x224xf32> to vector<28x224xf32>
    %42 = arith.subf %34, %41 : vector<28x224xf32>
    %43 = arith.mulf %42, %42 : vector<28x224xf32>
    %cst_28 = arith.constant dense<0.000000e+00> : vector<224xf32>
    %44 = vector.multi_reduction <add>, %43, %cst_28 [0] : vector<28x224xf32> to vector<224xf32>
    %45 = vector.shape_cast %44 : vector<224xf32> to vector<1x224xf32>
    %cst_29 = arith.constant dense<0.000000e+00> : vector<1x16xf32>
    %46 = tpu.matmul %45, %4, %cst_29 {dimension_numbers = #tpu.dot_dimension_numbers<[1], [0], [0], [1], [0, 0, 1, 1], [], []>} : vector<1x224xf32>, vector<224x16xf32>, vector<1x16xf32> -> vector<1x16xf32>
    %cst_30 = arith.constant 0.00255102036 : f32
    %47 = vector.broadcast %cst_30 : f32 to vector<1x16xf32>
    %48 = arith.mulf %46, %47 : vector<1x16xf32>
    %cst_31 = arith.constant 9.99999974E-6 : f32
    %49 = vector.broadcast %cst_31 : f32 to vector<1x16xf32>
    %50 = arith.addf %48, %49 : vector<1x16xf32>
    %51 = math.rsqrt %50 : vector<1x16xf32>
    %52 = arith.mulf %6, %51 : vector<1x16xf32>
    %cst_32 = arith.constant dense<0.000000e+00> : vector<1x224xf32>
    %53 = tpu.matmul %52, %5, %cst_32 {dimension_numbers = #tpu.dot_dimension_numbers<[1], [0], [0], [1], [0, 0, 1, 1], [], []>} : vector<1x16xf32>, vector<16x224xf32>, vector<1x224xf32> -> vector<1x224xf32>
    %54 = vector.broadcast %53 : vector<1x224xf32> to vector<28x224xf32>
    %55 = arith.mulf %42, %54 : vector<28x224xf32>
    %56 = vector.broadcast %7 : vector<1x224xf32> to vector<28x224xf32>
    %57 = arith.addf %55, %56 : vector<28x224xf32>
    %c0_33 = arith.constant 0 : index
    %c0_34 = arith.constant 0 : index
    %c0_35 = arith.constant 0 : index
    %58 = vector.load %arg9[%c0_33, %c0_34, %c0_35] : memref<3x14x28xf32, #tpu.memory_space<vmem>>, vector<3x14x28xf32>
    %c0_36 = arith.constant 0 : index
    %c0_37 = arith.constant 0 : index
    %c0_38 = arith.constant 0 : index
    %59 = vector.load %arg10[%c0_36, %c0_37, %c0_38] : memref<3x224x224xf32, #tpu.memory_space<vmem>>, vector<3x224x224xf32>
    %c0_39 = arith.constant 0 : index
    %c0_40 = arith.constant 0 : index
    %60 = vector.load %arg11[%c0_39, %c0_40] : memref<1x224xf32, #tpu.memory_space<vmem>>, vector<1x224xf32>
    %c0_41 = arith.constant 0 : index
    %c0_42 = arith.constant 0 : index
    %61 = vector.load %arg12[%c0_41, %c0_42] : memref<224x32xf32, #tpu.memory_space<vmem>>, vector<224x32xf32>
    %c0_43 = arith.constant 0 : index
    %c0_44 = arith.constant 0 : index
    %62 = vector.load %arg13[%c0_43, %c0_44] : memref<32x224xf32, #tpu.memory_space<vmem>>, vector<32x224xf32>
    %c0_45 = arith.constant 0 : index
    %c0_46 = arith.constant 0 : index
    %63 = vector.load %arg14[%c0_45, %c0_46] : memref<1x32xf32, #tpu.memory_space<vmem>>, vector<1x32xf32>
    %c0_47 = arith.constant 0 : index
    %c0_48 = arith.constant 0 : index
    %64 = vector.load %arg15[%c0_47, %c0_48] : memref<1x224xf32, #tpu.memory_space<vmem>>, vector<1x224xf32>
    %65 = vector.extract_strided_slice %58 {offsets = [0, 0, 0], sizes = [1, 14, 28], strides = [1, 1, 1]} : vector<3x14x28xf32> to vector<1x14x28xf32>
    %66 = vector.shape_cast %65 : vector<1x14x28xf32> to vector<14x28xf32>
    %cst_49 = arith.constant dense<0.000000e+00> : vector<14x224xf32>
    %67 = tpu.matmul %66, %57, %cst_49 {dimension_numbers = #tpu.dot_dimension_numbers<[1], [0], [0], [1], [0, 0, 1, 1], [], []>} : vector<14x28xf32>, vector<28x224xf32>, vector<14x224xf32> -> vector<14x224xf32>
    %68 = vector.extract_strided_slice %59 {offsets = [0, 0, 0], sizes = [1, 224, 224], strides = [1, 1, 1]} : vector<3x224x224xf32> to vector<1x224x224xf32>
    %69 = vector.shape_cast %68 : vector<1x224x224xf32> to vector<224x224xf32>
    %cst_50 = arith.constant dense<0.000000e+00> : vector<14x224xf32>
    %70 = tpu.matmul %67, %69, %cst_50 {dimension_numbers = #tpu.dot_dimension_numbers<[1], [0], [0], [1], [0, 0, 1, 1], [], []>} : vector<14x224xf32>, vector<224x224xf32>, vector<14x224xf32> -> vector<14x224xf32>
    %71 = vector.broadcast %60 : vector<1x224xf32> to vector<14x224xf32>
    %72 = arith.addf %71, %70 : vector<14x224xf32>
    %73 = vector.extract_strided_slice %58 {offsets = [1, 0, 0], sizes = [1, 14, 28], strides = [1, 1, 1]} : vector<3x14x28xf32> to vector<1x14x28xf32>
    %74 = vector.shape_cast %73 : vector<1x14x28xf32> to vector<14x28xf32>
    %cst_51 = arith.constant dense<0.000000e+00> : vector<14x224xf32>
    %75 = tpu.matmul %74, %57, %cst_51 {dimension_numbers = #tpu.dot_dimension_numbers<[1], [0], [0], [1], [0, 0, 1, 1], [], []>} : vector<14x28xf32>, vector<28x224xf32>, vector<14x224xf32> -> vector<14x224xf32>
    %76 = vector.extract_strided_slice %59 {offsets = [1, 0, 0], sizes = [1, 224, 224], strides = [1, 1, 1]} : vector<3x224x224xf32> to vector<1x224x224xf32>
    %77 = vector.shape_cast %76 : vector<1x224x224xf32> to vector<224x224xf32>
    %cst_52 = arith.constant dense<0.000000e+00> : vector<14x224xf32>
    %78 = tpu.matmul %75, %77, %cst_52 {dimension_numbers = #tpu.dot_dimension_numbers<[1], [0], [0], [1], [0, 0, 1, 1], [], []>} : vector<14x224xf32>, vector<224x224xf32>, vector<14x224xf32> -> vector<14x224xf32>
    %79 = arith.addf %72, %78 : vector<14x224xf32>
    %80 = vector.extract_strided_slice %58 {offsets = [2, 0, 0], sizes = [1, 14, 28], strides = [1, 1, 1]} : vector<3x14x28xf32> to vector<1x14x28xf32>
    %81 = vector.shape_cast %80 : vector<1x14x28xf32> to vector<14x28xf32>
    %cst_53 = arith.constant dense<0.000000e+00> : vector<14x224xf32>
    %82 = tpu.matmul %81, %57, %cst_53 {dimension_numbers = #tpu.dot_dimension_numbers<[1], [0], [0], [1], [0, 0, 1, 1], [], []>} : vector<14x28xf32>, vector<28x224xf32>, vector<14x224xf32> -> vector<14x224xf32>
    %83 = vector.extract_strided_slice %59 {offsets = [2, 0, 0], sizes = [1, 224, 224], strides = [1, 1, 1]} : vector<3x224x224xf32> to vector<1x224x224xf32>
    %84 = vector.shape_cast %83 : vector<1x224x224xf32> to vector<224x224xf32>
    %cst_54 = arith.constant dense<0.000000e+00> : vector<14x224xf32>
    %85 = tpu.matmul %82, %84, %cst_54 {dimension_numbers = #tpu.dot_dimension_numbers<[1], [0], [0], [1], [0, 0, 1, 1], [], []>} : vector<14x224xf32>, vector<224x224xf32>, vector<14x224xf32> -> vector<14x224xf32>
    %86 = arith.addf %79, %85 : vector<14x224xf32>
    %cst_55 = arith.constant 0.000000e+00 : f32
    %87 = vector.broadcast %cst_55 : f32 to vector<14x224xf32>
    %88 = arith.cmpf oge, %86, %87 : vector<14x224xf32>
    %cst_56 = arith.constant 0.00999999977 : f32
    %89 = vector.broadcast %cst_56 : f32 to vector<14x224xf32>
    %90 = arith.mulf %89, %86 : vector<14x224xf32>
    %91 = arith.select %88, %86, %90 : vector<14x224xi1>, vector<14x224xf32>
    %cst_57 = arith.constant dense<0.000000e+00> : vector<224xf32>
    %92 = vector.multi_reduction <add>, %91, %cst_57 [0] : vector<14x224xf32> to vector<224xf32>
    %93 = vector.shape_cast %92 : vector<224xf32> to vector<1x224xf32>
    %cst_58 = arith.constant dense<0.000000e+00> : vector<1x32xf32>
    %94 = tpu.matmul %93, %61, %cst_58 {dimension_numbers = #tpu.dot_dimension_numbers<[1], [0], [0], [1], [0, 0, 1, 1], [], []>} : vector<1x224xf32>, vector<224x32xf32>, vector<1x32xf32> -> vector<1x32xf32>
    %cst_59 = arith.constant 0.0102040814 : f32
    %95 = vector.broadcast %cst_59 : f32 to vector<1x32xf32>
    %96 = arith.mulf %94, %95 : vector<1x32xf32>
    %cst_60 = arith.constant dense<0.000000e+00> : vector<1x224xf32>
    %97 = tpu.matmul %96, %62, %cst_60 {dimension_numbers = #tpu.dot_dimension_numbers<[1], [0], [0], [1], [0, 0, 1, 1], [], []>} : vector<1x32xf32>, vector<32x224xf32>, vector<1x224xf32> -> vector<1x224xf32>
    %98 = vector.broadcast %97 : vector<1x224xf32> to vector<14x224xf32>
    %99 = arith.subf %91, %98 : vector<14x224xf32>
    %100 = arith.mulf %99, %99 : vector<14x224xf32>
    %cst_61 = arith.constant dense<0.000000e+00> : vector<224xf32>
    %101 = vector.multi_reduction <add>, %100, %cst_61 [0] : vector<14x224xf32> to vector<224xf32>
    %102 = vector.shape_cast %101 : vector<224xf32> to vector<1x224xf32>
    %cst_62 = arith.constant dense<0.000000e+00> : vector<1x32xf32>
    %103 = tpu.matmul %102, %61, %cst_62 {dimension_numbers = #tpu.dot_dimension_numbers<[1], [0], [0], [1], [0, 0, 1, 1], [], []>} : vector<1x224xf32>, vector<224x32xf32>, vector<1x32xf32> -> vector<1x32xf32>
    %cst_63 = arith.constant 0.0102040814 : f32
    %104 = vector.broadcast %cst_63 : f32 to vector<1x32xf32>
    %105 = arith.mulf %103, %104 : vector<1x32xf32>
    %cst_64 = arith.constant 9.99999974E-6 : f32
    %106 = vector.broadcast %cst_64 : f32 to vector<1x32xf32>
    %107 = arith.addf %105, %106 : vector<1x32xf32>
    %108 = math.rsqrt %107 : vector<1x32xf32>
    %109 = arith.mulf %63, %108 : vector<1x32xf32>
    %cst_65 = arith.constant dense<0.000000e+00> : vector<1x224xf32>
    %110 = tpu.matmul %109, %62, %cst_65 {dimension_numbers = #tpu.dot_dimension_numbers<[1], [0], [0], [1], [0, 0, 1, 1], [], []>} : vector<1x32xf32>, vector<32x224xf32>, vector<1x224xf32> -> vector<1x224xf32>
    %111 = vector.broadcast %110 : vector<1x224xf32> to vector<14x224xf32>
    %112 = arith.mulf %99, %111 : vector<14x224xf32>
    %113 = vector.broadcast %64 : vector<1x224xf32> to vector<14x224xf32>
    %114 = arith.addf %112, %113 : vector<14x224xf32>
    %c0_66 = arith.constant 0 : index
    %c0_67 = arith.constant 0 : index
    %c0_68 = arith.constant 0 : index
    %115 = vector.load %arg16[%c0_66, %c0_67, %c0_68] : memref<3x8x14xf32, #tpu.memory_space<vmem>>, vector<3x8x14xf32>
    %c0_69 = arith.constant 0 : index
    %c0_70 = arith.constant 0 : index
    %c0_71 = arith.constant 0 : index
    %116 = vector.load %arg17[%c0_69, %c0_70, %c0_71] : memref<3x224x256xf32, #tpu.memory_space<vmem>>, vector<3x224x256xf32>
    %c0_72 = arith.constant 0 : index
    %c0_73 = arith.constant 0 : index
    %117 = vector.load %arg18[%c0_72, %c0_73] : memref<1x256xf32, #tpu.memory_space<vmem>>, vector<1x256xf32>
    %c0_74 = arith.constant 0 : index
    %c0_75 = arith.constant 0 : index
    %118 = vector.load %arg19[%c0_74, %c0_75] : memref<256x64xf32, #tpu.memory_space<vmem>>, vector<256x64xf32>
    %c0_76 = arith.constant 0 : index
    %c0_77 = arith.constant 0 : index
    %119 = vector.load %arg20[%c0_76, %c0_77] : memref<64x256xf32, #tpu.memory_space<vmem>>, vector<64x256xf32>
    %c0_78 = arith.constant 0 : index
    %c0_79 = arith.constant 0 : index
    %120 = vector.load %arg21[%c0_78, %c0_79] : memref<1x64xf32, #tpu.memory_space<vmem>>, vector<1x64xf32>
    %c0_80 = arith.constant 0 : index
    %c0_81 = arith.constant 0 : index
    %121 = vector.load %arg22[%c0_80, %c0_81] : memref<1x256xf32, #tpu.memory_space<vmem>>, vector<1x256xf32>
    %122 = vector.extract_strided_slice %115 {offsets = [0, 0, 0], sizes = [1, 8, 14], strides = [1, 1, 1]} : vector<3x8x14xf32> to vector<1x8x14xf32>
    %123 = vector.shape_cast %122 : vector<1x8x14xf32> to vector<8x14xf32>
    %cst_82 = arith.constant dense<0.000000e+00> : vector<8x224xf32>
    %124 = tpu.matmul %123, %114, %cst_82 {dimension_numbers = #tpu.dot_dimension_numbers<[1], [0], [0], [1], [0, 0, 1, 1], [], []>} : vector<8x14xf32>, vector<14x224xf32>, vector<8x224xf32> -> vector<8x224xf32>
    %125 = vector.extract_strided_slice %116 {offsets = [0, 0, 0], sizes = [1, 224, 256], strides = [1, 1, 1]} : vector<3x224x256xf32> to vector<1x224x256xf32>
    %126 = vector.shape_cast %125 : vector<1x224x256xf32> to vector<224x256xf32>
    %cst_83 = arith.constant dense<0.000000e+00> : vector<8x256xf32>
    %127 = tpu.matmul %124, %126, %cst_83 {dimension_numbers = #tpu.dot_dimension_numbers<[1], [0], [0], [1], [0, 0, 1, 1], [], []>} : vector<8x224xf32>, vector<224x256xf32>, vector<8x256xf32> -> vector<8x256xf32>
    %128 = vector.broadcast %117 : vector<1x256xf32> to vector<8x256xf32>
    %129 = arith.addf %128, %127 : vector<8x256xf32>
    %130 = vector.extract_strided_slice %115 {offsets = [1, 0, 0], sizes = [1, 8, 14], strides = [1, 1, 1]} : vector<3x8x14xf32> to vector<1x8x14xf32>
    %131 = vector.shape_cast %130 : vector<1x8x14xf32> to vector<8x14xf32>
    %cst_84 = arith.constant dense<0.000000e+00> : vector<8x224xf32>
    %132 = tpu.matmul %131, %114, %cst_84 {dimension_numbers = #tpu.dot_dimension_numbers<[1], [0], [0], [1], [0, 0, 1, 1], [], []>} : vector<8x14xf32>, vector<14x224xf32>, vector<8x224xf32> -> vector<8x224xf32>
    %133 = vector.extract_strided_slice %116 {offsets = [1, 0, 0], sizes = [1, 224, 256], strides = [1, 1, 1]} : vector<3x224x256xf32> to vector<1x224x256xf32>
    %134 = vector.shape_cast %133 : vector<1x224x256xf32> to vector<224x256xf32>
    %cst_85 = arith.constant dense<0.000000e+00> : vector<8x256xf32>
    %135 = tpu.matmul %132, %134, %cst_85 {dimension_numbers = #tpu.dot_dimension_numbers<[1], [0], [0], [1], [0, 0, 1, 1], [], []>} : vector<8x224xf32>, vector<224x256xf32>, vector<8x256xf32> -> vector<8x256xf32>
    %136 = arith.addf %129, %135 : vector<8x256xf32>
    %137 = vector.extract_strided_slice %115 {offsets = [2, 0, 0], sizes = [1, 8, 14], strides = [1, 1, 1]} : vector<3x8x14xf32> to vector<1x8x14xf32>
    %138 = vector.shape_cast %137 : vector<1x8x14xf32> to vector<8x14xf32>
    %cst_86 = arith.constant dense<0.000000e+00> : vector<8x224xf32>
    %139 = tpu.matmul %138, %114, %cst_86 {dimension_numbers = #tpu.dot_dimension_numbers<[1], [0], [0], [1], [0, 0, 1, 1], [], []>} : vector<8x14xf32>, vector<14x224xf32>, vector<8x224xf32> -> vector<8x224xf32>
    %140 = vector.extract_strided_slice %116 {offsets = [2, 0, 0], sizes = [1, 224, 256], strides = [1, 1, 1]} : vector<3x224x256xf32> to vector<1x224x256xf32>
    %141 = vector.shape_cast %140 : vector<1x224x256xf32> to vector<224x256xf32>
    %cst_87 = arith.constant dense<0.000000e+00> : vector<8x256xf32>
    %142 = tpu.matmul %139, %141, %cst_87 {dimension_numbers = #tpu.dot_dimension_numbers<[1], [0], [0], [1], [0, 0, 1, 1], [], []>} : vector<8x224xf32>, vector<224x256xf32>, vector<8x256xf32> -> vector<8x256xf32>
    %143 = arith.addf %136, %142 : vector<8x256xf32>
    %cst_88 = arith.constant 0.000000e+00 : f32
    %144 = vector.broadcast %cst_88 : f32 to vector<8x256xf32>
    %145 = arith.cmpf oge, %143, %144 : vector<8x256xf32>
    %cst_89 = arith.constant 0.00999999977 : f32
    %146 = vector.broadcast %cst_89 : f32 to vector<8x256xf32>
    %147 = arith.mulf %146, %143 : vector<8x256xf32>
    %148 = arith.select %145, %143, %147 : vector<8x256xi1>, vector<8x256xf32>
    %cst_90 = arith.constant dense<0.000000e+00> : vector<256xf32>
    %149 = vector.multi_reduction <add>, %148, %cst_90 [0] : vector<8x256xf32> to vector<256xf32>
    %150 = vector.shape_cast %149 : vector<256xf32> to vector<1x256xf32>
    %cst_91 = arith.constant dense<0.000000e+00> : vector<1x64xf32>
    %151 = tpu.matmul %150, %118, %cst_91 {dimension_numbers = #tpu.dot_dimension_numbers<[1], [0], [0], [1], [0, 0, 1, 1], [], []>} : vector<1x256xf32>, vector<256x64xf32>, vector<1x64xf32> -> vector<1x64xf32>
    %cst_92 = arith.constant 3.125000e-02 : f32
    %152 = vector.broadcast %cst_92 : f32 to vector<1x64xf32>
    %153 = arith.mulf %151, %152 : vector<1x64xf32>
    %cst_93 = arith.constant dense<0.000000e+00> : vector<1x256xf32>
    %154 = tpu.matmul %153, %119, %cst_93 {dimension_numbers = #tpu.dot_dimension_numbers<[1], [0], [0], [1], [0, 0, 1, 1], [], []>} : vector<1x64xf32>, vector<64x256xf32>, vector<1x256xf32> -> vector<1x256xf32>
    %155 = vector.broadcast %154 : vector<1x256xf32> to vector<8x256xf32>
    %156 = arith.subf %148, %155 : vector<8x256xf32>
    %157 = arith.mulf %156, %156 : vector<8x256xf32>
    %cst_94 = arith.constant dense<0.000000e+00> : vector<256xf32>
    %158 = vector.multi_reduction <add>, %157, %cst_94 [0] : vector<8x256xf32> to vector<256xf32>
    %159 = vector.shape_cast %158 : vector<256xf32> to vector<1x256xf32>
    %cst_95 = arith.constant dense<0.000000e+00> : vector<1x64xf32>
    %160 = tpu.matmul %159, %118, %cst_95 {dimension_numbers = #tpu.dot_dimension_numbers<[1], [0], [0], [1], [0, 0, 1, 1], [], []>} : vector<1x256xf32>, vector<256x64xf32>, vector<1x64xf32> -> vector<1x64xf32>
    %cst_96 = arith.constant 3.125000e-02 : f32
    %161 = vector.broadcast %cst_96 : f32 to vector<1x64xf32>
    %162 = arith.mulf %160, %161 : vector<1x64xf32>
    %cst_97 = arith.constant 9.99999974E-6 : f32
    %163 = vector.broadcast %cst_97 : f32 to vector<1x64xf32>
    %164 = arith.addf %162, %163 : vector<1x64xf32>
    %165 = math.rsqrt %164 : vector<1x64xf32>
    %166 = arith.mulf %120, %165 : vector<1x64xf32>
    %cst_98 = arith.constant dense<0.000000e+00> : vector<1x256xf32>
    %167 = tpu.matmul %166, %119, %cst_98 {dimension_numbers = #tpu.dot_dimension_numbers<[1], [0], [0], [1], [0, 0, 1, 1], [], []>} : vector<1x64xf32>, vector<64x256xf32>, vector<1x256xf32> -> vector<1x256xf32>
    %168 = vector.broadcast %167 : vector<1x256xf32> to vector<8x256xf32>
    %169 = arith.mulf %156, %168 : vector<8x256xf32>
    %170 = vector.broadcast %121 : vector<1x256xf32> to vector<8x256xf32>
    %171 = arith.addf %169, %170 : vector<8x256xf32>
    %c0_99 = arith.constant 0 : index
    %c0_100 = arith.constant 0 : index
    %c0_101 = arith.constant 0 : index
    %172 = vector.load %arg23[%c0_99, %c0_100, %c0_101] : memref<4x2x8xf32, #tpu.memory_space<vmem>>, vector<4x2x8xf32>
    %c0_102 = arith.constant 0 : index
    %c0_103 = arith.constant 0 : index
    %c0_104 = arith.constant 0 : index
    %173 = vector.load %arg24[%c0_102, %c0_103, %c0_104] : memref<4x256x16xf32, #tpu.memory_space<vmem>>, vector<4x256x16xf32>
    %c0_105 = arith.constant 0 : index
    %c0_106 = arith.constant 0 : index
    %174 = vector.load %arg25[%c0_105, %c0_106] : memref<1x16xf32, #tpu.memory_space<vmem>>, vector<1x16xf32>
    %c0_107 = arith.constant 0 : index
    %c0_108 = arith.constant 0 : index
    %175 = vector.load %arg26[%c0_107, %c0_108] : memref<2x8xf32, #tpu.memory_space<vmem>>, vector<2x8xf32>
    %176 = vector.extract_strided_slice %172 {offsets = [0, 0, 0], sizes = [1, 2, 8], strides = [1, 1, 1]} : vector<4x2x8xf32> to vector<1x2x8xf32>
    %177 = vector.shape_cast %176 : vector<1x2x8xf32> to vector<2x8xf32>
    %cst_109 = arith.constant dense<0.000000e+00> : vector<2x256xf32>
    %178 = tpu.matmul %177, %171, %cst_109 {dimension_numbers = #tpu.dot_dimension_numbers<[1], [0], [0], [1], [0, 0, 1, 1], [], []>} : vector<2x8xf32>, vector<8x256xf32>, vector<2x256xf32> -> vector<2x256xf32>
    %179 = vector.extract_strided_slice %173 {offsets = [0, 0, 0], sizes = [1, 256, 16], strides = [1, 1, 1]} : vector<4x256x16xf32> to vector<1x256x16xf32>
    %180 = vector.shape_cast %179 : vector<1x256x16xf32> to vector<256x16xf32>
    %cst_110 = arith.constant dense<0.000000e+00> : vector<2x16xf32>
    %181 = tpu.matmul %178, %180, %cst_110 {dimension_numbers = #tpu.dot_dimension_numbers<[1], [0], [0], [1], [0, 0, 1, 1], [], []>} : vector<2x256xf32>, vector<256x16xf32>, vector<2x16xf32> -> vector<2x16xf32>
    %182 = vector.broadcast %174 : vector<1x16xf32> to vector<2x16xf32>
    %183 = arith.addf %182, %181 : vector<2x16xf32>
    %184 = vector.extract_strided_slice %172 {offsets = [1, 0, 0], sizes = [1, 2, 8], strides = [1, 1, 1]} : vector<4x2x8xf32> to vector<1x2x8xf32>
    %185 = vector.shape_cast %184 : vector<1x2x8xf32> to vector<2x8xf32>
    %cst_111 = arith.constant dense<0.000000e+00> : vector<2x256xf32>
    %186 = tpu.matmul %185, %171, %cst_111 {dimension_numbers = #tpu.dot_dimension_numbers<[1], [0], [0], [1], [0, 0, 1, 1], [], []>} : vector<2x8xf32>, vector<8x256xf32>, vector<2x256xf32> -> vector<2x256xf32>
    %187 = vector.extract_strided_slice %173 {offsets = [1, 0, 0], sizes = [1, 256, 16], strides = [1, 1, 1]} : vector<4x256x16xf32> to vector<1x256x16xf32>
    %188 = vector.shape_cast %187 : vector<1x256x16xf32> to vector<256x16xf32>
    %cst_112 = arith.constant dense<0.000000e+00> : vector<2x16xf32>
    %189 = tpu.matmul %186, %188, %cst_112 {dimension_numbers = #tpu.dot_dimension_numbers<[1], [0], [0], [1], [0, 0, 1, 1], [], []>} : vector<2x256xf32>, vector<256x16xf32>, vector<2x16xf32> -> vector<2x16xf32>
    %190 = arith.addf %183, %189 : vector<2x16xf32>
    %191 = vector.extract_strided_slice %172 {offsets = [2, 0, 0], sizes = [1, 2, 8], strides = [1, 1, 1]} : vector<4x2x8xf32> to vector<1x2x8xf32>
    %192 = vector.shape_cast %191 : vector<1x2x8xf32> to vector<2x8xf32>
    %cst_113 = arith.constant dense<0.000000e+00> : vector<2x256xf32>
    %193 = tpu.matmul %192, %171, %cst_113 {dimension_numbers = #tpu.dot_dimension_numbers<[1], [0], [0], [1], [0, 0, 1, 1], [], []>} : vector<2x8xf32>, vector<8x256xf32>, vector<2x256xf32> -> vector<2x256xf32>
    %194 = vector.extract_strided_slice %173 {offsets = [2, 0, 0], sizes = [1, 256, 16], strides = [1, 1, 1]} : vector<4x256x16xf32> to vector<1x256x16xf32>
    %195 = vector.shape_cast %194 : vector<1x256x16xf32> to vector<256x16xf32>
    %cst_114 = arith.constant dense<0.000000e+00> : vector<2x16xf32>
    %196 = tpu.matmul %193, %195, %cst_114 {dimension_numbers = #tpu.dot_dimension_numbers<[1], [0], [0], [1], [0, 0, 1, 1], [], []>} : vector<2x256xf32>, vector<256x16xf32>, vector<2x16xf32> -> vector<2x16xf32>
    %197 = arith.addf %190, %196 : vector<2x16xf32>
    %198 = vector.extract_strided_slice %172 {offsets = [3, 0, 0], sizes = [1, 2, 8], strides = [1, 1, 1]} : vector<4x2x8xf32> to vector<1x2x8xf32>
    %199 = vector.shape_cast %198 : vector<1x2x8xf32> to vector<2x8xf32>
    %cst_115 = arith.constant dense<0.000000e+00> : vector<2x256xf32>
    %200 = tpu.matmul %199, %171, %cst_115 {dimension_numbers = #tpu.dot_dimension_numbers<[1], [0], [0], [1], [0, 0, 1, 1], [], []>} : vector<2x8xf32>, vector<8x256xf32>, vector<2x256xf32> -> vector<2x256xf32>
    %201 = vector.extract_strided_slice %173 {offsets = [3, 0, 0], sizes = [1, 256, 16], strides = [1, 1, 1]} : vector<4x256x16xf32> to vector<1x256x16xf32>
    %202 = vector.shape_cast %201 : vector<1x256x16xf32> to vector<256x16xf32>
    %cst_116 = arith.constant dense<0.000000e+00> : vector<2x16xf32>
    %203 = tpu.matmul %200, %202, %cst_116 {dimension_numbers = #tpu.dot_dimension_numbers<[1], [0], [0], [1], [0, 0, 1, 1], [], []>} : vector<2x256xf32>, vector<256x16xf32>, vector<2x16xf32> -> vector<2x16xf32>
    %204 = arith.addf %197, %203 : vector<2x16xf32>
    %205 = vector.extract_strided_slice %204 {offsets = [0, 0], sizes = [2, 8], strides = [1, 1]} : vector<2x16xf32> to vector<2x8xf32>
    %206 = vector.extract_strided_slice %204 {offsets = [0, 8], sizes = [2, 8], strides = [1, 1]} : vector<2x16xf32> to vector<2x8xf32>
    %cst_117 = arith.constant 5.000000e-01 : f32
    %207 = vector.broadcast %cst_117 : f32 to vector<2x8xf32>
    %208 = arith.mulf %206, %207 : vector<2x8xf32>
    %209 = math.exp %208 : vector<2x8xf32>
    %210 = arith.mulf %175, %209 : vector<2x8xf32>
    %211 = arith.addf %205, %210 : vector<2x8xf32>
    %c0_118 = arith.constant 0 : index
    %c0_119 = arith.constant 0 : index
    %212 = vector.load %arg27[%c0_118, %c0_119] : memref<2x8xf32, #tpu.memory_space<vmem>>, vector<2x8xf32>
    tpu.vector_store %arg27[%c0_118, %c0_119], %211 {strides = array<i32>} : memref<2x8xf32, #tpu.memory_space<vmem>>, vector<2x8xf32>,
    %c0_120 = arith.constant 0 : index
    %c0_121 = arith.constant 0 : index
    %213 = vector.load %arg28[%c0_120, %c0_121] : memref<2x8xf32, #tpu.memory_space<vmem>>, vector<2x8xf32>
    tpu.vector_store %arg28[%c0_120, %c0_121], %205 {strides = array<i32>} : memref<2x8xf32, #tpu.memory_space<vmem>>, vector<2x8xf32>,
    %c0_122 = arith.constant 0 : index
    %c0_123 = arith.constant 0 : index
    %214 = vector.load %arg29[%c0_122, %c0_123] : memref<2x8xf32, #tpu.memory_space<vmem>>, vector<2x8xf32>
    tpu.vector_store %arg29[%c0_122, %c0_123], %206 {strides = array<i32>} : memref<2x8xf32, #tpu.memory_space<vmem>>, vector<2x8xf32>,
    return
  }
  func.func @transform_0(%arg0: i32) -> (i32, i32) {
    %c0_i32 = arith.constant 0 : i32
    %c0_i32_0 = arith.constant 0 : i32
    %c0_i32_1 = arith.constant 0 : i32
    return %c0_i32, %c0_i32_0 : i32, i32
  }
  func.func @transform_1(%arg0: i32) -> (i32, i32, i32) {
    %c0_i32 = arith.constant 0 : i32
    %c0_i32_0 = arith.constant 0 : i32
    %c0_i32_1 = arith.constant 0 : i32
    %c0_i32_2 = arith.constant 0 : i32
    return %c0_i32, %c0_i32_0, %c0_i32_1 : i32, i32, i32
  }
  func.func @transform_2(%arg0: i32) -> (i32, i32, i32) {
    %c0_i32 = arith.constant 0 : i32
    %c0_i32_0 = arith.constant 0 : i32
    %c0_i32_1 = arith.constant 0 : i32
    %c0_i32_2 = arith.constant 0 : i32
    return %c0_i32, %c0_i32_0, %c0_i32_1 : i32, i32, i32
  }
  func.func @transform_3(%arg0: i32) -> (i32, i32) {
    %c0_i32 = arith.constant 0 : i32
    %c0_i32_0 = arith.constant 0 : i32
    %c0_i32_1 = arith.constant 0 : i32
    return %c0_i32, %c0_i32_0 : i32, i32
  }
  func.func @transform_4(%arg0: i32) -> (i32, i32) {
    %c0_i32 = arith.constant 0 : i32
    %c0_i32_0 = arith.constant 0 : i32
    %c0_i32_1 = arith.constant 0 : i32
    return %c0_i32, %c0_i32_0 : i32, i32
  }
  func.func @transform_5(%arg0: i32) -> (i32, i32) {
    %c0_i32 = arith.constant 0 : i32
    %c0_i32_0 = arith.constant 0 : i32
    %c0_i32_1 = arith.constant 0 : i32
    return %c0_i32, %c0_i32_0 : i32, i32
  }
  func.func @transform_6(%arg0: i32) -> (i32, i32) {
    %c0_i32 = arith.constant 0 : i32
    %c0_i32_0 = arith.constant 0 : i32
    %c0_i32_1 = arith.constant 0 : i32
    return %c0_i32, %c0_i32_0 : i32, i32
  }
  func.func @transform_7(%arg0: i32) -> (i32, i32) {
    %c0_i32 = arith.constant 0 : i32
    %c0_i32_0 = arith.constant 0 : i32
    %c0_i32_1 = arith.constant 0 : i32
    return %c0_i32, %c0_i32_0 : i32, i32
  }
  func.func @transform_8(%arg0: i32) -> (i32, i32, i32) {
    %c0_i32 = arith.constant 0 : i32
    %c0_i32_0 = arith.constant 0 : i32
    %c0_i32_1 = arith.constant 0 : i32
    %c0_i32_2 = arith.constant 0 : i32
    return %c0_i32, %c0_i32_0, %c0_i32_1 : i32, i32, i32
  }
  func.func @transform_9(%arg0: i32) -> (i32, i32, i32) {
    %c0_i32 = arith.constant 0 : i32
    %c0_i32_0 = arith.constant 0 : i32
    %c0_i32_1 = arith.constant 0 : i32
    %c0_i32_2 = arith.constant 0 : i32
    return %c0_i32, %c0_i32_0, %c0_i32_1 : i32, i32, i32
  }
  func.func @transform_10(%arg0: i32) -> (i32, i32) {
    %c0_i32 = arith.constant 0 : i32
    %c0_i32_0 = arith.constant 0 : i32
    %c0_i32_1 = arith.constant 0 : i32
    return %c0_i32, %c0_i32_0 : i32, i32
  }
  func.func @transform_11(%arg0: i32) -> (i32, i32) {
    %c0_i32 = arith.constant 0 : i32
    %c0_i32_0 = arith.constant 0 : i32
    %c0_i32_1 = arith.constant 0 : i32
    return %c0_i32, %c0_i32_0 : i32, i32
  }
  func.func @transform_12(%arg0: i32) -> (i32, i32) {
    %c0_i32 = arith.constant 0 : i32
    %c0_i32_0 = arith.constant 0 : i32
    %c0_i32_1 = arith.constant 0 : i32
    return %c0_i32, %c0_i32_0 : i32, i32
  }
  func.func @transform_13(%arg0: i32) -> (i32, i32) {
    %c0_i32 = arith.constant 0 : i32
    %c0_i32_0 = arith.constant 0 : i32
    %c0_i32_1 = arith.constant 0 : i32
    return %c0_i32, %c0_i32_0 : i32, i32
  }
  func.func @transform_14(%arg0: i32) -> (i32, i32) {
    %c0_i32 = arith.constant 0 : i32
    %c0_i32_0 = arith.constant 0 : i32
    %c0_i32_1 = arith.constant 0 : i32
    return %c0_i32, %c0_i32_0 : i32, i32
  }
  func.func @transform_15(%arg0: i32) -> (i32, i32, i32) {
    %c0_i32 = arith.constant 0 : i32
    %c0_i32_0 = arith.constant 0 : i32
    %c0_i32_1 = arith.constant 0 : i32
    %c0_i32_2 = arith.constant 0 : i32
    return %c0_i32, %c0_i32_0, %c0_i32_1 : i32, i32, i32
  }
  func.func @transform_16(%arg0: i32) -> (i32, i32, i32) {
    %c0_i32 = arith.constant 0 : i32
    %c0_i32_0 = arith.constant 0 : i32
    %c0_i32_1 = arith.constant 0 : i32
    %c0_i32_2 = arith.constant 0 : i32
    return %c0_i32, %c0_i32_0, %c0_i32_1 : i32, i32, i32
  }
  func.func @transform_17(%arg0: i32) -> (i32, i32) {
    %c0_i32 = arith.constant 0 : i32
    %c0_i32_0 = arith.constant 0 : i32
    %c0_i32_1 = arith.constant 0 : i32
    return %c0_i32, %c0_i32_0 : i32, i32
  }
  func.func @transform_18(%arg0: i32) -> (i32, i32) {
    %c0_i32 = arith.constant 0 : i32
    %c0_i32_0 = arith.constant 0 : i32
    %c0_i32_1 = arith.constant 0 : i32
    return %c0_i32, %c0_i32_0 : i32, i32
  }
  func.func @transform_19(%arg0: i32) -> (i32, i32) {
    %c0_i32 = arith.constant 0 : i32
    %c0_i32_0 = arith.constant 0 : i32
    %c0_i32_1 = arith.constant 0 : i32
    return %c0_i32, %c0_i32_0 : i32, i32
  }
  func.func @transform_20(%arg0: i32) -> (i32, i32) {
    %c0_i32 = arith.constant 0 : i32
    %c0_i32_0 = arith.constant 0 : i32
    %c0_i32_1 = arith.constant 0 : i32
    return %c0_i32, %c0_i32_0 : i32, i32
  }
  func.func @transform_21(%arg0: i32) -> (i32, i32) {
    %c0_i32 = arith.constant 0 : i32
    %c0_i32_0 = arith.constant 0 : i32
    %c0_i32_1 = arith.constant 0 : i32
    return %c0_i32, %c0_i32_0 : i32, i32
  }
  func.func @transform_22(%arg0: i32) -> (i32, i32, i32) {
    %c0_i32 = arith.constant 0 : i32
    %c0_i32_0 = arith.constant 0 : i32
    %c0_i32_1 = arith.constant 0 : i32
    %c0_i32_2 = arith.constant 0 : i32
    return %c0_i32, %c0_i32_0, %c0_i32_1 : i32, i32, i32
  }
  func.func @transform_23(%arg0: i32) -> (i32, i32, i32) {
    %c0_i32 = arith.constant 0 : i32
    %c0_i32_0 = arith.constant 0 : i32
    %c0_i32_1 = arith.constant 0 : i32
    %c0_i32_2 = arith.constant 0 : i32
    return %c0_i32, %c0_i32_0, %c0_i32_1 : i32, i32, i32
  }
  func.func @transform_24(%arg0: i32) -> (i32, i32) {
    %c0_i32 = arith.constant 0 : i32
    %c0_i32_0 = arith.constant 0 : i32
    %c0_i32_1 = arith.constant 0 : i32
    return %c0_i32, %c0_i32_0 : i32, i32
  }
  func.func @transform_25(%arg0: i32) -> (i32, i32) {
    %c0_i32 = arith.constant 0 : i32
    %c0_i32_0 = arith.constant 0 : i32
    %c0_i32_1 = arith.constant 0 : i32
    return %c0_i32, %c0_i32_0 : i32, i32
  }
  func.func @transform_26(%arg0: i32) -> (i32, i32) {
    %c0_i32 = arith.constant 0 : i32
    %c0_i32_0 = arith.constant 0 : i32
    %c0_i32_1 = arith.constant 0 : i32
    return %c0_i32, %c0_i32_0 : i32, i32
  }
  func.func @transform_27(%arg0: i32) -> (i32, i32) {
    %c0_i32 = arith.constant 0 : i32
    %c0_i32_0 = arith.constant 0 : i32
    %c0_i32_1 = arith.constant 0 : i32
    return %c0_i32, %c0_i32_0 : i32, i32
  }
  func.func @transform_28(%arg0: i32) -> (i32, i32) {
    %c0_i32 = arith.constant 0 : i32
    %c0_i32_0 = arith.constant 0 : i32
    %c0_i32_1 = arith.constant 0 : i32
    return %c0_i32, %c0_i32_0 : i32, i32
  }
}

</mosaic_0001>

<llo_original>
// kernel: tile.34
$region0: #{tile.34}
  %s0 = inlined_call_operand.vmem [shape: f32[14,16], index: 0, kind: input, shape index: {}]
  %s1 = inlined_call_operand.vmem [shape: f32[1,224], index: 1, kind: output, shape index: {}]
  $region1: #{tile.34} parent=0
    #allocation0 [shape = 'u8[8192]{0}', space=vmem, size = 0x2000, scoped, tag = 'scoped mem for output reshape']
    %s2 = smov 3
    %v3 = vld [vmem:[%s0] ss:$8 sm:%s2]
    %vm4 = vcmask 130048
    %5 = vst.msk [vmem:[#allocation0] ss:$8 sm:$0x3] %vm4, %v3
    %s6 = scalar_lea.vmem %s0, 7
    %v7 = vld [vmem:[%s6] sm:$0x1]
    %8 = vrot.lane.b32.xlu0 %v7, 112
    %v9 = vpop.permute.xlu0 %8
    %vm10 = vcmask 1048448
    %11 = vst.msk [vmem:[#allocation0] sm:$0x1] %vm10, %v9
    %s12 = scalar_lea.vmem %s0, 6
    %v13 = vld [vmem:[%s12] sm:$0x1]
    %14 = vrot.lane.b32.xlu0 %v13, 96
    %v15 = vpop.permute.xlu0 %14
    %vm16 = vcmask 917248
    %17 = vst.msk [vmem:[#allocation0] sm:$0x1] %vm16, %v15
    %s18 = scalar_lea.vmem %s0, 5
    %s19 = smov 3
    %v20 = vld [vmem:[%s18] ss:$8 sm:%s19]
    %21 = vrot.lane.b32.xlu0 %v20, 80
    %v22 = vpop.permute.xlu0 %21
    %vm23 = vcmask 786048
    %24 = vst.msk [vmem:[#allocation0] ss:$8 sm:$0x3] %vm23, %v22
    %s25 = scalar_lea.vmem %s0, 4
    %s26 = smov 3
    %v27 = vld [vmem:[%s25] ss:$8 sm:%s26]
    %28 = vrot.lane.b32.xlu0 %v27, 64
    %v29 = vpop.permute.xlu0 %28
    %vm30 = vcmask 654848
    %31 = vst.msk [vmem:[#allocation0] ss:$8 sm:$0x3] %vm30, %v29
    %s32 = scalar_lea.vmem %s0, 3
    %s33 = smov 3
    %v34 = vld [vmem:[%s32] ss:$8 sm:%s33]
    %35 = vrot.lane.b32.xlu0 %v34, 48
    %v36 = vpop.permute.xlu0 %35
    %vm37 = vcmask 523648
    %38 = vst.msk [vmem:[#allocation0] ss:$8 sm:$0x3] %vm37, %v36
    %s39 = scalar_lea.vmem %s0, 2
    %s40 = smov 3
    %v41 = vld [vmem:[%s39] ss:$8 sm:%s40]
    %42 = vrot.lane.b32.xlu0 %v41, 32
    %v43 = vpop.permute.xlu0 %42
    %vm44 = vcmask 392448
    %45 = vst.msk [vmem:[#allocation0] ss:$8 sm:$0x3] %vm44, %v43
    %s46 = scalar_lea.vmem %s0, 1
    %s47 = smov 3
    %v48 = vld [vmem:[%s46] ss:$8 sm:%s47]
    %49 = vrot.lane.b32.xlu0 %v48, 16
    %v50 = vpop.permute.xlu0 %49
    %vm51 = vcmask 261248
    %52 = vst.msk [vmem:[#allocation0] ss:$8 sm:$0x3] %vm51, %v50
    %s54 = sshllo.u32 0, 1
    %v56 = vld [vmem:[#allocation0] sm:%s54]
    %s57 = sshllo.u32 0, 1
    %58 = vst [vmem:[%s1] sm:%s57] %v56
    %s59 = scalar_lea.vmem [#allocation0], 8
    %v60 = vld [vmem:[%s59] sm:%s54]
    %s61 = sshllo.u32 0, 1
    %s62 = scalar_lea.vmem %s1, 1
    %63 = vst [vmem:[%s62] sm:%s61] %v60

// kernel: tile.43
$region0: #{tile.43}
  #allocation0 [shape = 's32[1]{0}', space=sflag, size = 0x4, scoped, tag = 'scoped memory for tile.43']
  %s0 = inlined_call_operand.vmem [shape: f32[32], index: 0, kind: input, shape index: {}]
  %s1 = inlined_call_operand.vmem [shape: f32[7,32], index: 1, kind: output, shape index: {}]
  // Predicated region
  $region2: #{tile.43} parent=0 // pred_check
    _
  $region3: #{tile.43} parent=0 // pred_check_branch
    %3 = sbr.rel (0) target = $region5
  $region4: #{tile.43} parent=0 // pred_region
    _
  $region5: #{tile.43} parent=0 // pred_fallthru
    _
  %v4 = vld [vmem:[%s0] ss:$0 sm:$0xff]
  %5 = vst [vmem:[%s1] sm:$0xff] %v4

// kernel: tile.44
$region0: #{tile.44}
  %s0 = inlined_call_operand.vmem [shape: f32[7,32], index: 0, kind: input, shape index: {}]
  %s1 = inlined_call_operand.vmem [shape: f32[1,224], index: 1, kind: output, shape index: {}]
  $region1: #{tile.44} parent=0
    #allocation0 [shape = 'u8[8192]{0}', space=vmem, size = 0x2000, scoped, tag = 'scoped mem for output reshape']
    %s2 = smov 3
    %v3 = vld [vmem:[%s0] ss:$4 sm:%s2]
    %vm4 = vcmask 261120
    %5 = vst.msk [vmem:[#allocation0] ss:$8 sm:$0x3] %vm4, %v3
    %s6 = scalar_lea.vmem %s0, 3
    %v7 = vld [vmem:[%s6] sm:$0x1]
    %8 = vrot.lane.b32.xlu0 %v7, 96
    %v9 = vpop.permute.xlu0 %8
    %vm10 = vcmask 1048320
    %11 = vst.msk [vmem:[#allocation0] sm:$0x1] %vm10, %v9
    %s12 = scalar_lea.vmem %s0, 2
    %s13 = smov 3
    %v14 = vld [vmem:[%s12] ss:$4 sm:%s13]
    %15 = vrot.lane.b32.xlu0 %v14, 64
    %v16 = vpop.permute.xlu0 %15
    %vm17 = vcmask 785920
    %18 = vst.msk [vmem:[#allocation0] ss:$8 sm:$0x3] %vm17, %v16
    %s19 = scalar_lea.vmem %s0, 1
    %s20 = smov 3
    %v21 = vld [vmem:[%s19] ss:$4 sm:%s20]
    %22 = vrot.lane.b32.xlu0 %v21, 32
    %v23 = vpop.permute.xlu0 %22
    %vm24 = vcmask 523520
    %25 = vst.msk [vmem:[#allocation0] ss:$8 sm:$0x3] %vm24, %v23
    %s27 = sshllo.u32 0, 1
    %v29 = vld [vmem:[#allocation0] sm:%s27]
    %s30 = sshllo.u32 0, 1
    %31 = vst [vmem:[%s1] sm:%s30] %v29
    %s32 = scalar_lea.vmem [#allocation0], 8
    %v33 = vld [vmem:[%s32] sm:%s27]
    %s34 = sshllo.u32 0, 1
    %s35 = scalar_lea.vmem %s1, 1
    %36 = vst [vmem:[%s35] sm:%s34] %v33

// kernel: tile.53
$region0: #{tile.53}
  #allocation0 [shape = 's32[1]{0}', space=sflag, size = 0x4, scoped, tag = 'scoped memory for tile.53']
  %s0 = inlined_call_operand.vmem [shape: f32[64], index: 0, kind: input, shape index: {}]
  %s1 = inlined_call_operand.vmem [shape: f32[4,64], index: 1, kind: output, shape index: {}]
  // Predicated region
  $region2: #{tile.53} parent=0 // pred_check
    _
  $region3: #{tile.53} parent=0 // pred_check_branch
    %3 = sbr.rel (0) target = $region5
  $region4: #{tile.53} parent=0 // pred_region
    _
  $region5: #{tile.53} parent=0 // pred_fallthru
    _
  %v4 = vld [vmem:[%s0] ss:$0 sm:$0xff]
  %5 = vst [vmem:[%s1] sm:$0xf] %v4

// kernel: tile.54
$region0: #{tile.54}
  %s0 = inlined_call_operand.vmem [shape: f32[4,64], index: 0, kind: input, shape index: {}]
  %s1 = inlined_call_operand.vmem [shape: f32[1,256], index: 1, kind: output, shape index: {}]
  $region1: #{tile.54} parent=0
    #allocation0 [shape = 'u8[8192]{0}', space=vmem, size = 0x2000, scoped, tag = 'scoped mem for output reshape']
    #allocation1 [shape = 'u8[4096]{0}', space=vmem, size = 0x1000, scoped, tag = 'scoped mem for input reshape']
    %s3 = sshllo.u32 0, 4
    %v4 = vld [vmem:[%s0] sm:%s3]
    %5 = vst [vmem:[#allocation1] sm:%s3] %v4
    %s6 = smov 3
    %v7 = vld [vmem:[#allocation1] ss:$2 sm:%s6]
    %vm8 = vcmask 523264
    %9 = vst.msk [vmem:[#allocation0] ss:$8 sm:$0x3] %vm8, %v7
    %s10 = scalar_lea.vmem [#allocation1], 1
    %s11 = smov 3
    %v12 = vld [vmem:[%s10] ss:$2 sm:%s11]
    %13 = vrot.lane.b32.xlu0 %v12, 64
    %v14 = vpop.permute.xlu0 %13
    %vm15 = vcmask 1048064
    %16 = vst.msk [vmem:[#allocation0] ss:$8 sm:$0x3] %vm15, %v14
    %s18 = sshllo.u32 0, 1
    %v20 = vld [vmem:[#allocation0] sm:%s18]
    %s21 = sshllo.u32 0, 1
    %22 = vst [vmem:[%s1] sm:%s21] %v20
    %s23 = scalar_lea.vmem [#allocation0], 8
    %v24 = vld [vmem:[%s23] sm:%s18]
    %s25 = sshllo.u32 0, 1
    %s26 = scalar_lea.vmem %s1, 1
    %27 = vst [vmem:[%s26] sm:%s25] %v24

// kernel: encoder_forward.1
$region0: #{encoder_forward.1}
  #allocation0 [shape = 'u32[]', space=smem, size = 0x4, offset = 0x4, fixed_abs, tag = 'smem constant byte address 0x4 - core index']
  #allocation1 [shape = 'u32[144,128]{1,0:T(1,128)}', space=vmem, size = 0x12000, scoped, tag = 'internal scratch']
  %s0 = inlined_call_operand.vmem [shape: f32[56,28], index: 0, kind: input, shape index: {}]
  %s1 = inlined_call_operand.vmem [shape: f32[3,28,56], index: 1, kind: input, shape index: {}]
  %s2 = inlined_call_operand.vmem [shape: f32[3,28,224], index: 2, kind: input, shape index: {}]
  %s3 = inlined_call_operand.vmem [shape: f32[1,224], index: 3, kind: input, shape index: {}]
  %s4 = inlined_call_operand.vmem [shape: f32[224,16], index: 4, kind: input, shape index: {}]
  %s5 = inlined_call_operand.vmem [shape: f32[16,224], index: 5, kind: input, shape index: {}]
  %s6 = inlined_call_operand.vmem [shape: f32[1,16], index: 6, kind: input, shape index: {}]
  %s7 = inlined_call_operand.vmem [shape: f32[1,224], index: 7, kind: input, shape index: {}]
  %s8 = inlined_call_operand.vmem [shape: f32[3,14,28], index: 8, kind: input, shape index: {}]
  %s9 = inlined_call_operand.vmem [shape: f32[3,224,224], index: 9, kind: input, shape index: {}]
  %s10 = inlined_call_operand.vmem [shape: f32[1,224], index: 10, kind: input, shape index: {}]
  %s11 = inlined_call_operand.vmem [shape: f32[224,32], index: 11, kind: input, shape index: {}]
  %s12 = inlined_call_operand.vmem [shape: f32[32,224], index: 12, kind: input, shape index: {}]
  %s13 = inlined_call_operand.vmem [shape: f32[1,32], index: 13, kind: input, shape index: {}]
  %s14 = inlined_call_operand.vmem [shape: f32[1,224], index: 14, kind: input, shape index: {}]
  %s15 = inlined_call_operand.vmem [shape: f32[3,8,14], index: 15, kind: input, shape index: {}]
  %s16 = inlined_call_operand.vmem [shape: f32[3,224,256], index: 16, kind: input, shape index: {}]
  %s17 = inlined_call_operand.vmem [shape: f32[1,256], index: 17, kind: input, shape index: {}]
  %s18 = inlined_call_operand.vmem [shape: f32[256,64], index: 18, kind: input, shape index: {}]
  %s19 = inlined_call_operand.vmem [shape: f32[64,256], index: 19, kind: input, shape index: {}]
  %s20 = inlined_call_operand.vmem [shape: f32[1,64], index: 20, kind: input, shape index: {}]
  %s21 = inlined_call_operand.vmem [shape: f32[1,256], index: 21, kind: input, shape index: {}]
  %s22 = inlined_call_operand.vmem [shape: f32[4,2,8], index: 22, kind: input, shape index: {}]
  %s23 = inlined_call_operand.vmem [shape: f32[4,256,16], index: 23, kind: input, shape index: {}]
  %s24 = inlined_call_operand.vmem [shape: f32[1,16], index: 24, kind: input, shape index: {}]
  %s25 = inlined_call_operand.vmem [shape: f32[2,8], index: 25, kind: input, shape index: {}]
  %s26 = inlined_call_operand.hbm [shape: f32[2,8], index: 26, kind: output, shape index: {0}]
  %s27 = inlined_call_operand.hbm [shape: f32[2,8], index: 27, kind: output, shape index: {1}]
  %s28 = inlined_call_operand.hbm [shape: f32[2,8], index: 28, kind: output, shape index: {2}]
  %29 = xla_tuple %s26, %s27, %s28
  %s30 = sld [smem:[#allocation0]]
  $region130: #{encoder_forward.1} parent=0
    _
  %s32 = ssub.s32 1, %s30
  %s33 = scalar_select 0, %s32, %s30
  $region1: #{encoder_forward.1} parent=0
    #allocation2 [shape = 'u8[1024]{0}', space=vmem, size = 0x400, scoped, tag = 'output window, operand 0, single buffered']
    #allocation3 [shape = 's32[1]{0}', space=sflag, size = 0x4, scoped, tag = 'scoped memory for encoder_forward.1']
    #allocation4 [shape = 'u8[1024]{0}', space=vmem, size = 0x400, scoped, tag = 'output window, operand 1, single buffered']
    #allocation5 [shape = 's32[1]{0}', space=sflag, size = 0x4, scoped, tag = 'scoped memory for encoder_forward.1']
    #allocation6 [shape = 'u8[1024]{0}', space=vmem, size = 0x400, scoped, tag = 'output window, operand 2, single buffered']
    %34 = vsyncpa [#allocation3], 0
    %35 = vsyncpa [#allocation5], 0
    // Predicated region
    $region2: #{encoder_forward.1} parent=1 // pred_check
      _
    $region3: #{encoder_forward.1} parent=1 // pred_check_branch
      %37 = sbr.rel (0) target = $region5
    $region4: #{encoder_forward.1} parent=1 // pred_region
      _
    $region5: #{encoder_forward.1} parent=1 // pred_fallthru
      _
    // Predicated region
    $region6: #{encoder_forward.1} parent=1 // pred_check
      _
    $region7: #{encoder_forward.1} parent=1 // pred_check_branch
      %39 = sbr.rel (0) target = $region9
    $region8: #{encoder_forward.1} parent=1 // pred_region
      _
    $region9: #{encoder_forward.1} parent=1 // pred_fallthru
      _
    // Predicated region
    $region10: #{encoder_forward.1} parent=1 // pred_check
      _
    $region11: #{encoder_forward.1} parent=1 // pred_check_branch
      %41 = sbr.rel (0) target = $region13
    $region12: #{encoder_forward.1} parent=1 // pred_region
      _
    $region13: #{encoder_forward.1} parent=1 // pred_fallthru
      _
    // Predicated region
    $region14: #{encoder_forward.1} parent=1 // pred_check
      _
    $region15: #{encoder_forward.1} parent=1 // pred_check_branch
      %43 = sbr.rel (0) target = $region17
    $region16: #{encoder_forward.1} parent=1 // pred_region
      _
    $region17: #{encoder_forward.1} parent=1 // pred_fallthru
      _
    // Predicated region
    $region18: #{encoder_forward.1} parent=1 // pred_check
      _
    $region19: #{encoder_forward.1} parent=1 // pred_check_branch
      %45 = sbr.rel (0) target = $region21
    $region20: #{encoder_forward.1} parent=1 // pred_region
      _
    $region21: #{encoder_forward.1} parent=1 // pred_fallthru
      _
    // Predicated region
    $region22: #{encoder_forward.1} parent=1 // pred_check
      _
    $region23: #{encoder_forward.1} parent=1 // pred_check_branch
      %47 = sbr.rel (0) target = $region25
    $region24: #{encoder_forward.1} parent=1 // pred_region
      _
    $region25: #{encoder_forward.1} parent=1 // pred_fallthru
      _
    // Predicated region
    $region26: #{encoder_forward.1} parent=1 // pred_check
      _
    $region27: #{encoder_forward.1} parent=1 // pred_check_branch
      %49 = sbr.rel (0) target = $region29
    $region28: #{encoder_forward.1} parent=1 // pred_region
      _
    $region29: #{encoder_forward.1} parent=1 // pred_fallthru
      _
    // Predicated region
    $region30: #{encoder_forward.1} parent=1 // pred_check
      _
    $region31: #{encoder_forward.1} parent=1 // pred_check_branch
      %51 = sbr.rel (0) target = $region33
    $region32: #{encoder_forward.1} parent=1 // pred_region
      _
    $region33: #{encoder_forward.1} parent=1 // pred_fallthru
      _
    // Predicated region
    $region34: #{encoder_forward.1} parent=1 // pred_check
      _
    $region35: #{encoder_forward.1} parent=1 // pred_check_branch
      %53 = sbr.rel (0) target = $region37
    $region36: #{encoder_forward.1} parent=1 // pred_region
      _
    $region37: #{encoder_forward.1} parent=1 // pred_fallthru
      _
    // Predicated region
    $region38: #{encoder_forward.1} parent=1 // pred_check
      _
    $region39: #{encoder_forward.1} parent=1 // pred_check_branch
      %55 = sbr.rel (0) target = $region41
    $region40: #{encoder_forward.1} parent=1 // pred_region
      _
    $region41: #{encoder_forward.1} parent=1 // pred_fallthru
      _
    // Predicated region
    $region42: #{encoder_forward.1} parent=1 // pred_check
      _
    $region43: #{encoder_forward.1} parent=1 // pred_check_branch
      %57 = sbr.rel (0) target = $region45
    $region44: #{encoder_forward.1} parent=1 // pred_region
      _
    $region45: #{encoder_forward.1} parent=1 // pred_fallthru
      _
    // Predicated region
    $region46: #{encoder_forward.1} parent=1 // pred_check
      _
    $region47: #{encoder_forward.1} parent=1 // pred_check_branch
      %59 = sbr.rel (0) target = $region49
    $region48: #{encoder_forward.1} parent=1 // pred_region
      _
    $region49: #{encoder_forward.1} parent=1 // pred_fallthru
      _
    // Predicated region
    $region50: #{encoder_forward.1} parent=1 // pred_check
      _
    $region51: #{encoder_forward.1} parent=1 // pred_check_branch
      %61 = sbr.rel (0) target = $region53
    $region52: #{encoder_forward.1} parent=1 // pred_region
      _
    $region53: #{encoder_forward.1} parent=1 // pred_fallthru
      _
    // Predicated region
    $region54: #{encoder_forward.1} parent=1 // pred_check
      _
    $region55: #{encoder_forward.1} parent=1 // pred_check_branch
      %63 = sbr.rel (0) target = $region57
    $region56: #{encoder_forward.1} parent=1 // pred_region
      _
    $region57: #{encoder_forward.1} parent=1 // pred_fallthru
      _
    // Predicated region
    $region58: #{encoder_forward.1} parent=1 // pred_check
      _
    $region59: #{encoder_forward.1} parent=1 // pred_check_branch
      %65 = sbr.rel (0) target = $region61
    $region60: #{encoder_forward.1} parent=1 // pred_region
      _
    $region61: #{encoder_forward.1} parent=1 // pred_fallthru
      _
    // Predicated region
    $region62: #{encoder_forward.1} parent=1 // pred_check
      _
    $region63: #{encoder_forward.1} parent=1 // pred_check_branch
      %67 = sbr.rel (0) target = $region65
    $region64: #{encoder_forward.1} parent=1 // pred_region
      _
    $region65: #{encoder_forward.1} parent=1 // pred_fallthru
      _
    // Predicated region
    $region66: #{encoder_forward.1} parent=1 // pred_check
      _
    $region67: #{encoder_forward.1} parent=1 // pred_check_branch
      %69 = sbr.rel (0) target = $region69
    $region68: #{encoder_forward.1} parent=1 // pred_region
      _
    $region69: #{encoder_forward.1} parent=1 // pred_fallthru
      _
    // Predicated region
    $region70: #{encoder_forward.1} parent=1 // pred_check
      _
    $region71: #{encoder_forward.1} parent=1 // pred_check_branch
      %71 = sbr.rel (0) target = $region73
    $region72: #{encoder_forward.1} parent=1 // pred_region
      _
    $region73: #{encoder_forward.1} parent=1 // pred_fallthru
      _
    // Predicated region
    $region74: #{encoder_forward.1} parent=1 // pred_check
      _
    $region75: #{encoder_forward.1} parent=1 // pred_check_branch
      %73 = sbr.rel (0) target = $region77
    $region76: #{encoder_forward.1} parent=1 // pred_region
      _
    $region77: #{encoder_forward.1} parent=1 // pred_fallthru
      _
    // Predicated region
    $region78: #{encoder_forward.1} parent=1 // pred_check
      _
    $region79: #{encoder_forward.1} parent=1 // pred_check_branch
      %75 = sbr.rel (0) target = $region81
    $region80: #{encoder_forward.1} parent=1 // pred_region
      _
    $region81: #{encoder_forward.1} parent=1 // pred_fallthru
      _
    // Predicated region
    $region82: #{encoder_forward.1} parent=1 // pred_check
      _
    $region83: #{encoder_forward.1} parent=1 // pred_check_branch
      %77 = sbr.rel (0) target = $region85
    $region84: #{encoder_forward.1} parent=1 // pred_region
      _
    $region85: #{encoder_forward.1} parent=1 // pred_fallthru
      _
    // Predicated region
    $region86: #{encoder_forward.1} parent=1 // pred_check
      _
    $region87: #{encoder_forward.1} parent=1 // pred_check_branch
      %79 = sbr.rel (0) target = $region89
    $region88: #{encoder_forward.1} parent=1 // pred_region
      _
    $region89: #{encoder_forward.1} parent=1 // pred_fallthru
      _
    // Predicated region
    $region90: #{encoder_forward.1} parent=1 // pred_check
      _
    $region91: #{encoder_forward.1} parent=1 // pred_check_branch
      %81 = sbr.rel (0) target = $region93
    $region92: #{encoder_forward.1} parent=1 // pred_region
      _
    $region93: #{encoder_forward.1} parent=1 // pred_fallthru
      _
    // Predicated region
    $region94: #{encoder_forward.1} parent=1 // pred_check
      _
    $region95: #{encoder_forward.1} parent=1 // pred_check_branch
      %83 = sbr.rel (0) target = $region97
    $region96: #{encoder_forward.1} parent=1 // pred_region
      _
    $region97: #{encoder_forward.1} parent=1 // pred_fallthru
      _
    // Predicated region
    $region98: #{encoder_forward.1} parent=1 // pred_check
      _
    $region99: #{encoder_forward.1} parent=1 // pred_check_branch
      %85 = sbr.rel (0) target = $region101
    $region100: #{encoder_forward.1} parent=1 // pred_region
      _
    $region101: #{encoder_forward.1} parent=1 // pred_fallthru
      _
    // Predicated region
    $region102: #{encoder_forward.1} parent=1 // pred_check
      _
    $region103: #{encoder_forward.1} parent=1 // pred_check_branch
      %87 = sbr.rel (0) target = $region105
    $region104: #{encoder_forward.1} parent=1 // pred_region
      _
    $region105: #{encoder_forward.1} parent=1 // pred_fallthru
      _
    %v88 = vld [vmem:[%s0] sm:$0xff]
    %v89 = vld [vmem:[%s0 + $0x8] sm:$0xff]
    %v90 = vld [vmem:[%s0 + $0x10] sm:$0xff]
    %v91 = vld [vmem:[%s0 + $0x18] sm:$0xff]
    %v92 = vld [vmem:[%s0 + $0x20] sm:$0xff]
    %v93 = vld [vmem:[%s0 + $0x28] sm:$0xff]
    %v94 = vld [vmem:[%s0 + $0x30] sm:$0xff]
    %v95 = vld [vmem:[%s1] sm:$0xff]
    %v96 = vld [vmem:[%s1 + $0x8] sm:$0xff]
    %v97 = vld [vmem:[%s1 + $0x10] sm:$0xff]
    %v98 = vld [vmem:[%s1 + $0x18] sm:$0xf]
    %v99 = vld [vmem:[%s1 + $0x20] sm:$0xff]
    %v100 = vld [vmem:[%s1 + $0x28] sm:$0xff]
    %v101 = vld [vmem:[%s1 + $0x30] sm:$0xff]
    %v102 = vld [vmem:[%s1 + $0x38] sm:$0xf]
    %v103 = vld [vmem:[%s1 + $0x40] sm:$0xff]
    %v104 = vld [vmem:[%s1 + $0x48] sm:$0xff]
    %v105 = vld [vmem:[%s1 + $0x50] sm:$0xff]
    %v106 = vld [vmem:[%s1 + $0x58] sm:$0xf]
    %v107 = vld [vmem:[%s2] sm:$0xff]
    %v108 = vld [vmem:[%s2 + $0x8] sm:$0xff]
    %v109 = vld [vmem:[%s2 + $0x10] sm:$0xff]
    %v110 = vld [vmem:[%s2 + $0x18] sm:$0xff]
    %v111 = vld [vmem:[%s2 + $0x20] sm:$0xff]
    %v112 = vld [vmem:[%s2 + $0x28] sm:$0xff]
    %v113 = vld [vmem:[%s2 + $0x30] sm:$0xf]
    %v114 = vld [vmem:[%s2 + $0x38] sm:$0xf]
    %v115 = vld [vmem:[%s2 + $0x40] sm:$0xff]
    %v116 = vld [vmem:[%s2 + $0x48] sm:$0xff]
    %v117 = vld [vmem:[%s2 + $0x50] sm:$0xff]
    %v118 = vld [vmem:[%s2 + $0x58] sm:$0xff]
    %v119 = vld [vmem:[%s2 + $0x60] sm:$0xff]
    %v120 = vld [vmem:[%s2 + $0x68] sm:$0xff]
    %v121 = vld [vmem:[%s2 + $0x70] sm:$0xf]
    %v122 = vld [vmem:[%s2 + $0x78] sm:$0xf]
    %v123 = vld [vmem:[%s2 + $0x80] sm:$0xff]
    %v124 = vld [vmem:[%s2 + $0x88] sm:$0xff]
    %v125 = vld [vmem:[%s2 + $0x90] sm:$0xff]
    %v126 = vld [vmem:[%s2 + $0x98] sm:$0xff]
    %v127 = vld [vmem:[%s2 + $0xa0] sm:$0xff]
    %v128 = vld [vmem:[%s2 + $0xa8] sm:$0xff]
    %v129 = vld [vmem:[%s2 + $0xb0] sm:$0xf]
    %v130 = vld [vmem:[%s2 + $0xb8] sm:$0xf]
    %v131 = vld [vmem:[%s3] sm:$0x3]
    %v132 = vld [vmem:[%s4] sm:$0xff]
    %v133 = vld [vmem:[%s4 + $0x8] sm:$0xff]
    %v134 = vld [vmem:[%s4 + $0x10] sm:$0xff]
    %v135 = vld [vmem:[%s4 + $0x18] sm:$0xff]
    %v136 = vld [vmem:[%s4 + $0x20] sm:$0xff]
    %v137 = vld [vmem:[%s4 + $0x28] sm:$0xff]
    %v138 = vld [vmem:[%s4 + $0x30] sm:$0xff]
    %v139 = vld [vmem:[%s4 + $0x38] sm:$0xff]
    %v140 = vld [vmem:[%s4 + $0x40] sm:$0xff]
    %v141 = vld [vmem:[%s4 + $0x48] sm:$0xff]
    %v142 = vld [vmem:[%s4 + $0x50] sm:$0xff]
    %v143 = vld [vmem:[%s4 + $0x58] sm:$0xff]
    %v144 = vld [vmem:[%s4 + $0x60] sm:$0xff]
    %v145 = vld [vmem:[%s4 + $0x68] sm:$0xff]
    %v146 = vld [vmem:[%s4 + $0x70] sm:$0xff]
    %v147 = vld [vmem:[%s4 + $0x78] sm:$0xff]
    %v148 = vld [vmem:[%s4 + $0x80] sm:$0xff]
    %v149 = vld [vmem:[%s4 + $0x88] sm:$0xff]
    %v150 = vld [vmem:[%s4 + $0x90] sm:$0xff]
    %v151 = vld [vmem:[%s4 + $0x98] sm:$0xff]
    %v152 = vld [vmem:[%s4 + $0xa0] sm:$0xff]
    %v153 = vld [vmem:[%s4 + $0xa8] sm:$0xff]
    %v154 = vld [vmem:[%s4 + $0xb0] sm:$0xff]
    %v155 = vld [vmem:[%s4 + $0xb8] sm:$0xff]
    %v156 = vld [vmem:[%s4 + $0xc0] sm:$0xff]
    %v157 = vld [vmem:[%s4 + $0xc8] sm:$0xff]
    %v158 = vld [vmem:[%s4 + $0xd0] sm:$0xff]
    %v159 = vld [vmem:[%s4 + $0xd8] sm:$0xff]
    %v160 = vld [vmem:[%s5] sm:$0xff]
    %v161 = vld [vmem:[%s5 + $0x8] sm:$0xff]
    %v162 = vld [vmem:[%s5 + $0x10] sm:$0xff]
    %v163 = vld [vmem:[%s5 + $0x18] sm:$0xff]
    %v164 = vld [vmem:[%s6] sm:$0x1]
    %v165 = vld [vmem:[%s7] sm:$0x3]
    %vm166 = vcmask 457728
    %v168 = vsel %vm166, %v95, 0
    %v171 = vsel %vm166, %v96, 0
    %v174 = vsel %vm166, %v97, 0
    %v177 = vsel %vm166, %v98, 0
    %179 = vmatprep.subr.mxu0 0.0
    %180 = vmatpush1.msra.mxu0 %v88
    %181 = vmatprep.subr.mxu0 0.0
    %182 = vmatpush1.msra.mxu0 %v89
    %183 = vmatprep.subr.mxu0 0.0
    %184 = vmatpush1.msra.mxu0 %v90
    %185 = vmatprep.subr.mxu0 0.0
    %186 = vmatpush1.msra.mxu0 %v91
    %187 = vmatprep.subr.mxu0 0.0
    %188 = vmatpush1.msra.mxu0 %v92
    %189 = vmatprep.subr.mxu0 0.0
    %190 = vmatpush1.msra.mxu0 %v93
    %191 = vmatprep.subr.mxu0 0.0
    %192 = vmatpush1.msra.mxu0 %v94
    %193 = vmatprep.subr.mxu0 0.0
    %194 = vmatpush1.msra.mxu0 0.0
    %195 = vmatprep.subr.mxu0 0.0
    %196 = vmatpush1.msra.mxu0 0.0
    %197 = vmatprep.subr.mxu0 0.0
    %198 = vmatpush1.msra.mxu0 0.0
    %199 = vmatprep.subr.mxu0 0.0
    %200 = vmatpush1.msra.mxu0 0.0
    %201 = vmatprep.subr.mxu0 0.0
    %202 = vmatpush1.msra.mxu0 0.0
    %203 = vmatprep.subr.mxu0 0.0
    %204 = vmatpush1.msra.mxu0 0.0
    %205 = vmatprep.subr.mxu0 0.0
    %206 = vmatpush1.msra.mxu0 0.0
    %207 = vmatprep.subr.mxu0 0.0
    %208 = vmatpush1.msra.mxu0 0.0
    %209 = vmatprep.subr.mxu0 0.0
    %210 = vmatpush1.msra.mxu0 0.0
    %211 = vmatprep.subr.mxu0 0.0
    %212 = vmatpush1.msra.mxu0 0.0
    %213 = vmatprep.subr.mxu0 0.0
    %214 = vmatpush1.msra.mxu0 0.0
    %215 = vmatprep.subr.mxu0 0.0
    %216 = vmatpush1.msra.mxu0 0.0
    %217 = vmatprep.subr.mxu0 0.0
    %218 = vmatpush1.msra.mxu0 0.0
    %219 = vmatprep.subr.mxu0 0.0
    %220 = vmatpush1.msra.mxu0 0.0
    %221 = vmatprep.subr.mxu0 0.0
    %222 = vmatpush1.msra.mxu0 0.0
    %223 = vmatprep.subr.mxu0 0.0
    %224 = vmatpush1.msra.mxu0 0.0
    %225 = vmatprep.subr.mxu0 0.0
    %226 = vmatpush1.msra.mxu0 0.0
    %227 = vmatprep.subr.mxu0 0.0
    %228 = vmatpush1.msra.mxu0 0.0
    %229 = vmatprep.subr.mxu0 0.0
    %230 = vmatpush1.msra.mxu0 0.0
    %231 = vmatprep.subr.mxu0 0.0
    %232 = vmatpush1.msra.mxu0 0.0
    %233 = vmatprep.subr.mxu0 0.0
    %234 = vmatpush1.msra.mxu0 0.0
    %235 = vmatprep.subr.mxu0 0.0
    %236 = vmatpush1.msra.mxu0 0.0
    %237 = vmatprep.subr.mxu0 0.0
    %238 = vmatpush1.msra.mxu0 0.0
    %239 = vmatprep.subr.mxu0 0.0
    %240 = vmatpush1.msra.mxu0 0.0
    %241 = vmatprep.subr.mxu0 0.0
    %242 = vmatpush1.msra.mxu0 0.0
    %243 = vmatprep.mubr.f32.mxu0 0.0
    %244 = vmatmul.mubr.f32.gmra.mrb[0].mxu0 %v168
    %v245 = vpop.f32.mrb[0].mxu0
    %v246 = vadd.f32 0.0, %v245
    %v247 = vpop.f32.mrb[0].mxu0
    %248 = vmatprep.mubr.f32.mxu0 0.0
    %249 = vmatmul.mubr.f32.gmra.mrb[0].mxu0 %v171
    %v250 = vpop.f32.mrb[0].mxu0
    %v251 = vadd.f32 0.0, %v250
    %v252 = vpop.f32.mrb[0].mxu0
    %253 = vmatprep.mubr.f32.mxu0 0.0
    %254 = vmatmul.mubr.f32.gmra.mrb[0].mxu0 %v174
    %v255 = vpop.f32.mrb[0].mxu0
    %v256 = vadd.f32 0.0, %v255
    %v257 = vpop.f32.mrb[0].mxu0
    %258 = vmatprep.mubr.f32.mxu0 0.0
    %259 = vmatmul.mubr.f32.gmra.mrb[0].mxu0 %v177
    %v260 = vpop.f32.mrb[0].mxu0
    %v261 = vadd.f32 0.0, %v260
    %v262 = vpop.f32.mrb[0].mxu0
    %263 = vdwg.mxu0
    %vm264 = vcmask 228352
    %v266 = vsel %vm264, %v246, 0
    %v269 = vsel %vm264, %v251, 0
    %v272 = vsel %vm264, %v256, 0
    %v275 = vsel %vm264, %v261, 0
    %vm277 = vcmask 1043456
    %v279 = vsel %vm277, %v113, 0
    %v282 = vsel %vm277, %v114, 0
    %284 = vmatprep.subr.mxu0 %v108
    %285 = vmatpush1.msra.mxu0 %v107
    %286 = vmatprep.subr.mxu0 %v110
    %287 = vmatpush1.msra.mxu0 %v109
    %288 = vmatprep.subr.mxu0 %v112
    %289 = vmatpush1.msra.mxu0 %v111
    %290 = vmatprep.subr.mxu0 %v282
    %291 = vmatpush1.msra.mxu0 %v279
    %292 = vmatprep.subr.mxu0 0.0
    %293 = vmatpush1.msra.mxu0 0.0
    %294 = vmatprep.subr.mxu0 0.0
    %295 = vmatpush1.msra.mxu0 0.0
    %296 = vmatprep.subr.mxu0 0.0
    %297 = vmatpush1.msra.mxu0 0.0
    %298 = vmatprep.subr.mxu0 0.0
    %299 = vmatpush1.msra.mxu0 0.0
    %300 = vmatprep.subr.mxu0 0.0
    %301 = vmatpush1.msra.mxu0 0.0
    %302 = vmatprep.subr.mxu0 0.0
    %303 = vmatpush1.msra.mxu0 0.0
    %304 = vmatprep.subr.mxu0 0.0
    %305 = vmatpush1.msra.mxu0 0.0
    %306 = vmatprep.subr.mxu0 0.0
    %307 = vmatpush1.msra.mxu0 0.0
    %308 = vmatprep.subr.mxu0 0.0
    %309 = vmatpush1.msra.mxu0 0.0
    %310 = vmatprep.subr.mxu0 0.0
    %311 = vmatpush1.msra.mxu0 0.0
    %312 = vmatprep.subr.mxu0 0.0
    %313 = vmatpush1.msra.mxu0 0.0
    %314 = vmatprep.subr.mxu0 0.0
    %315 = vmatpush1.msra.mxu0 0.0
    %316 = vmatprep.subr.mxu0 0.0
    %317 = vmatpush1.msra.mxu0 0.0
    %318 = vmatprep.subr.mxu0 0.0
    %319 = vmatpush1.msra.mxu0 0.0
    %320 = vmatprep.subr.mxu0 0.0
    %321 = vmatpush1.msra.mxu0 0.0
    %322 = vmatprep.subr.mxu0 0.0
    %323 = vmatpush1.msra.mxu0 0.0
    %324 = vmatprep.subr.mxu0 0.0
    %325 = vmatpush1.msra.mxu0 0.0
    %326 = vmatprep.subr.mxu0 0.0
    %327 = vmatpush1.msra.mxu0 0.0
    %328 = vmatprep.subr.mxu0 0.0
    %329 = vmatpush1.msra.mxu0 0.0
    %330 = vmatprep.subr.mxu0 0.0
    %331 = vmatpush1.msra.mxu0 0.0
    %332 = vmatprep.subr.mxu0 0.0
    %333 = vmatpush1.msra.mxu0 0.0
    %334 = vmatprep.subr.mxu0 0.0
    %335 = vmatpush1.msra.mxu0 0.0
    %336 = vmatprep.subr.mxu0 0.0
    %337 = vmatpush1.msra.mxu0 0.0
    %338 = vmatprep.subr.mxu0 0.0
    %339 = vmatpush1.msra.mxu0 0.0
    %340 = vmatprep.subr.mxu0 0.0
    %341 = vmatpush1.msra.mxu0 0.0
    %342 = vmatprep.subr.mxu0 0.0
    %343 = vmatpush1.msra.mxu0 0.0
    %344 = vmatprep.subr.mxu0 0.0
    %345 = vmatpush1.msra.mxu0 0.0
    %346 = vmatprep.subr.mxu0 0.0
    %347 = vmatpush1.msra.mxu0 0.0
    %348 = vmatprep.mubr.f32.mxu0 0.0
    %349 = vmatmul.mubr.f32.gmra.mrb[0].mxu0 %v266
    %v350 = vpop.f32.mrb[0].mxu0
    %v351 = vadd.f32 0.0, %v350
    %v352 = vpop.f32.mrb[0].mxu0
    %v353 = vadd.f32 0.0, %v352
    %354 = vmatprep.mubr.f32.mxu0 0.0
    %355 = vmatmul.mubr.f32.gmra.mrb[0].mxu0 %v269
    %v356 = vpop.f32.mrb[0].mxu0
    %v357 = vadd.f32 0.0, %v356
    %v358 = vpop.f32.mrb[0].mxu0
    %v359 = vadd.f32 0.0, %v358
    %360 = vmatprep.mubr.f32.mxu0 0.0
    %361 = vmatmul.mubr.f32.gmra.mrb[0].mxu0 %v272
    %v362 = vpop.f32.mrb[0].mxu0
    %v363 = vadd.f32 0.0, %v362
    %v364 = vpop.f32.mrb[0].mxu0
    %v365 = vadd.f32 0.0, %v364
    %366 = vmatprep.mubr.f32.mxu0 0.0
    %367 = vmatmul.mubr.f32.gmra.mrb[0].mxu0 %v275
    %v368 = vpop.f32.mrb[0].mxu0
    %v369 = vadd.f32 0.0, %v368
    %v370 = vpop.f32.mrb[0].mxu0
    %v371 = vadd.f32 0.0, %v370
    %372 = vdwg.mxu0
    %v374 = vlaneseq
    %v375 = vshrl.u32 %v374, 7
    %v376 = vsub.s32 0, %v375
    %v377 = vrot.slane %v131, %v376
    %v378 = vlaneseq
    %v379 = vshrl.u32 %v378, 7
    %v380 = vsub.s32 1, %v379
    %v381 = vrot.slane %v131, %v380
    %v384 = vadd.f32 %v377, %v351
    %v385 = vadd.f32 %v381, %v353
    %v386 = vadd.f32 %v377, %v357
    %v387 = vadd.f32 %v381, %v359
    %v388 = vadd.f32 %v377, %v363
    %v389 = vadd.f32 %v381, %v365
    %v390 = vadd.f32 %v377, %v369
    %v391 = vadd.f32 %v381, %v371
    %v393 = vsel %vm166, %v99, 0
    %v396 = vsel %vm166, %v100, 0
    %v399 = vsel %vm166, %v101, 0
    %v402 = vsel %vm166, %v102, 0
    %404 = vmatprep.subr.mxu0 0.0
    %405 = vmatpush1.msra.mxu0 %v88
    %406 = vmatprep.subr.mxu0 0.0
    %407 = vmatpush1.msra.mxu0 %v89
    %408 = vmatprep.subr.mxu0 0.0
    %409 = vmatpush1.msra.mxu0 %v90
    %410 = vmatprep.subr.mxu0 0.0
    %411 = vmatpush1.msra.mxu0 %v91
    %412 = vmatprep.subr.mxu0 0.0
    %413 = vmatpush1.msra.mxu0 %v92
    %414 = vmatprep.subr.mxu0 0.0
    %415 = vmatpush1.msra.mxu0 %v93
    %416 = vmatprep.subr.mxu0 0.0
    %417 = vmatpush1.msra.mxu0 %v94
    %418 = vmatprep.subr.mxu0 0.0
    %419 = vmatpush1.msra.mxu0 0.0
    %420 = vmatprep.subr.mxu0 0.0
    %421 = vmatpush1.msra.mxu0 0.0
    %422 = vmatprep.subr.mxu0 0.0
    %423 = vmatpush1.msra.mxu0 0.0
    %424 = vmatprep.subr.mxu0 0.0
    %425 = vmatpush1.msra.mxu0 0.0
    %426 = vmatprep.subr.mxu0 0.0
    %427 = vmatpush1.msra.mxu0 0.0
    %428 = vmatprep.subr.mxu0 0.0
    %429 = vmatpush1.msra.mxu0 0.0
    %430 = vmatprep.subr.mxu0 0.0
    %431 = vmatpush1.msra.mxu0 0.0
    %432 = vmatprep.subr.mxu0 0.0
    %433 = vmatpush1.msra.mxu0 0.0
    %434 = vmatprep.subr.mxu0 0.0
    %435 = vmatpush1.msra.mxu0 0.0
    %436 = vmatprep.subr.mxu0 0.0
    %437 = vmatpush1.msra.mxu0 0.0
    %438 = vmatprep.subr.mxu0 0.0
    %439 = vmatpush1.msra.mxu0 0.0
    %440 = vmatprep.subr.mxu0 0.0
    %441 = vmatpush1.msra.mxu0 0.0
    %442 = vmatprep.subr.mxu0 0.0
    %443 = vmatpush1.msra.mxu0 0.0
    %444 = vmatprep.subr.mxu0 0.0
    %445 = vmatpush1.msra.mxu0 0.0
    %446 = vmatprep.subr.mxu0 0.0
    %447 = vmatpush1.msra.mxu0 0.0
    %448 = vmatprep.subr.mxu0 0.0
    %449 = vmatpush1.msra.mxu0 0.0
    %450 = vmatprep.subr.mxu0 0.0
    %451 = vmatpush1.msra.mxu0 0.0
    %452 = vmatprep.subr.mxu0 0.0
    %453 = vmatpush1.msra.mxu0 0.0
    %454 = vmatprep.subr.mxu0 0.0
    %455 = vmatpush1.msra.mxu0 0.0
    %456 = vmatprep.subr.mxu0 0.0
    %457 = vmatpush1.msra.mxu0 0.0
    %458 = vmatprep.subr.mxu0 0.0
    %459 = vmatpush1.msra.mxu0 0.0
    %460 = vmatprep.subr.mxu0 0.0
    %461 = vmatpush1.msra.mxu0 0.0
    %462 = vmatprep.subr.mxu0 0.0
    %463 = vmatpush1.msra.mxu0 0.0
    %464 = vmatprep.subr.mxu0 0.0
    %465 = vmatpush1.msra.mxu0 0.0
    %466 = vmatprep.subr.mxu0 0.0
    %467 = vmatpush1.msra.mxu0 0.0
    %468 = vmatprep.mubr.f32.mxu0 0.0
    %469 = vmatmul.mubr.f32.gmra.mrb[0].mxu0 %v393
    %v470 = vpop.f32.mrb[0].mxu0
    %v471 = vadd.f32 0.0, %v470
    %v472 = vpop.f32.mrb[0].mxu0
    %473 = vmatprep.mubr.f32.mxu0 0.0
    %474 = vmatmul.mubr.f32.gmra.mrb[0].mxu0 %v396
    %v475 = vpop.f32.mrb[0].mxu0
    %v476 = vadd.f32 0.0, %v475
    %v477 = vpop.f32.mrb[0].mxu0
    %478 = vmatprep.mubr.f32.mxu0 0.0
    %479 = vmatmul.mubr.f32.gmra.mrb[0].mxu0 %v399
    %v480 = vpop.f32.mrb[0].mxu0
    %v481 = vadd.f32 0.0, %v480
    %v482 = vpop.f32.mrb[0].mxu0
    %483 = vmatprep.mubr.f32.mxu0 0.0
    %484 = vmatmul.mubr.f32.gmra.mrb[0].mxu0 %v402
    %v485 = vpop.f32.mrb[0].mxu0
    %v486 = vadd.f32 0.0, %v485
    %v487 = vpop.f32.mrb[0].mxu0
    %488 = vdwg.mxu0
    %v490 = vsel %vm264, %v471, 0
    %v493 = vsel %vm264, %v476, 0
    %v496 = vsel %vm264, %v481, 0
    %v499 = vsel %vm264, %v486, 0
    %v502 = vsel %vm277, %v121, 0
    %v505 = vsel %vm277, %v122, 0
    %507 = vmatprep.subr.mxu0 %v116
    %508 = vmatpush1.msra.mxu0 %v115
    %509 = vmatprep.subr.mxu0 %v118
    %510 = vmatpush1.msra.mxu0 %v117
    %511 = vmatprep.subr.mxu0 %v120
    %512 = vmatpush1.msra.mxu0 %v119
    %513 = vmatprep.subr.mxu0 %v505
    %514 = vmatpush1.msra.mxu0 %v502
    %515 = vmatprep.subr.mxu0 0.0
    %516 = vmatpush1.msra.mxu0 0.0
    %517 = vmatprep.subr.mxu0 0.0
    %518 = vmatpush1.msra.mxu0 0.0
    %519 = vmatprep.subr.mxu0 0.0
    %520 = vmatpush1.msra.mxu0 0.0
    %521 = vmatprep.subr.mxu0 0.0
    %522 = vmatpush1.msra.mxu0 0.0
    %523 = vmatprep.subr.mxu0 0.0
    %524 = vmatpush1.msra.mxu0 0.0
    %525 = vmatprep.subr.mxu0 0.0
    %526 = vmatpush1.msra.mxu0 0.0
    %527 = vmatprep.subr.mxu0 0.0
    %528 = vmatpush1.msra.mxu0 0.0
    %529 = vmatprep.subr.mxu0 0.0
    %530 = vmatpush1.msra.mxu0 0.0
    %531 = vmatprep.subr.mxu0 0.0
    %532 = vmatpush1.msra.mxu0 0.0
    %533 = vmatprep.subr.mxu0 0.0
    %534 = vmatpush1.msra.mxu0 0.0
    %535 = vmatprep.subr.mxu0 0.0
    %536 = vmatpush1.msra.mxu0 0.0
    %537 = vmatprep.subr.mxu0 0.0
    %538 = vmatpush1.msra.mxu0 0.0
    %539 = vmatprep.subr.mxu0 0.0
    %540 = vmatpush1.msra.mxu0 0.0
    %541 = vmatprep.subr.mxu0 0.0
    %542 = vmatpush1.msra.mxu0 0.0
    %543 = vmatprep.subr.mxu0 0.0
    %544 = vmatpush1.msra.mxu0 0.0
    %545 = vmatprep.subr.mxu0 0.0
    %546 = vmatpush1.msra.mxu0 0.0
    %547 = vmatprep.subr.mxu0 0.0
    %548 = vmatpush1.msra.mxu0 0.0
    %549 = vmatprep.subr.mxu0 0.0
    %550 = vmatpush1.msra.mxu0 0.0
    %551 = vmatprep.subr.mxu0 0.0
    %552 = vmatpush1.msra.mxu0 0.0
    %553 = vmatprep.subr.mxu0 0.0
    %554 = vmatpush1.msra.mxu0 0.0
    %555 = vmatprep.subr.mxu0 0.0
    %556 = vmatpush1.msra.mxu0 0.0
    %557 = vmatprep.subr.mxu0 0.0
    %558 = vmatpush1.msra.mxu0 0.0
    %559 = vmatprep.subr.mxu0 0.0
    %560 = vmatpush1.msra.mxu0 0.0
    %561 = vmatprep.subr.mxu0 0.0
    %562 = vmatpush1.msra.mxu0 0.0
    %563 = vmatprep.subr.mxu0 0.0
    %564 = vmatpush1.msra.mxu0 0.0
    %565 = vmatprep.subr.mxu0 0.0
    %566 = vmatpush1.msra.mxu0 0.0
    %567 = vmatprep.subr.mxu0 0.0
    %568 = vmatpush1.msra.mxu0 0.0
    %569 = vmatprep.subr.mxu0 0.0
    %570 = vmatpush1.msra.mxu0 0.0
    %571 = vmatprep.mubr.f32.mxu0 0.0
    %572 = vmatmul.mubr.f32.gmra.mrb[0].mxu0 %v490
    %v573 = vpop.f32.mrb[0].mxu0
    %v574 = vadd.f32 0.0, %v573
    %v575 = vpop.f32.mrb[0].mxu0
    %v576 = vadd.f32 0.0, %v575
    %577 = vmatprep.mubr.f32.mxu0 0.0
    %578 = vmatmul.mubr.f32.gmra.mrb[0].mxu0 %v493
    %v579 = vpop.f32.mrb[0].mxu0
    %v580 = vadd.f32 0.0, %v579
    %v581 = vpop.f32.mrb[0].mxu0
    %v582 = vadd.f32 0.0, %v581
    %583 = vmatprep.mubr.f32.mxu0 0.0
    %584 = vmatmul.mubr.f32.gmra.mrb[0].mxu0 %v496
    %v585 = vpop.f32.mrb[0].mxu0
    %v586 = vadd.f32 0.0, %v585
    %v587 = vpop.f32.mrb[0].mxu0
    %v588 = vadd.f32 0.0, %v587
    %589 = vmatprep.mubr.f32.mxu0 0.0
    %590 = vmatmul.mubr.f32.gmra.mrb[0].mxu0 %v499
    %v591 = vpop.f32.mrb[0].mxu0
    %v592 = vadd.f32 0.0, %v591
    %v593 = vpop.f32.mrb[0].mxu0
    %v594 = vadd.f32 0.0, %v593
    %595 = vdwg.mxu0
    %v596 = vadd.f32 %v384, %v574
    %v597 = vadd.f32 %v385, %v576
    %v598 = vadd.f32 %v386, %v580
    %v599 = vadd.f32 %v387, %v582
    %v600 = vadd.f32 %v388, %v586
    %v601 = vadd.f32 %v389, %v588
    %v602 = vadd.f32 %v390, %v592
    %v603 = vadd.f32 %v391, %v594
    %v605 = vsel %vm166, %v103, 0
    %v608 = vsel %vm166, %v104, 0
    %v611 = vsel %vm166, %v105, 0
    %v614 = vsel %vm166, %v106, 0
    %616 = vmatprep.subr.mxu0 0.0
    %617 = vmatpush1.msra.mxu0 %v88
    %618 = vmatprep.subr.mxu0 0.0
    %619 = vmatpush1.msra.mxu0 %v89
    %620 = vmatprep.subr.mxu0 0.0
    %621 = vmatpush1.msra.mxu0 %v90
    %622 = vmatprep.subr.mxu0 0.0
    %623 = vmatpush1.msra.mxu0 %v91
    %624 = vmatprep.subr.mxu0 0.0
    %625 = vmatpush1.msra.mxu0 %v92
    %626 = vmatprep.subr.mxu0 0.0
    %627 = vmatpush1.msra.mxu0 %v93
    %628 = vmatprep.subr.mxu0 0.0
    %629 = vmatpush1.msra.mxu0 %v94
    %630 = vmatprep.subr.mxu0 0.0
    %631 = vmatpush1.msra.mxu0 0.0
    %632 = vmatprep.subr.mxu0 0.0
    %633 = vmatpush1.msra.mxu0 0.0
    %634 = vmatprep.subr.mxu0 0.0
    %635 = vmatpush1.msra.mxu0 0.0
    %636 = vmatprep.subr.mxu0 0.0
    %637 = vmatpush1.msra.mxu0 0.0
    %638 = vmatprep.subr.mxu0 0.0
    %639 = vmatpush1.msra.mxu0 0.0
    %640 = vmatprep.subr.mxu0 0.0
    %641 = vmatpush1.msra.mxu0 0.0
    %642 = vmatprep.subr.mxu0 0.0
    %643 = vmatpush1.msra.mxu0 0.0
    %644 = vmatprep.subr.mxu0 0.0
    %645 = vmatpush1.msra.mxu0 0.0
    %646 = vmatprep.subr.mxu0 0.0
    %647 = vmatpush1.msra.mxu0 0.0
    %648 = vmatprep.subr.mxu0 0.0
    %649 = vmatpush1.msra.mxu0 0.0
    %650 = vmatprep.subr.mxu0 0.0
    %651 = vmatpush1.msra.mxu0 0.0
    %652 = vmatprep.subr.mxu0 0.0
    %653 = vmatpush1.msra.mxu0 0.0
    %654 = vmatprep.subr.mxu0 0.0
    %655 = vmatpush1.msra.mxu0 0.0
    %656 = vmatprep.subr.mxu0 0.0
    %657 = vmatpush1.msra.mxu0 0.0
    %658 = vmatprep.subr.mxu0 0.0
    %659 = vmatpush1.msra.mxu0 0.0
    %660 = vmatprep.subr.mxu0 0.0
    %661 = vmatpush1.msra.mxu0 0.0
    %662 = vmatprep.subr.mxu0 0.0
    %663 = vmatpush1.msra.mxu0 0.0
    %664 = vmatprep.subr.mxu0 0.0
    %665 = vmatpush1.msra.mxu0 0.0
    %666 = vmatprep.subr.mxu0 0.0
    %667 = vmatpush1.msra.mxu0 0.0
    %668 = vmatprep.subr.mxu0 0.0
    %669 = vmatpush1.msra.mxu0 0.0
    %670 = vmatprep.subr.mxu0 0.0
    %671 = vmatpush1.msra.mxu0 0.0
    %672 = vmatprep.subr.mxu0 0.0
    %673 = vmatpush1.msra.mxu0 0.0
    %674 = vmatprep.subr.mxu0 0.0
    %675 = vmatpush1.msra.mxu0 0.0
    %676 = vmatprep.subr.mxu0 0.0
    %677 = vmatpush1.msra.mxu0 0.0
    %678 = vmatprep.subr.mxu0 0.0
    %679 = vmatpush1.msra.mxu0 0.0
    %680 = vmatprep.mubr.f32.mxu0 0.0
    %681 = vmatmul.mubr.f32.gmra.mrb[0].mxu0 %v605
    %v682 = vpop.f32.mrb[0].mxu0
    %v683 = vadd.f32 0.0, %v682
    %v684 = vpop.f32.mrb[0].mxu0
    %685 = vmatprep.mubr.f32.mxu0 0.0
    %686 = vmatmul.mubr.f32.gmra.mrb[0].mxu0 %v608
    %v687 = vpop.f32.mrb[0].mxu0
    %v688 = vadd.f32 0.0, %v687
    %v689 = vpop.f32.mrb[0].mxu0
    %690 = vmatprep.mubr.f32.mxu0 0.0
    %691 = vmatmul.mubr.f32.gmra.mrb[0].mxu0 %v611
    %v692 = vpop.f32.mrb[0].mxu0
    %v693 = vadd.f32 0.0, %v692
    %v694 = vpop.f32.mrb[0].mxu0
    %695 = vmatprep.mubr.f32.mxu0 0.0
    %696 = vmatmul.mubr.f32.gmra.mrb[0].mxu0 %v614
    %v697 = vpop.f32.mrb[0].mxu0
    %v698 = vadd.f32 0.0, %v697
    %v699 = vpop.f32.mrb[0].mxu0
    %700 = vdwg.mxu0
    %v702 = vsel %vm264, %v683, 0
    %v705 = vsel %vm264, %v688, 0
    %v708 = vsel %vm264, %v693, 0
    %v711 = vsel %vm264, %v698, 0
    %v714 = vsel %vm277, %v129, 0
    %v717 = vsel %vm277, %v130, 0
    %719 = vmatprep.subr.mxu0 %v124
    %720 = vmatpush1.msra.mxu0 %v123
    %721 = vmatprep.subr.mxu0 %v126
    %722 = vmatpush1.msra.mxu0 %v125
    %723 = vmatprep.subr.mxu0 %v128
    %724 = vmatpush1.msra.mxu0 %v127
    %725 = vmatprep.subr.mxu0 %v717
    %726 = vmatpush1.msra.mxu0 %v714
    %727 = vmatprep.subr.mxu0 0.0
    %728 = vmatpush1.msra.mxu0 0.0
    %729 = vmatprep.subr.mxu0 0.0
    %730 = vmatpush1.msra.mxu0 0.0
    %731 = vmatprep.subr.mxu0 0.0
    %732 = vmatpush1.msra.mxu0 0.0
    %733 = vmatprep.subr.mxu0 0.0
    %734 = vmatpush1.msra.mxu0 0.0
    %735 = vmatprep.subr.mxu0 0.0
    %736 = vmatpush1.msra.mxu0 0.0
    %737 = vmatprep.subr.mxu0 0.0
    %738 = vmatpush1.msra.mxu0 0.0
    %739 = vmatprep.subr.mxu0 0.0
    %740 = vmatpush1.msra.mxu0 0.0
    %741 = vmatprep.subr.mxu0 0.0
    %742 = vmatpush1.msra.mxu0 0.0
    %743 = vmatprep.subr.mxu0 0.0
    %744 = vmatpush1.msra.mxu0 0.0
    %745 = vmatprep.subr.mxu0 0.0
    %746 = vmatpush1.msra.mxu0 0.0
    %747 = vmatprep.subr.mxu0 0.0
    %748 = vmatpush1.msra.mxu0 0.0
    %749 = vmatprep.subr.mxu0 0.0
    %750 = vmatpush1.msra.mxu0 0.0
    %751 = vmatprep.subr.mxu0 0.0
    %752 = vmatpush1.msra.mxu0 0.0
    %753 = vmatprep.subr.mxu0 0.0
    %754 = vmatpush1.msra.mxu0 0.0
    %755 = vmatprep.subr.mxu0 0.0
    %756 = vmatpush1.msra.mxu0 0.0
    %757 = vmatprep.subr.mxu0 0.0
    %758 = vmatpush1.msra.mxu0 0.0
    %759 = vmatprep.subr.mxu0 0.0
    %760 = vmatpush1.msra.mxu0 0.0
    %761 = vmatprep.subr.mxu0 0.0
    %762 = vmatpush1.msra.mxu0 0.0
    %763 = vmatprep.subr.mxu0 0.0
    %764 = vmatpush1.msra.mxu0 0.0
    %765 = vmatprep.subr.mxu0 0.0
    %766 = vmatpush1.msra.mxu0 0.0
    %767 = vmatprep.subr.mxu0 0.0
    %768 = vmatpush1.msra.mxu0 0.0
    %769 = vmatprep.subr.mxu0 0.0
    %770 = vmatpush1.msra.mxu0 0.0
    %771 = vmatprep.subr.mxu0 0.0
    %772 = vmatpush1.msra.mxu0 0.0
    %773 = vmatprep.subr.mxu0 0.0
    %774 = vmatpush1.msra.mxu0 0.0
    %775 = vmatprep.subr.mxu0 0.0
    %776 = vmatpush1.msra.mxu0 0.0
    %777 = vmatprep.subr.mxu0 0.0
    %778 = vmatpush1.msra.mxu0 0.0
    %779 = vmatprep.subr.mxu0 0.0
    %780 = vmatpush1.msra.mxu0 0.0
    %781 = vmatprep.subr.mxu0 0.0
    %782 = vmatpush1.msra.mxu0 0.0
    %783 = vmatprep.mubr.f32.mxu0 0.0
    %784 = vmatmul.mubr.f32.gmra.mrb[0].mxu0 %v702
    %v785 = vpop.f32.mrb[0].mxu0
    %v786 = vadd.f32 0.0, %v785
    %v787 = vpop.f32.mrb[0].mxu0
    %v788 = vadd.f32 0.0, %v787
    %789 = vmatprep.mubr.f32.mxu0 0.0
    %790 = vmatmul.mubr.f32.gmra.mrb[0].mxu0 %v705
    %v791 = vpop.f32.mrb[0].mxu0
    %v792 = vadd.f32 0.0, %v791
    %v793 = vpop.f32.mrb[0].mxu0
    %v794 = vadd.f32 0.0, %v793
    %795 = vmatprep.mubr.f32.mxu0 0.0
    %796 = vmatmul.mubr.f32.gmra.mrb[0].mxu0 %v708
    %v797 = vpop.f32.mrb[0].mxu0
    %v798 = vadd.f32 0.0, %v797
    %v799 = vpop.f32.mrb[0].mxu0
    %v800 = vadd.f32 0.0, %v799
    %801 = vmatprep.mubr.f32.mxu0 0.0
    %802 = vmatmul.mubr.f32.gmra.mrb[0].mxu0 %v711
    %v803 = vpop.f32.mrb[0].mxu0
    %v804 = vadd.f32 0.0, %v803
    %v805 = vpop.f32.mrb[0].mxu0
    %v806 = vadd.f32 0.0, %v805
    %807 = vdwg.mxu0
    %v808 = vadd.f32 %v596, %v786
    %v809 = vadd.f32 %v597, %v788
    %v810 = vadd.f32 %v598, %v792
    %v811 = vadd.f32 %v599, %v794
    %v812 = vadd.f32 %v600, %v798
    %v813 = vadd.f32 %v601, %v800
    %v814 = vadd.f32 %v602, %v804
    %v815 = vadd.f32 %v603, %v806
    %vm816 = vcmp.ge.f32.partialorder %v808, 0.0
    %vm817 = vcmp.ge.f32.partialorder %v809, 0.0
    %vm818 = vcmp.ge.f32.partialorder %v810, 0.0
    %vm819 = vcmp.ge.f32.partialorder %v811, 0.0
    %vm820 = vcmp.ge.f32.partialorder %v812, 0.0
    %vm821 = vcmp.ge.f32.partialorder %v813, 0.0
    %vm822 = vcmp.ge.f32.partialorder %v814, 0.0
    %vm823 = vcmp.ge.f32.partialorder %v815, 0.0
    %v824 = vmul.f32 %v808, 0.01
    %v825 = vmul.f32 %v809, 0.01
    %v826 = vmul.f32 %v810, 0.01
    %v827 = vmul.f32 %v811, 0.01
    %v828 = vmul.f32 %v812, 0.01
    %v829 = vmul.f32 %v813, 0.01
    %v830 = vmul.f32 %v814, 0.01
    %v831 = vmul.f32 %v815, 0.01
    %v832 = vsel %vm816, %v808, %v824
    %v833 = vsel %vm817, %v809, %v825
    %v834 = vsel %vm818, %v810, %v826
    %v835 = vsel %vm819, %v811, %v827
    %v836 = vsel %vm820, %v812, %v828
    %v837 = vsel %vm821, %v813, %v829
    %v838 = vsel %vm822, %v814, %v830
    %v839 = vsel %vm823, %v815, %v831
    %v840 = vadd.f32 %v832, %v834
    %v841 = vadd.f32 %v840, %v836
    %v842 = vsel %vm277, %v838, 0.0
    %v843 = vadd.f32 %v841, %v842
    %v844 = vrot.slane %v843, 4
    %v845 = vadd.f32 %v843, %v844
    %v846 = vrot.slane %v845, 2
    %v847 = vadd.f32 %v845, %v846
    %v848 = vrot.slane %v847, 1
    %v849 = vadd.f32 %v847, %v848
    %vm850 = vcmask 785408
    %v851 = vsel %vm850, %v833, 0.0
    %v852 = vsel %vm850, %v835, 0.0
    %v853 = vadd.f32 %v851, %v852
    %v854 = vsel %vm850, %v837, 0.0
    %v855 = vadd.f32 %v853, %v854
    %vm856 = vcmask 781312
    %v857 = vsel %vm856, %v839, 0.0
    %v858 = vadd.f32 %v855, %v857
    %v859 = vrot.slane %v858, 4
    %v860 = vadd.f32 %v858, %v859
    %v861 = vrot.slane %v860, 2
    %v862 = vadd.f32 %v860, %v861
    %v863 = vrot.slane %v862, 1
    %v864 = vadd.f32 %v862, %v863
    %v866 = vsel %vm850, %v864, 0
    %868 = vmatprep.subr.mxu0 0.0
    %869 = vmatpush1.msra.mxu0 %v132
    %870 = vmatprep.subr.mxu0 0.0
    %871 = vmatpush1.msra.mxu0 %v133
    %872 = vmatprep.subr.mxu0 0.0
    %873 = vmatpush1.msra.mxu0 %v134
    %874 = vmatprep.subr.mxu0 0.0
    %875 = vmatpush1.msra.mxu0 %v135
    %876 = vmatprep.subr.mxu0 0.0
    %877 = vmatpush1.msra.mxu0 %v136
    %878 = vmatprep.subr.mxu0 0.0
    %879 = vmatpush1.msra.mxu0 %v137
    %880 = vmatprep.subr.mxu0 0.0
    %881 = vmatpush1.msra.mxu0 %v138
    %882 = vmatprep.subr.mxu0 0.0
    %883 = vmatpush1.msra.mxu0 %v139
    %884 = vmatprep.subr.mxu0 0.0
    %885 = vmatpush1.msra.mxu0 %v140
    %886 = vmatprep.subr.mxu0 0.0
    %887 = vmatpush1.msra.mxu0 %v141
    %888 = vmatprep.subr.mxu0 0.0
    %889 = vmatpush1.msra.mxu0 %v142
    %890 = vmatprep.subr.mxu0 0.0
    %891 = vmatpush1.msra.mxu0 %v143
    %892 = vmatprep.subr.mxu0 0.0
    %893 = vmatpush1.msra.mxu0 %v144
    %894 = vmatprep.subr.mxu0 0.0
    %895 = vmatpush1.msra.mxu0 %v145
    %896 = vmatprep.subr.mxu0 0.0
    %897 = vmatpush1.msra.mxu0 %v146
    %898 = vmatprep.subr.mxu0 0.0
    %899 = vmatpush1.msra.mxu0 %v147
    %900 = vmatprep.subr.mxu0 0.0
    %901 = vmatpush1.msra.mxu0 %v148
    %902 = vmatprep.subr.mxu0 0.0
    %903 = vmatpush1.msra.mxu0 %v149
    %904 = vmatprep.subr.mxu0 0.0
    %905 = vmatpush1.msra.mxu0 %v150
    %906 = vmatprep.subr.mxu0 0.0
    %907 = vmatpush1.msra.mxu0 %v151
    %908 = vmatprep.subr.mxu0 0.0
    %909 = vmatpush1.msra.mxu0 %v152
    %910 = vmatprep.subr.mxu0 0.0
    %911 = vmatpush1.msra.mxu0 %v153
    %912 = vmatprep.subr.mxu0 0.0
    %913 = vmatpush1.msra.mxu0 %v154
    %914 = vmatprep.subr.mxu0 0.0
    %915 = vmatpush1.msra.mxu0 %v155
    %916 = vmatprep.subr.mxu0 0.0
    %917 = vmatpush1.msra.mxu0 %v156
    %918 = vmatprep.subr.mxu0 0.0
    %919 = vmatpush1.msra.mxu0 %v157
    %920 = vmatprep.subr.mxu0 0.0
    %921 = vmatpush1.msra.mxu0 %v158
    %922 = vmatprep.subr.mxu0 0.0
    %923 = vmatpush1.msra.mxu0 %v159
    %924 = vmatprep.subr.mxu0 0.0
    %925 = vmatpush1.msra.mxu0 0.0
    %926 = vmatprep.subr.mxu0 0.0
    %927 = vmatpush1.msra.mxu0 0.0
    %928 = vmatprep.subr.mxu0 0.0
    %929 = vmatpush1.msra.mxu0 0.0
    %930 = vmatprep.subr.mxu0 0.0
    %931 = vmatpush1.msra.mxu0 0.0
    %932 = vmatprep.mubr.f32.mxu0 %v866
    %933 = vmatmul.mubr.f32.gmra.mrb[0].mxu0 %v849
    %v934 = vpop.f32.mrb[0].mxu0
    %v935 = vadd.f32 0.0, %v934
    %v936 = vpop.f32.mrb[0].mxu0
    %937 = vdwg.mxu0
    %v938 = vmul.f32 %v935, 0.0025510204
    %vm939 = vcmask 130048
    %v941 = vsel %vm939, %v938, 0
    %943 = vmatprep.subr.mxu0 %v161
    %944 = vmatpush1.msra.mxu0 %v160
    %945 = vmatprep.subr.mxu0 %v163
    %946 = vmatpush1.msra.mxu0 %v162
    %947 = vmatprep.subr.mxu0 0.0
    %948 = vmatpush1.msra.mxu0 0.0
    %949 = vmatprep.subr.mxu0 0.0
    %950 = vmatpush1.msra.mxu0 0.0
    %951 = vmatprep.subr.mxu0 0.0
    %952 = vmatpush1.msra.mxu0 0.0
    %953 = vmatprep.subr.mxu0 0.0
    %954 = vmatpush1.msra.mxu0 0.0
    %955 = vmatprep.subr.mxu0 0.0
    %956 = vmatpush1.msra.mxu0 0.0
    %957 = vmatprep.subr.mxu0 0.0
    %958 = vmatpush1.msra.mxu0 0.0
    %959 = vmatprep.subr.mxu0 0.0
    %960 = vmatpush1.msra.mxu0 0.0
    %961 = vmatprep.subr.mxu0 0.0
    %962 = vmatpush1.msra.mxu0 0.0
    %963 = vmatprep.subr.mxu0 0.0
    %964 = vmatpush1.msra.mxu0 0.0
    %965 = vmatprep.subr.mxu0 0.0
    %966 = vmatpush1.msra.mxu0 0.0
    %967 = vmatprep.subr.mxu0 0.0
    %968 = vmatpush1.msra.mxu0 0.0
    %969 = vmatprep.subr.mxu0 0.0
    %970 = vmatpush1.msra.mxu0 0.0
    %971 = vmatprep.subr.mxu0 0.0
    %972 = vmatpush1.msra.mxu0 0.0
    %973 = vmatprep.subr.mxu0 0.0
    %974 = vmatpush1.msra.mxu0 0.0
    %975 = vmatprep.subr.mxu0 0.0
    %976 = vmatpush1.msra.mxu0 0.0
    %977 = vmatprep.subr.mxu0 0.0
    %978 = vmatpush1.msra.mxu0 0.0
    %979 = vmatprep.subr.mxu0 0.0
    %980 = vmatpush1.msra.mxu0 0.0
    %981 = vmatprep.subr.mxu0 0.0
    %982 = vmatpush1.msra.mxu0 0.0
    %983 = vmatprep.subr.mxu0 0.0
    %984 = vmatpush1.msra.mxu0 0.0
    %985 = vmatprep.subr.mxu0 0.0
    %986 = vmatpush1.msra.mxu0 0.0
    %987 = vmatprep.subr.mxu0 0.0
    %988 = vmatpush1.msra.mxu0 0.0
    %989 = vmatprep.subr.mxu0 0.0
    %990 = vmatpush1.msra.mxu0 0.0
    %991 = vmatprep.subr.mxu0 0.0
    %992 = vmatpush1.msra.mxu0 0.0
    %993 = vmatprep.subr.mxu0 0.0
    %994 = vmatpush1.msra.mxu0 0.0
    %995 = vmatprep.subr.mxu0 0.0
    %996 = vmatpush1.msra.mxu0 0.0
    %997 = vmatprep.subr.mxu0 0.0
    %998 = vmatpush1.msra.mxu0 0.0
    %999 = vmatprep.subr.mxu0 0.0
    %1000 = vmatpush1.msra.mxu0 0.0
    %1001 = vmatprep.subr.mxu0 0.0
    %1002 = vmatpush1.msra.mxu0 0.0
    %1003 = vmatprep.subr.mxu0 0.0
    %1004 = vmatpush1.msra.mxu0 0.0
    %1005 = vmatprep.subr.mxu0 0.0
    %1006 = vmatpush1.msra.mxu0 0.0
    %1007 = vmatprep.mubr.f32.mxu0 0.0
    %1008 = vmatmul.mubr.f32.gmra.mrb[0].mxu0 %v941
    %v1009 = vpop.f32.mrb[0].mxu0
    %v1010 = vadd.f32 0.0, %v1009
    %v1011 = vpop.f32.mrb[0].mxu0
    %v1012 = vadd.f32 0.0, %v1011
    %1013 = vdwg.mxu0
    %v1014 = vlaneseq
    %v1015 = vshrl.u32 %v1014, 7
    %v1016 = vsub.s32 0, %v1015
    %v1017 = vrot.slane %v1010, %v1016
    %v1018 = vlaneseq
    %v1019 = vshrl.u32 %v1018, 7
    %v1020 = vsub.s32 0, %v1019
    %v1021 = vrot.slane %v1012, %v1020
    %v1022 = vsub.f32 %v832, %v1017
    %v1023 = vsub.f32 %v833, %v1021
    %v1024 = vsub.f32 %v834, %v1017
    %v1025 = vsub.f32 %v835, %v1021
    %v1026 = vsub.f32 %v836, %v1017
    %v1027 = vsub.f32 %v837, %v1021
    %v1028 = vsub.f32 %v838, %v1017
    %v1029 = vsub.f32 %v839, %v1021
    %v1030 = vmul.f32 %v1022, %v1022
    %v1031 = vmul.f32 %v1023, %v1023
    %v1032 = vmul.f32 %v1024, %v1024
    %v1033 = vmul.f32 %v1025, %v1025
    %v1034 = vmul.f32 %v1026, %v1026
    %v1035 = vmul.f32 %v1027, %v1027
    %v1036 = vmul.f32 %v1028, %v1028
    %v1037 = vmul.f32 %v1029, %v1029
    %v1038 = vadd.f32 %v1030, %v1032
    %v1039 = vadd.f32 %v1038, %v1034
    %v1040 = vsel %vm277, %v1036, 0.0
    %v1041 = vadd.f32 %v1039, %v1040
    %v1042 = vrot.slane %v1041, 4
    %v1043 = vadd.f32 %v1041, %v1042
    %v1044 = vrot.slane %v1043, 2
    %v1045 = vadd.f32 %v1043, %v1044
    %v1046 = vrot.slane %v1045, 1
    %v1047 = vadd.f32 %v1045, %v1046
    %v1048 = vsel %vm850, %v1031, 0.0
    %v1049 = vsel %vm850, %v1033, 0.0
    %v1050 = vadd.f32 %v1048, %v1049
    %v1051 = vsel %vm850, %v1035, 0.0
    %v1052 = vadd.f32 %v1050, %v1051
    %v1053 = vsel %vm856, %v1037, 0.0
    %v1054 = vadd.f32 %v1052, %v1053
    %v1055 = vrot.slane %v1054, 4
    %v1056 = vadd.f32 %v1054, %v1055
    %v1057 = vrot.slane %v1056, 2
    %v1058 = vadd.f32 %v1056, %v1057
    %v1059 = vrot.slane %v1058, 1
    %v1060 = vadd.f32 %v1058, %v1059
    %v1062 = vsel %vm850, %v1060, 0
    %1064 = vmatprep.subr.mxu0 0.0
    %1065 = vmatpush1.msra.mxu0 %v132
    %1066 = vmatprep.subr.mxu0 0.0
    %1067 = vmatpush1.msra.mxu0 %v133
    %1068 = vmatprep.subr.mxu0 0.0
    %1069 = vmatpush1.msra.mxu0 %v134
    %1070 = vmatprep.subr.mxu0 0.0
    %1071 = vmatpush1.msra.mxu0 %v135
    %1072 = vmatprep.subr.mxu0 0.0
    %1073 = vmatpush1.msra.mxu0 %v136
    %1074 = vmatprep.subr.mxu0 0.0
    %1075 = vmatpush1.msra.mxu0 %v137
    %1076 = vmatprep.subr.mxu0 0.0
    %1077 = vmatpush1.msra.mxu0 %v138
    %1078 = vmatprep.subr.mxu0 0.0
    %1079 = vmatpush1.msra.mxu0 %v139
    %1080 = vmatprep.subr.mxu0 0.0
    %1081 = vmatpush1.msra.mxu0 %v140
    %1082 = vmatprep.subr.mxu0 0.0
    %1083 = vmatpush1.msra.mxu0 %v141
    %1084 = vmatprep.subr.mxu0 0.0
    %1085 = vmatpush1.msra.mxu0 %v142
    %1086 = vmatprep.subr.mxu0 0.0
    %1087 = vmatpush1.msra.mxu0 %v143
    %1088 = vmatprep.subr.mxu0 0.0
    %1089 = vmatpush1.msra.mxu0 %v144
    %1090 = vmatprep.subr.mxu0 0.0
    %1091 = vmatpush1.msra.mxu0 %v145
    %1092 = vmatprep.subr.mxu0 0.0
    %1093 = vmatpush1.msra.mxu0 %v146
    %1094 = vmatprep.subr.mxu0 0.0
    %1095 = vmatpush1.msra.mxu0 %v147
    %1096 = vmatprep.subr.mxu0 0.0
    %1097 = vmatpush1.msra.mxu0 %v148
    %1098 = vmatprep.subr.mxu0 0.0
    %1099 = vmatpush1.msra.mxu0 %v149
    %1100 = vmatprep.subr.mxu0 0.0
    %1101 = vmatpush1.msra.mxu0 %v150
    %1102 = vmatprep.subr.mxu0 0.0
    %1103 = vmatpush1.msra.mxu0 %v151
    %1104 = vmatprep.subr.mxu0 0.0
    %1105 = vmatpush1.msra.mxu0 %v152
    %1106 = vmatprep.subr.mxu0 0.0
    %1107 = vmatpush1.msra.mxu0 %v153
    %1108 = vmatprep.subr.mxu0 0.0
    %1109 = vmatpush1.msra.mxu0 %v154
    %1110 = vmatprep.subr.mxu0 0.0
    %1111 = vmatpush1.msra.mxu0 %v155
    %1112 = vmatprep.subr.mxu0 0.0
    %1113 = vmatpush1.msra.mxu0 %v156
    %1114 = vmatprep.subr.mxu0 0.0
    %1115 = vmatpush1.msra.mxu0 %v157
    %1116 = vmatprep.subr.mxu0 0.0
    %1117 = vmatpush1.msra.mxu0 %v158
    %1118 = vmatprep.subr.mxu0 0.0
    %1119 = vmatpush1.msra.mxu0 %v159
    %1120 = vmatprep.subr.mxu0 0.0
    %1121 = vmatpush1.msra.mxu0 0.0
    %1122 = vmatprep.subr.mxu0 0.0
    %1123 = vmatpush1.msra.mxu0 0.0
    %1124 = vmatprep.subr.mxu0 0.0
    %1125 = vmatpush1.msra.mxu0 0.0
    %1126 = vmatprep.subr.mxu0 0.0
    %1127 = vmatpush1.msra.mxu0 0.0
    %1128 = vmatprep.mubr.f32.mxu0 %v1062
    %1129 = vmatmul.mubr.f32.gmra.mrb[0].mxu0 %v1047
    %v1130 = vpop.f32.mrb[0].mxu0
    %v1131 = vadd.f32 0.0, %v1130
    %v1132 = vpop.f32.mrb[0].mxu0
    %1133 = vdwg.mxu0
    %v1134 = vmul.f32 %v1131, 0.0025510204
    %v1135 = vadd.f32 %v1134, 1e-05
    %v1136 = vrsqrt.pop %v1135
    %v1137 = vmul.f32 %v164, %v1136
    %v1139 = vsel %vm939, %v1137, 0
    %1141 = vmatprep.subr.mxu0 %v161
    %1142 = vmatpush1.msra.mxu0 %v160
    %1143 = vmatprep.subr.mxu0 %v163
    %1144 = vmatpush1.msra.mxu0 %v162
    %1145 = vmatprep.subr.mxu0 0.0
    %1146 = vmatpush1.msra.mxu0 0.0
    %1147 = vmatprep.subr.mxu0 0.0
    %1148 = vmatpush1.msra.mxu0 0.0
    %1149 = vmatprep.subr.mxu0 0.0
    %1150 = vmatpush1.msra.mxu0 0.0
    %1151 = vmatprep.subr.mxu0 0.0
    %1152 = vmatpush1.msra.mxu0 0.0
    %1153 = vmatprep.subr.mxu0 0.0
    %1154 = vmatpush1.msra.mxu0 0.0
    %1155 = vmatprep.subr.mxu0 0.0
    %1156 = vmatpush1.msra.mxu0 0.0
    %1157 = vmatprep.subr.mxu0 0.0
    %1158 = vmatpush1.msra.mxu0 0.0
    %1159 = vmatprep.subr.mxu0 0.0
    %1160 = vmatpush1.msra.mxu0 0.0
    %1161 = vmatprep.subr.mxu0 0.0
    %1162 = vmatpush1.msra.mxu0 0.0
    %1163 = vmatprep.subr.mxu0 0.0
    %1164 = vmatpush1.msra.mxu0 0.0
    %1165 = vmatprep.subr.mxu0 0.0
    %1166 = vmatpush1.msra.mxu0 0.0
    %1167 = vmatprep.subr.mxu0 0.0
    %1168 = vmatpush1.msra.mxu0 0.0
    %1169 = vmatprep.subr.mxu0 0.0
    %1170 = vmatpush1.msra.mxu0 0.0
    %1171 = vmatprep.subr.mxu0 0.0
    %1172 = vmatpush1.msra.mxu0 0.0
    %1173 = vmatprep.subr.mxu0 0.0
    %1174 = vmatpush1.msra.mxu0 0.0
    %1175 = vmatprep.subr.mxu0 0.0
    %1176 = vmatpush1.msra.mxu0 0.0
    %1177 = vmatprep.subr.mxu0 0.0
    %1178 = vmatpush1.msra.mxu0 0.0
    %1179 = vmatprep.subr.mxu0 0.0
    %1180 = vmatpush1.msra.mxu0 0.0
    %1181 = vmatprep.subr.mxu0 0.0
    %1182 = vmatpush1.msra.mxu0 0.0
    %1183 = vmatprep.subr.mxu0 0.0
    %1184 = vmatpush1.msra.mxu0 0.0
    %1185 = vmatprep.subr.mxu0 0.0
    %1186 = vmatpush1.msra.mxu0 0.0
    %1187 = vmatprep.subr.mxu0 0.0
    %1188 = vmatpush1.msra.mxu0 0.0
    %1189 = vmatprep.subr.mxu0 0.0
    %1190 = vmatpush1.msra.mxu0 0.0
    %1191 = vmatprep.subr.mxu0 0.0
    %1192 = vmatpush1.msra.mxu0 0.0
    %1193 = vmatprep.subr.mxu0 0.0
    %1194 = vmatpush1.msra.mxu0 0.0
    %1195 = vmatprep.subr.mxu0 0.0
    %1196 = vmatpush1.msra.mxu0 0.0
    %1197 = vmatprep.subr.mxu0 0.0
    %1198 = vmatpush1.msra.mxu0 0.0
    %1199 = vmatprep.subr.mxu0 0.0
    %1200 = vmatpush1.msra.mxu0 0.0
    %1201 = vmatprep.subr.mxu0 0.0
    %1202 = vmatpush1.msra.mxu0 0.0
    %1203 = vmatprep.subr.mxu0 0.0
    %1204 = vmatpush1.msra.mxu0 0.0
    %1205 = vmatprep.mubr.f32.mxu0 0.0
    %1206 = vmatmul.mubr.f32.gmra.mrb[0].mxu0 %v1139
    %v1207 = vpop.f32.mrb[0].mxu0
    %v1208 = vadd.f32 0.0, %v1207
    %v1209 = vpop.f32.mrb[0].mxu0
    %v1210 = vadd.f32 0.0, %v1209
    %1211 = vdwg.mxu0
    %v1212 = vlaneseq
    %v1213 = vshrl.u32 %v1212, 7
    %v1214 = vsub.s32 0, %v1213
    %v1215 = vrot.slane %v1208, %v1214
    %v1216 = vlaneseq
    %v1217 = vshrl.u32 %v1216, 7
    %v1218 = vsub.s32 0, %v1217
    %v1219 = vrot.slane %v1210, %v1218
    %v1220 = vmul.f32 %v1022, %v1215
    %v1221 = vmul.f32 %v1023, %v1219
    %v1222 = vmul.f32 %v1024, %v1215
    %v1223 = vmul.f32 %v1025, %v1219
    %v1224 = vmul.f32 %v1026, %v1215
    %v1225 = vmul.f32 %v1027, %v1219
    %v1226 = vmul.f32 %v1028, %v1215
    %v1227 = vmul.f32 %v1029, %v1219
    %v1229 = vlaneseq
    %v1230 = vshrl.u32 %v1229, 7
    %v1231 = vsub.s32 0, %v1230
    %v1232 = vrot.slane %v165, %v1231
    %v1233 = vlaneseq
    %v1234 = vshrl.u32 %v1233, 7
    %v1235 = vsub.s32 1, %v1234
    %v1236 = vrot.slane %v165, %v1235
    %v1239 = vadd.f32 %v1220, %v1232
    %v1240 = vadd.f32 %v1221, %v1236
    %v1241 = vadd.f32 %v1222, %v1232
    %v1242 = vadd.f32 %v1223, %v1236
    %v1243 = vadd.f32 %v1224, %v1232
    %v1244 = vadd.f32 %v1225, %v1236
    %v1245 = vadd.f32 %v1226, %v1232
    %v1246 = vadd.f32 %v1227, %v1236
    %v1247 = vld [vmem:[%s8] sm:$0xff]
    %v1248 = vld [vmem:[%s8 + $0x8] sm:$0x3f]
    %v1249 = vld [vmem:[%s8 + $0x10] sm:$0xff]
    %v1250 = vld [vmem:[%s8 + $0x18] sm:$0x3f]
    %v1251 = vld [vmem:[%s8 + $0x20] sm:$0xff]
    %v1252 = vld [vmem:[%s8 + $0x28] sm:$0x3f]
    %v1253 = vld [vmem:[%s9] sm:$0xff]
    %v1254 = vld [vmem:[%s9 + $0x8] sm:$0xff]
    %v1255 = vld [vmem:[%s9 + $0x10] sm:$0xff]
    %v1256 = vld [vmem:[%s9 + $0x18] sm:$0xff]
    %v1257 = vld [vmem:[%s9 + $0x20] sm:$0xff]
    %v1258 = vld [vmem:[%s9 + $0x28] sm:$0xff]
    %v1259 = vld [vmem:[%s9 + $0x30] sm:$0xff]
    %v1260 = vld [vmem:[%s9 + $0x38] sm:$0xff]
    %v1261 = vld [vmem:[%s9 + $0x40] sm:$0xff]
    %v1262 = vld [vmem:[%s9 + $0x48] sm:$0xff]
    %v1263 = vld [vmem:[%s9 + $0x50] sm:$0xff]
    %v1264 = vld [vmem:[%s9 + $0x58] sm:$0xff]
    %v1265 = vld [vmem:[%s9 + $0x60] sm:$0xff]
    %v1266 = vld [vmem:[%s9 + $0x68] sm:$0xff]
    %v1267 = vld [vmem:[%s9 + $0x70] sm:$0xff]
    %v1268 = vld [vmem:[%s9 + $0x78] sm:$0xff]
    %v1269 = vld [vmem:[%s9 + $0x80] sm:$0xff]
    %v1270 = vld [vmem:[%s9 + $0x88] sm:$0xff]
    %v1271 = vld [vmem:[%s9 + $0x90] sm:$0xff]
    %v1272 = vld [vmem:[%s9 + $0x98] sm:$0xff]
    %v1273 = vld [vmem:[%s9 + $0xa0] sm:$0xff]
    %v1274 = vld [vmem:[%s9 + $0xa8] sm:$0xff]
    %v1275 = vld [vmem:[%s9 + $0xb0] sm:$0xff]
    %v1276 = vld [vmem:[%s9 + $0xb8] sm:$0xff]
    %v1277 = vld [vmem:[%s9 + $0xc0] sm:$0xff]
    %v1278 = vld [vmem:[%s9 + $0xc8] sm:$0xff]
    %v1279 = vld [vmem:[%s9 + $0xd0] sm:$0xff]
    %v1280 = vld [vmem:[%s9 + $0xd8] sm:$0xff]
    %v1281 = vld [vmem:[%s9 + $0xe0] sm:$0xff]
    %v1282 = vld [vmem:[%s9 + $0xe8] sm:$0xff]
    %v1283 = vld [vmem:[%s9 + $0xf0] sm:$0xff]
    %v1284 = vld [vmem:[%s9 + $0xf8] sm:$0xff]
    %v1285 = vld [vmem:[%s9 + $0x100] sm:$0xff]
    %v1286 = vld [vmem:[%s9 + $0x108] sm:$0xff]
    %v1287 = vld [vmem:[%s9 + $0x110] sm:$0xff]
    %v1288 = vld [vmem:[%s9 + $0x118] sm:$0xff]
    %v1289 = vld [vmem:[%s9 + $0x120] sm:$0xff]
    %v1290 = vld [vmem:[%s9 + $0x128] sm:$0xff]
    %v1291 = vld [vmem:[%s9 + $0x130] sm:$0xff]
    %v1292 = vld [vmem:[%s9 + $0x138] sm:$0xff]
    %v1293 = vld [vmem:[%s9 + $0x140] sm:$0xff]
    %v1294 = vld [vmem:[%s9 + $0x148] sm:$0xff]
    %v1295 = vld [vmem:[%s9 + $0x150] sm:$0xff]
    %v1296 = vld [vmem:[%s9 + $0x158] sm:$0xff]
    %v1297 = vld [vmem:[%s9 + $0x160] sm:$0xff]
    %v1298 = vld [vmem:[%s9 + $0x168] sm:$0xff]
    %v1299 = vld [vmem:[%s9 + $0x170] sm:$0xff]
    %v1300 = vld [vmem:[%s9 + $0x178] sm:$0xff]
    %v1301 = vld [vmem:[%s9 + $0x180] sm:$0xff]
    %v1302 = vld [vmem:[%s9 + $0x188] sm:$0xff]
    %v1303 = vld [vmem:[%s9 + $0x190] sm:$0xff]
    %v1304 = vld [vmem:[%s9 + $0x198] sm:$0xff]
    %v1305 = vld [vmem:[%s9 + $0x1a0] sm:$0xff]
    %v1306 = vld [vmem:[%s9 + $0x1a8] sm:$0xff]
    %v1307 = vld [vmem:[%s9 + $0x1b0] sm:$0xff]
    %v1308 = vld [vmem:[%s9 + $0x1b8] sm:$0xff]
    %v1309 = vld [vmem:[%s9 + $0x1c0] sm:$0xff]
    %v1310 = vld [vmem:[%s9 + $0x1c8] sm:$0xff]
    %v1311 = vld [vmem:[%s9 + $0x1d0] sm:$0xff]
    %v1312 = vld [vmem:[%s9 + $0x1d8] sm:$0xff]
    %v1313 = vld [vmem:[%s9 + $0x1e0] sm:$0xff]
    %v1314 = vld [vmem:[%s9 + $0x1e8] sm:$0xff]
    %v1315 = vld [vmem:[%s9 + $0x1f0] sm:$0xff]
    %v1316 = vld [vmem:[%s9 + $0x1f8] sm:$0xff]
    %v1317 = vld [vmem:[%s9 + $0x200] sm:$0xff]
    %v1318 = vld [vmem:[%s9 + $0x208] sm:$0xff]
    %v1319 = vld [vmem:[%s9 + $0x210] sm:$0xff]
    %v1320 = vld [vmem:[%s9 + $0x218] sm:$0xff]
    %v1321 = vld [vmem:[%s9 + $0x220] sm:$0xff]
    %v1322 = vld [vmem:[%s9 + $0x228] sm:$0xff]
    %v1323 = vld [vmem:[%s9 + $0x230] sm:$0xff]
    %v1324 = vld [vmem:[%s9 + $0x238] sm:$0xff]
    %v1325 = vld [vmem:[%s9 + $0x240] sm:$0xff]
    %v1326 = vld [vmem:[%s9 + $0x248] sm:$0xff]
    %v1327 = vld [vmem:[%s9 + $0x250] sm:$0xff]
    %v1328 = vld [vmem:[%s9 + $0x258] sm:$0xff]
    %v1329 = vld [vmem:[%s9 + $0x260] sm:$0xff]
    %v1330 = vld [vmem:[%s9 + $0x268] sm:$0xff]
    %v1331 = vld [vmem:[%s9 + $0x270] sm:$0xff]
    %v1332 = vld [vmem:[%s9 + $0x278] sm:$0xff]
    %v1333 = vld [vmem:[%s9 + $0x280] sm:$0xff]
    %v1334 = vld [vmem:[%s9 + $0x288] sm:$0xff]
    %v1335 = vld [vmem:[%s9 + $0x290] sm:$0xff]
    %v1336 = vld [vmem:[%s9 + $0x298] sm:$0xff]
    %v1337 = vld [vmem:[%s9 + $0x2a0] sm:$0xff]
    %v1338 = vld [vmem:[%s9 + $0x2a8] sm:$0xff]
    %v1339 = vld [vmem:[%s9 + $0x2b0] sm:$0xff]
    %v1340 = vld [vmem:[%s9 + $0x2b8] sm:$0xff]
    %v1341 = vld [vmem:[%s9 + $0x2c0] sm:$0xff]
    %v1342 = vld [vmem:[%s9 + $0x2c8] sm:$0xff]
    %v1343 = vld [vmem:[%s9 + $0x2d0] sm:$0xff]
    %v1344 = vld [vmem:[%s9 + $0x2d8] sm:$0xff]
    %v1345 = vld [vmem:[%s9 + $0x2e0] sm:$0xff]
    %v1346 = vld [vmem:[%s9 + $0x2e8] sm:$0xff]
    %v1347 = vld [vmem:[%s9 + $0x2f0] sm:$0xff]
    %v1348 = vld [vmem:[%s9 + $0x2f8] sm:$0xff]
    %v1349 = vld [vmem:[%s9 + $0x300] sm:$0xff]
    %v1350 = vld [vmem:[%s9 + $0x308] sm:$0xff]
    %v1351 = vld [vmem:[%s9 + $0x310] sm:$0xff]
    %v1352 = vld [vmem:[%s9 + $0x318] sm:$0xff]
    %v1353 = vld [vmem:[%s9 + $0x320] sm:$0xff]
    %v1354 = vld [vmem:[%s9 + $0x328] sm:$0xff]
    %v1355 = vld [vmem:[%s9 + $0x330] sm:$0xff]
    %v1356 = vld [vmem:[%s9 + $0x338] sm:$0xff]
    %v1357 = vld [vmem:[%s9 + $0x340] sm:$0xff]
    %v1358 = vld [vmem:[%s9 + $0x348] sm:$0xff]
    %v1359 = vld [vmem:[%s9 + $0x350] sm:$0xff]
    %v1360 = vld [vmem:[%s9 + $0x358] sm:$0xff]
    %v1361 = vld [vmem:[%s9 + $0x360] sm:$0xff]
    %v1362 = vld [vmem:[%s9 + $0x368] sm:$0xff]
    %v1363 = vld [vmem:[%s9 + $0x370] sm:$0xff]
    %v1364 = vld [vmem:[%s9 + $0x378] sm:$0xff]
    %v1365 = vld [vmem:[%s9 + $0x380] sm:$0xff]
    %v1366 = vld [vmem:[%s9 + $0x388] sm:$0xff]
    %v1367 = vld [vmem:[%s9 + $0x390] sm:$0xff]
    %v1368 = vld [vmem:[%s9 + $0x398] sm:$0xff]
    %v1369 = vld [vmem:[%s9 + $0x3a0] sm:$0xff]
    %v1370 = vld [vmem:[%s9 + $0x3a8] sm:$0xff]
    %v1371 = vld [vmem:[%s9 + $0x3b0] sm:$0xff]
    %v1372 = vld [vmem:[%s9 + $0x3b8] sm:$0xff]
    %v1373 = vld [vmem:[%s9 + $0x3c0] sm:$0xff]
    %v1374 = vld [vmem:[%s9 + $0x3c8] sm:$0xff]
    %v1375 = vld [vmem:[%s9 + $0x3d0] sm:$0xff]
    %v1376 = vld [vmem:[%s9 + $0x3d8] sm:$0xff]
    %v1377 = vld [vmem:[%s9 + $0x3e0] sm:$0xff]
    %v1378 = vld [vmem:[%s9 + $0x3e8] sm:$0xff]
    %v1379 = vld [vmem:[%s9 + $0x3f0] sm:$0xff]
    %v1380 = vld [vmem:[%s9 + $0x3f8] sm:$0xff]
    %v1381 = vld [vmem:[%s9 + $0x400] sm:$0xff]
    %v1382 = vld [vmem:[%s9 + $0x408] sm:$0xff]
    %v1383 = vld [vmem:[%s9 + $0x410] sm:$0xff]
    %v1384 = vld [vmem:[%s9 + $0x418] sm:$0xff]
    %v1385 = vld [vmem:[%s9 + $0x420] sm:$0xff]
    %v1386 = vld [vmem:[%s9 + $0x428] sm:$0xff]
    %v1387 = vld [vmem:[%s9 + $0x430] sm:$0xff]
    %v1388 = vld [vmem:[%s9 + $0x438] sm:$0xff]
    %v1389 = vld [vmem:[%s9 + $0x440] sm:$0xff]
    %v1390 = vld [vmem:[%s9 + $0x448] sm:$0xff]
    %v1391 = vld [vmem:[%s9 + $0x450] sm:$0xff]
    %v1392 = vld [vmem:[%s9 + $0x458] sm:$0xff]
    %v1393 = vld [vmem:[%s9 + $0x460] sm:$0xff]
    %v1394 = vld [vmem:[%s9 + $0x468] sm:$0xff]
    %v1395 = vld [vmem:[%s9 + $0x470] sm:$0xff]
    %v1396 = vld [vmem:[%s9 + $0x478] sm:$0xff]
    %v1397 = vld [vmem:[%s9 + $0x480] sm:$0xff]
    %v1398 = vld [vmem:[%s9 + $0x488] sm:$0xff]
    %v1399 = vld [vmem:[%s9 + $0x490] sm:$0xff]
    %v1400 = vld [vmem:[%s9 + $0x498] sm:$0xff]
    %v1401 = vld [vmem:[%s9 + $0x4a0] sm:$0xff]
    %v1402 = vld [vmem:[%s9 + $0x4a8] sm:$0xff]
    %v1403 = vld [vmem:[%s9 + $0x4b0] sm:$0xff]
    %v1404 = vld [vmem:[%s9 + $0x4b8] sm:$0xff]
    %v1405 = vld [vmem:[%s9 + $0x4c0] sm:$0xff]
    %v1406 = vld [vmem:[%s9 + $0x4c8] sm:$0xff]
    %v1407 = vld [vmem:[%s9 + $0x4d0] sm:$0xff]
    %v1408 = vld [vmem:[%s9 + $0x4d8] sm:$0xff]
    %v1409 = vld [vmem:[%s9 + $0x4e0] sm:$0xff]
    %v1410 = vld [vmem:[%s9 + $0x4e8] sm:$0xff]
    %v1411 = vld [vmem:[%s9 + $0x4f0] sm:$0xff]
    %v1412 = vld [vmem:[%s9 + $0x4f8] sm:$0xff]
    %v1413 = vld [vmem:[%s9 + $0x500] sm:$0xff]
    %v1414 = vld [vmem:[%s9 + $0x508] sm:$0xff]
    %v1415 = vld [vmem:[%s9 + $0x510] sm:$0xff]
    %v1416 = vld [vmem:[%s9 + $0x518] sm:$0xff]
    %v1417 = vld [vmem:[%s9 + $0x520] sm:$0xff]
    %v1418 = vld [vmem:[%s9 + $0x528] sm:$0xff]
    %v1419 = vld [vmem:[%s9 + $0x530] sm:$0xff]
    %v1420 = vld [vmem:[%s9 + $0x538] sm:$0xff]
    %v1421 = vld [vmem:[%s10] sm:$0x3]
    %v1422 = vld [vmem:[%s11] sm:$0xff]
    %v1423 = vld [vmem:[%s11 + $0x8] sm:$0xff]
    %v1424 = vld [vmem:[%s11 + $0x10] sm:$0xff]
    %v1425 = vld [vmem:[%s11 + $0x18] sm:$0xff]
    %v1426 = vld [vmem:[%s11 + $0x20] sm:$0xff]
    %v1427 = vld [vmem:[%s11 + $0x28] sm:$0xff]
    %v1428 = vld [vmem:[%s11 + $0x30] sm:$0xff]
    %v1429 = vld [vmem:[%s11 + $0x38] sm:$0xff]
    %v1430 = vld [vmem:[%s11 + $0x40] sm:$0xff]
    %v1431 = vld [vmem:[%s11 + $0x48] sm:$0xff]
    %v1432 = vld [vmem:[%s11 + $0x50] sm:$0xff]
    %v1433 = vld [vmem:[%s11 + $0x58] sm:$0xff]
    %v1434 = vld [vmem:[%s11 + $0x60] sm:$0xff]
    %v1435 = vld [vmem:[%s11 + $0x68] sm:$0xff]
    %v1436 = vld [vmem:[%s11 + $0x70] sm:$0xff]
    %v1437 = vld [vmem:[%s11 + $0x78] sm:$0xff]
    %v1438 = vld [vmem:[%s11 + $0x80] sm:$0xff]
    %v1439 = vld [vmem:[%s11 + $0x88] sm:$0xff]
    %v1440 = vld [vmem:[%s11 + $0x90] sm:$0xff]
    %v1441 = vld [vmem:[%s11 + $0x98] sm:$0xff]
    %v1442 = vld [vmem:[%s11 + $0xa0] sm:$0xff]
    %v1443 = vld [vmem:[%s11 + $0xa8] sm:$0xff]
    %v1444 = vld [vmem:[%s11 + $0xb0] sm:$0xff]
    %v1445 = vld [vmem:[%s11 + $0xb8] sm:$0xff]
    %v1446 = vld [vmem:[%s11 + $0xc0] sm:$0xff]
    %v1447 = vld [vmem:[%s11 + $0xc8] sm:$0xff]
    %v1448 = vld [vmem:[%s11 + $0xd0] sm:$0xff]
    %v1449 = vld [vmem:[%s11 + $0xd8] sm:$0xff]
    %v1450 = vld [vmem:[%s12] sm:$0xff]
    %v1451 = vld [vmem:[%s12 + $0x8] sm:$0xff]
    %v1452 = vld [vmem:[%s12 + $0x10] sm:$0xff]
    %v1453 = vld [vmem:[%s12 + $0x18] sm:$0xff]
    %v1454 = vld [vmem:[%s12 + $0x20] sm:$0xff]
    %v1455 = vld [vmem:[%s12 + $0x28] sm:$0xff]
    %v1456 = vld [vmem:[%s12 + $0x30] sm:$0xff]
    %v1457 = vld [vmem:[%s12 + $0x38] sm:$0xff]
    %v1458 = vld [vmem:[%s13] sm:$0x1]
    %v1459 = vld [vmem:[%s14] sm:$0x3]
    %v1461 = vsel %vm264, %v1247, 0
    %v1464 = vsel %vm264, %v1248, 0
    %v1467 = vsel %vm277, %v1245, 0
    %v1470 = vsel %vm277, %v1246, 0
    %1472 = vmatprep.subr.mxu0 %v1240
    %1473 = vmatpush1.msra.mxu0 %v1239
    %1474 = vmatprep.subr.mxu0 %v1242
    %1475 = vmatpush1.msra.mxu0 %v1241
    %1476 = vmatprep.subr.mxu0 %v1244
    %1477 = vmatpush1.msra.mxu0 %v1243
    %1478 = vmatprep.subr.mxu0 %v1470
    %1479 = vmatpush1.msra.mxu0 %v1467
    %1480 = vmatprep.subr.mxu0 0.0
    %1481 = vmatpush1.msra.mxu0 0.0
    %1482 = vmatprep.subr.mxu0 0.0
    %1483 = vmatpush1.msra.mxu0 0.0
    %1484 = vmatprep.subr.mxu0 0.0
    %1485 = vmatpush1.msra.mxu0 0.0
    %1486 = vmatprep.subr.mxu0 0.0
    %1487 = vmatpush1.msra.mxu0 0.0
    %1488 = vmatprep.subr.mxu0 0.0
    %1489 = vmatpush1.msra.mxu0 0.0
    %1490 = vmatprep.subr.mxu0 0.0
    %1491 = vmatpush1.msra.mxu0 0.0
    %1492 = vmatprep.subr.mxu0 0.0
    %1493 = vmatpush1.msra.mxu0 0.0
    %1494 = vmatprep.subr.mxu0 0.0
    %1495 = vmatpush1.msra.mxu0 0.0
    %1496 = vmatprep.subr.mxu0 0.0
    %1497 = vmatpush1.msra.mxu0 0.0
    %1498 = vmatprep.subr.mxu0 0.0
    %1499 = vmatpush1.msra.mxu0 0.0
    %1500 = vmatprep.subr.mxu0 0.0
    %1501 = vmatpush1.msra.mxu0 0.0
    %1502 = vmatprep.subr.mxu0 0.0
    %1503 = vmatpush1.msra.mxu0 0.0
    %1504 = vmatprep.subr.mxu0 0.0
    %1505 = vmatpush1.msra.mxu0 0.0
    %1506 = vmatprep.subr.mxu0 0.0
    %1507 = vmatpush1.msra.mxu0 0.0
    %1508 = vmatprep.subr.mxu0 0.0
    %1509 = vmatpush1.msra.mxu0 0.0
    %1510 = vmatprep.subr.mxu0 0.0
    %1511 = vmatpush1.msra.mxu0 0.0
    %1512 = vmatprep.subr.mxu0 0.0
    %1513 = vmatpush1.msra.mxu0 0.0
    %1514 = vmatprep.subr.mxu0 0.0
    %1515 = vmatpush1.msra.mxu0 0.0
    %1516 = vmatprep.subr.mxu0 0.0
    %1517 = vmatpush1.msra.mxu0 0.0
    %1518 = vmatprep.subr.mxu0 0.0
    %1519 = vmatpush1.msra.mxu0 0.0
    %1520 = vmatprep.subr.mxu0 0.0
    %1521 = vmatpush1.msra.mxu0 0.0
    %1522 = vmatprep.subr.mxu0 0.0
    %1523 = vmatpush1.msra.mxu0 0.0
    %1524 = vmatprep.subr.mxu0 0.0
    %1525 = vmatpush1.msra.mxu0 0.0
    %1526 = vmatprep.subr.mxu0 0.0
    %1527 = vmatpush1.msra.mxu0 0.0
    %1528 = vmatprep.subr.mxu0 0.0
    %1529 = vmatpush1.msra.mxu0 0.0
    %1530 = vmatprep.subr.mxu0 0.0
    %1531 = vmatpush1.msra.mxu0 0.0
    %1532 = vmatprep.subr.mxu0 0.0
    %1533 = vmatpush1.msra.mxu0 0.0
    %1534 = vmatprep.subr.mxu0 0.0
    %1535 = vmatpush1.msra.mxu0 0.0
    %1536 = vmatprep.mubr.f32.mxu0 0.0
    %1537 = vmatmul.mubr.f32.gmra.mrb[0].mxu0 %v1461
    %v1538 = vpop.f32.mrb[0].mxu0
    %v1539 = vadd.f32 0.0, %v1538
    %v1540 = vpop.f32.mrb[0].mxu0
    %v1541 = vadd.f32 0.0, %v1540
    %1542 = vmatprep.mubr.f32.mxu0 0.0
    %1543 = vmatmul.mubr.f32.gmra.mrb[0].mxu0 %v1464
    %v1544 = vpop.f32.mrb[0].mxu0
    %v1545 = vadd.f32 0.0, %v1544
    %v1546 = vpop.f32.mrb[0].mxu0
    %v1547 = vadd.f32 0.0, %v1546
    %1548 = vdwg.mxu0
    %v1550 = vsel %vm850, %v1541, 0
    %v1553 = vsel %vm850, %v1547, 0
    %1555 = vmatprep.subr.mxu0 %v1254
    %1556 = vmatpush1.msra.mxu0 %v1253
    %1557 = vmatprep.subr.mxu0 %v1256
    %1558 = vmatpush1.msra.mxu0 %v1255
    %1559 = vmatprep.subr.mxu0 %v1258
    %1560 = vmatpush1.msra.mxu0 %v1257
    %1561 = vmatprep.subr.mxu0 %v1260
    %1562 = vmatpush1.msra.mxu0 %v1259
    %1563 = vmatprep.subr.mxu0 %v1262
    %1564 = vmatpush1.msra.mxu0 %v1261
    %1565 = vmatprep.subr.mxu0 %v1264
    %1566 = vmatpush1.msra.mxu0 %v1263
    %1567 = vmatprep.subr.mxu0 %v1266
    %1568 = vmatpush1.msra.mxu0 %v1265
    %1569 = vmatprep.subr.mxu0 %v1268
    %1570 = vmatpush1.msra.mxu0 %v1267
    %1571 = vmatprep.subr.mxu0 %v1270
    %1572 = vmatpush1.msra.mxu0 %v1269
    %1573 = vmatprep.subr.mxu0 %v1272
    %1574 = vmatpush1.msra.mxu0 %v1271
    %1575 = vmatprep.subr.mxu0 %v1274
    %1576 = vmatpush1.msra.mxu0 %v1273
    %1577 = vmatprep.subr.mxu0 %v1276
    %1578 = vmatpush1.msra.mxu0 %v1275
    %1579 = vmatprep.subr.mxu0 %v1278
    %1580 = vmatpush1.msra.mxu0 %v1277
    %1581 = vmatprep.subr.mxu0 %v1280
    %1582 = vmatpush1.msra.mxu0 %v1279
    %1583 = vmatprep.subr.mxu0 %v1282
    %1584 = vmatpush1.msra.mxu0 %v1281
    %1585 = vmatprep.subr.mxu0 %v1284
    %1586 = vmatpush1.msra.mxu0 %v1283
    %1587 = vmatprep.subr.mxu0 %v1286
    %1588 = vmatpush1.msra.mxu0 %v1285
    %1589 = vmatprep.subr.mxu0 %v1288
    %1590 = vmatpush1.msra.mxu0 %v1287
    %1591 = vmatprep.subr.mxu0 %v1290
    %1592 = vmatpush1.msra.mxu0 %v1289
    %1593 = vmatprep.subr.mxu0 %v1292
    %1594 = vmatpush1.msra.mxu0 %v1291
    %1595 = vmatprep.subr.mxu0 %v1294
    %1596 = vmatpush1.msra.mxu0 %v1293
    %1597 = vmatprep.subr.mxu0 %v1296
    %1598 = vmatpush1.msra.mxu0 %v1295
    %1599 = vmatprep.subr.mxu0 %v1298
    %1600 = vmatpush1.msra.mxu0 %v1297
    %1601 = vmatprep.subr.mxu0 %v1300
    %1602 = vmatpush1.msra.mxu0 %v1299
    %1603 = vmatprep.subr.mxu0 %v1302
    %1604 = vmatpush1.msra.mxu0 %v1301
    %1605 = vmatprep.subr.mxu0 %v1304
    %1606 = vmatpush1.msra.mxu0 %v1303
    %1607 = vmatprep.subr.mxu0 %v1306
    %1608 = vmatpush1.msra.mxu0 %v1305
    %1609 = vmatprep.subr.mxu0 %v1308
    %1610 = vmatpush1.msra.mxu0 %v1307
    %1611 = vmatprep.subr.mxu0 0.0
    %1612 = vmatpush1.msra.mxu0 0.0
    %1613 = vmatprep.subr.mxu0 0.0
    %1614 = vmatpush1.msra.mxu0 0.0
    %1615 = vmatprep.subr.mxu0 0.0
    %1616 = vmatpush1.msra.mxu0 0.0
    %1617 = vmatprep.subr.mxu0 0.0
    %1618 = vmatpush1.msra.mxu0 0.0
    %1619 = vmatprep.mubr.f32.mxu0 %v1550
    %1620 = vmatmul.mubr.f32.gmra.mrb[0].mxu0 %v1539
    %v1621 = vpop.f32.mrb[0].mxu0
    %v1622 = vadd.f32 0.0, %v1621
    %v1623 = vpop.f32.mrb[0].mxu0
    %v1624 = vadd.f32 0.0, %v1623
    %1625 = vmatprep.mubr.f32.mxu0 %v1553
    %1626 = vmatmul.mubr.f32.gmra.mrb[0].mxu0 %v1545
    %v1627 = vpop.f32.mrb[0].mxu0
    %v1628 = vadd.f32 0.0, %v1627
    %v1629 = vpop.f32.mrb[0].mxu0
    %v1630 = vadd.f32 0.0, %v1629
    %1631 = vdwg.mxu0
    %v1633 = vlaneseq
    %v1634 = vshrl.u32 %v1633, 7
    %v1635 = vsub.s32 0, %v1634
    %v1636 = vrot.slane %v1421, %v1635
    %v1637 = vlaneseq
    %v1638 = vshrl.u32 %v1637, 7
    %v1639 = vsub.s32 1, %v1638
    %v1640 = vrot.slane %v1421, %v1639
    %v1643 = vadd.f32 %v1636, %v1622
    %v1644 = vadd.f32 %v1640, %v1624
    %v1645 = vadd.f32 %v1636, %v1628
    %v1646 = vadd.f32 %v1640, %v1630
    %v1648 = vsel %vm264, %v1249, 0
    %v1651 = vsel %vm264, %v1250, 0
    %1653 = vmatprep.subr.mxu0 %v1240
    %1654 = vmatpush1.msra.mxu0 %v1239
    %1655 = vmatprep.subr.mxu0 %v1242
    %1656 = vmatpush1.msra.mxu0 %v1241
    %1657 = vmatprep.subr.mxu0 %v1244
    %1658 = vmatpush1.msra.mxu0 %v1243
    %1659 = vmatprep.subr.mxu0 %v1470
    %1660 = vmatpush1.msra.mxu0 %v1467
    %1661 = vmatprep.subr.mxu0 0.0
    %1662 = vmatpush1.msra.mxu0 0.0
    %1663 = vmatprep.subr.mxu0 0.0
    %1664 = vmatpush1.msra.mxu0 0.0
    %1665 = vmatprep.subr.mxu0 0.0
    %1666 = vmatpush1.msra.mxu0 0.0
    %1667 = vmatprep.subr.mxu0 0.0
    %1668 = vmatpush1.msra.mxu0 0.0
    %1669 = vmatprep.subr.mxu0 0.0
    %1670 = vmatpush1.msra.mxu0 0.0
    %1671 = vmatprep.subr.mxu0 0.0
    %1672 = vmatpush1.msra.mxu0 0.0
    %1673 = vmatprep.subr.mxu0 0.0
    %1674 = vmatpush1.msra.mxu0 0.0
    %1675 = vmatprep.subr.mxu0 0.0
    %1676 = vmatpush1.msra.mxu0 0.0
    %1677 = vmatprep.subr.mxu0 0.0
    %1678 = vmatpush1.msra.mxu0 0.0
    %1679 = vmatprep.subr.mxu0 0.0
    %1680 = vmatpush1.msra.mxu0 0.0
    %1681 = vmatprep.subr.mxu0 0.0
    %1682 = vmatpush1.msra.mxu0 0.0
    %1683 = vmatprep.subr.mxu0 0.0
    %1684 = vmatpush1.msra.mxu0 0.0
    %1685 = vmatprep.subr.mxu0 0.0
    %1686 = vmatpush1.msra.mxu0 0.0
    %1687 = vmatprep.subr.mxu0 0.0
    %1688 = vmatpush1.msra.mxu0 0.0
    %1689 = vmatprep.subr.mxu0 0.0
    %1690 = vmatpush1.msra.mxu0 0.0
    %1691 = vmatprep.subr.mxu0 0.0
    %1692 = vmatpush1.msra.mxu0 0.0
    %1693 = vmatprep.subr.mxu0 0.0
    %1694 = vmatpush1.msra.mxu0 0.0
    %1695 = vmatprep.subr.mxu0 0.0
    %1696 = vmatpush1.msra.mxu0 0.0
    %1697 = vmatprep.subr.mxu0 0.0
    %1698 = vmatpush1.msra.mxu0 0.0
    %1699 = vmatprep.subr.mxu0 0.0
    %1700 = vmatpush1.msra.mxu0 0.0
    %1701 = vmatprep.subr.mxu0 0.0
    %1702 = vmatpush1.msra.mxu0 0.0
    %1703 = vmatprep.subr.mxu0 0.0
    %1704 = vmatpush1.msra.mxu0 0.0
    %1705 = vmatprep.subr.mxu0 0.0
    %1706 = vmatpush1.msra.mxu0 0.0
    %1707 = vmatprep.subr.mxu0 0.0
    %1708 = vmatpush1.msra.mxu0 0.0
    %1709 = vmatprep.subr.mxu0 0.0
    %1710 = vmatpush1.msra.mxu0 0.0
    %1711 = vmatprep.subr.mxu0 0.0
    %1712 = vmatpush1.msra.mxu0 0.0
    %1713 = vmatprep.subr.mxu0 0.0
    %1714 = vmatpush1.msra.mxu0 0.0
    %1715 = vmatprep.subr.mxu0 0.0
    %1716 = vmatpush1.msra.mxu0 0.0
    %1717 = vmatprep.mubr.f32.mxu0 0.0
    %1718 = vmatmul.mubr.f32.gmra.mrb[0].mxu0 %v1648
    %v1719 = vpop.f32.mrb[0].mxu0
    %v1720 = vadd.f32 0.0, %v1719
    %v1721 = vpop.f32.mrb[0].mxu0
    %v1722 = vadd.f32 0.0, %v1721
    %1723 = vmatprep.mubr.f32.mxu0 0.0
    %1724 = vmatmul.mubr.f32.gmra.mrb[0].mxu0 %v1651
    %v1725 = vpop.f32.mrb[0].mxu0
    %v1726 = vadd.f32 0.0, %v1725
    %v1727 = vpop.f32.mrb[0].mxu0
    %v1728 = vadd.f32 0.0, %v1727
    %1729 = vdwg.mxu0
    %v1731 = vsel %vm850, %v1722, 0
    %v1734 = vsel %vm850, %v1728, 0
    %1736 = vmatprep.subr.mxu0 %v1310
    %1737 = vmatpush1.msra.mxu0 %v1309
    %1738 = vmatprep.subr.mxu0 %v1312
    %1739 = vmatpush1.msra.mxu0 %v1311
    %1740 = vmatprep.subr.mxu0 %v1314
    %1741 = vmatpush1.msra.mxu0 %v1313
    %1742 = vmatprep.subr.mxu0 %v1316
    %1743 = vmatpush1.msra.mxu0 %v1315
    %1744 = vmatprep.subr.mxu0 %v1318
    %1745 = vmatpush1.msra.mxu0 %v1317
    %1746 = vmatprep.subr.mxu0 %v1320
    %1747 = vmatpush1.msra.mxu0 %v1319
    %1748 = vmatprep.subr.mxu0 %v1322
    %1749 = vmatpush1.msra.mxu0 %v1321
    %1750 = vmatprep.subr.mxu0 %v1324
    %1751 = vmatpush1.msra.mxu0 %v1323
    %1752 = vmatprep.subr.mxu0 %v1326
    %1753 = vmatpush1.msra.mxu0 %v1325
    %1754 = vmatprep.subr.mxu0 %v1328
    %1755 = vmatpush1.msra.mxu0 %v1327
    %1756 = vmatprep.subr.mxu0 %v1330
    %1757 = vmatpush1.msra.mxu0 %v1329
    %1758 = vmatprep.subr.mxu0 %v1332
    %1759 = vmatpush1.msra.mxu0 %v1331
    %1760 = vmatprep.subr.mxu0 %v1334
    %1761 = vmatpush1.msra.mxu0 %v1333
    %1762 = vmatprep.subr.mxu0 %v1336
    %1763 = vmatpush1.msra.mxu0 %v1335
    %1764 = vmatprep.subr.mxu0 %v1338
    %1765 = vmatpush1.msra.mxu0 %v1337
    %1766 = vmatprep.subr.mxu0 %v1340
    %1767 = vmatpush1.msra.mxu0 %v1339
    %1768 = vmatprep.subr.mxu0 %v1342
    %1769 = vmatpush1.msra.mxu0 %v1341
    %1770 = vmatprep.subr.mxu0 %v1344
    %1771 = vmatpush1.msra.mxu0 %v1343
    %1772 = vmatprep.subr.mxu0 %v1346
    %1773 = vmatpush1.msra.mxu0 %v1345
    %1774 = vmatprep.subr.mxu0 %v1348
    %1775 = vmatpush1.msra.mxu0 %v1347
    %1776 = vmatprep.subr.mxu0 %v1350
    %1777 = vmatpush1.msra.mxu0 %v1349
    %1778 = vmatprep.subr.mxu0 %v1352
    %1779 = vmatpush1.msra.mxu0 %v1351
    %1780 = vmatprep.subr.mxu0 %v1354
    %1781 = vmatpush1.msra.mxu0 %v1353
    %1782 = vmatprep.subr.mxu0 %v1356
    %1783 = vmatpush1.msra.mxu0 %v1355
    %1784 = vmatprep.subr.mxu0 %v1358
    %1785 = vmatpush1.msra.mxu0 %v1357
    %1786 = vmatprep.subr.mxu0 %v1360
    %1787 = vmatpush1.msra.mxu0 %v1359
    %1788 = vmatprep.subr.mxu0 %v1362
    %1789 = vmatpush1.msra.mxu0 %v1361
    %1790 = vmatprep.subr.mxu0 %v1364
    %1791 = vmatpush1.msra.mxu0 %v1363
    %1792 = vmatprep.subr.mxu0 0.0
    %1793 = vmatpush1.msra.mxu0 0.0
    %1794 = vmatprep.subr.mxu0 0.0
    %1795 = vmatpush1.msra.mxu0 0.0
    %1796 = vmatprep.subr.mxu0 0.0
    %1797 = vmatpush1.msra.mxu0 0.0
    %1798 = vmatprep.subr.mxu0 0.0
    %1799 = vmatpush1.msra.mxu0 0.0
    %1800 = vmatprep.mubr.f32.mxu0 %v1731
    %1801 = vmatmul.mubr.f32.gmra.mrb[0].mxu0 %v1720
    %v1802 = vpop.f32.mrb[0].mxu0
    %v1803 = vadd.f32 0.0, %v1802
    %v1804 = vpop.f32.mrb[0].mxu0
    %v1805 = vadd.f32 0.0, %v1804
    %1806 = vmatprep.mubr.f32.mxu0 %v1734
    %1807 = vmatmul.mubr.f32.gmra.mrb[0].mxu0 %v1726
    %v1808 = vpop.f32.mrb[0].mxu0
    %v1809 = vadd.f32 0.0, %v1808
    %v1810 = vpop.f32.mrb[0].mxu0
    %v1811 = vadd.f32 0.0, %v1810
    %1812 = vdwg.mxu0
    %v1813 = vadd.f32 %v1643, %v1803
    %v1814 = vadd.f32 %v1644, %v1805
    %v1815 = vadd.f32 %v1645, %v1809
    %v1816 = vadd.f32 %v1646, %v1811
    %v1818 = vsel %vm264, %v1251, 0
    %v1821 = vsel %vm264, %v1252, 0
    %1823 = vmatprep.subr.mxu0 %v1240
    %1824 = vmatpush1.msra.mxu0 %v1239
    %1825 = vmatprep.subr.mxu0 %v1242
    %1826 = vmatpush1.msra.mxu0 %v1241
    %1827 = vmatprep.subr.mxu0 %v1244
    %1828 = vmatpush1.msra.mxu0 %v1243
    %1829 = vmatprep.subr.mxu0 %v1470
    %1830 = vmatpush1.msra.mxu0 %v1467
    %1831 = vmatprep.subr.mxu0 0.0
    %1832 = vmatpush1.msra.mxu0 0.0
    %1833 = vmatprep.subr.mxu0 0.0
    %1834 = vmatpush1.msra.mxu0 0.0
    %1835 = vmatprep.subr.mxu0 0.0
    %1836 = vmatpush1.msra.mxu0 0.0
    %1837 = vmatprep.subr.mxu0 0.0
    %1838 = vmatpush1.msra.mxu0 0.0
    %1839 = vmatprep.subr.mxu0 0.0
    %1840 = vmatpush1.msra.mxu0 0.0
    %1841 = vmatprep.subr.mxu0 0.0
    %1842 = vmatpush1.msra.mxu0 0.0
    %1843 = vmatprep.subr.mxu0 0.0
    %1844 = vmatpush1.msra.mxu0 0.0
    %1845 = vmatprep.subr.mxu0 0.0
    %1846 = vmatpush1.msra.mxu0 0.0
    %1847 = vmatprep.subr.mxu0 0.0
    %1848 = vmatpush1.msra.mxu0 0.0
    %1849 = vmatprep.subr.mxu0 0.0
    %1850 = vmatpush1.msra.mxu0 0.0
    %1851 = vmatprep.subr.mxu0 0.0
    %1852 = vmatpush1.msra.mxu0 0.0
    %1853 = vmatprep.subr.mxu0 0.0
    %1854 = vmatpush1.msra.mxu0 0.0
    %1855 = vmatprep.subr.mxu0 0.0
    %1856 = vmatpush1.msra.mxu0 0.0
    %1857 = vmatprep.subr.mxu0 0.0
    %1858 = vmatpush1.msra.mxu0 0.0
    %1859 = vmatprep.subr.mxu0 0.0
    %1860 = vmatpush1.msra.mxu0 0.0
    %1861 = vmatprep.subr.mxu0 0.0
    %1862 = vmatpush1.msra.mxu0 0.0
    %1863 = vmatprep.subr.mxu0 0.0
    %1864 = vmatpush1.msra.mxu0 0.0
    %1865 = vmatprep.subr.mxu0 0.0
    %1866 = vmatpush1.msra.mxu0 0.0
    %1867 = vmatprep.subr.mxu0 0.0
    %1868 = vmatpush1.msra.mxu0 0.0
    %1869 = vmatprep.subr.mxu0 0.0
    %1870 = vmatpush1.msra.mxu0 0.0
    %1871 = vmatprep.subr.mxu0 0.0
    %1872 = vmatpush1.msra.mxu0 0.0
    %1873 = vmatprep.subr.mxu0 0.0
    %1874 = vmatpush1.msra.mxu0 0.0
    %1875 = vmatprep.subr.mxu0 0.0
    %1876 = vmatpush1.msra.mxu0 0.0
    %1877 = vmatprep.subr.mxu0 0.0
    %1878 = vmatpush1.msra.mxu0 0.0
    %1879 = vmatprep.subr.mxu0 0.0
    %1880 = vmatpush1.msra.mxu0 0.0
    %1881 = vmatprep.subr.mxu0 0.0
    %1882 = vmatpush1.msra.mxu0 0.0
    %1883 = vmatprep.subr.mxu0 0.0
    %1884 = vmatpush1.msra.mxu0 0.0
    %1885 = vmatprep.subr.mxu0 0.0
    %1886 = vmatpush1.msra.mxu0 0.0
    %1887 = vmatprep.mubr.f32.mxu0 0.0
    %1888 = vmatmul.mubr.f32.gmra.mrb[0].mxu0 %v1818
    %v1889 = vpop.f32.mrb[0].mxu0
    %v1890 = vadd.f32 0.0, %v1889
    %v1891 = vpop.f32.mrb[0].mxu0
    %v1892 = vadd.f32 0.0, %v1891
    %1893 = vmatprep.mubr.f32.mxu0 0.0
    %1894 = vmatmul.mubr.f32.gmra.mrb[0].mxu0 %v1821
    %v1895 = vpop.f32.mrb[0].mxu0
    %v1896 = vadd.f32 0.0, %v1895
    %v1897 = vpop.f32.mrb[0].mxu0
    %v1898 = vadd.f32 0.0, %v1897
    %1899 = vdwg.mxu0
    %v1901 = vsel %vm850, %v1892, 0
    %v1904 = vsel %vm850, %v1898, 0
    %1906 = vmatprep.subr.mxu0 %v1366
    %1907 = vmatpush1.msra.mxu0 %v1365
    %1908 = vmatprep.subr.mxu0 %v1368
    %1909 = vmatpush1.msra.mxu0 %v1367
    %1910 = vmatprep.subr.mxu0 %v1370
    %1911 = vmatpush1.msra.mxu0 %v1369
    %1912 = vmatprep.subr.mxu0 %v1372
    %1913 = vmatpush1.msra.mxu0 %v1371
    %1914 = vmatprep.subr.mxu0 %v1374
    %1915 = vmatpush1.msra.mxu0 %v1373
    %1916 = vmatprep.subr.mxu0 %v1376
    %1917 = vmatpush1.msra.mxu0 %v1375
    %1918 = vmatprep.subr.mxu0 %v1378
    %1919 = vmatpush1.msra.mxu0 %v1377
    %1920 = vmatprep.subr.mxu0 %v1380
    %1921 = vmatpush1.msra.mxu0 %v1379
    %1922 = vmatprep.subr.mxu0 %v1382
    %1923 = vmatpush1.msra.mxu0 %v1381
    %1924 = vmatprep.subr.mxu0 %v1384
    %1925 = vmatpush1.msra.mxu0 %v1383
    %1926 = vmatprep.subr.mxu0 %v1386
    %1927 = vmatpush1.msra.mxu0 %v1385
    %1928 = vmatprep.subr.mxu0 %v1388
    %1929 = vmatpush1.msra.mxu0 %v1387
    %1930 = vmatprep.subr.mxu0 %v1390
    %1931 = vmatpush1.msra.mxu0 %v1389
    %1932 = vmatprep.subr.mxu0 %v1392
    %1933 = vmatpush1.msra.mxu0 %v1391
    %1934 = vmatprep.subr.mxu0 %v1394
    %1935 = vmatpush1.msra.mxu0 %v1393
    %1936 = vmatprep.subr.mxu0 %v1396
    %1937 = vmatpush1.msra.mxu0 %v1395
    %1938 = vmatprep.subr.mxu0 %v1398
    %1939 = vmatpush1.msra.mxu0 %v1397
    %1940 = vmatprep.subr.mxu0 %v1400
    %1941 = vmatpush1.msra.mxu0 %v1399
    %1942 = vmatprep.subr.mxu0 %v1402
    %1943 = vmatpush1.msra.mxu0 %v1401
    %1944 = vmatprep.subr.mxu0 %v1404
    %1945 = vmatpush1.msra.mxu0 %v1403
    %1946 = vmatprep.subr.mxu0 %v1406
    %1947 = vmatpush1.msra.mxu0 %v1405
    %1948 = vmatprep.subr.mxu0 %v1408
    %1949 = vmatpush1.msra.mxu0 %v1407
    %1950 = vmatprep.subr.mxu0 %v1410
    %1951 = vmatpush1.msra.mxu0 %v1409
    %1952 = vmatprep.subr.mxu0 %v1412
    %1953 = vmatpush1.msra.mxu0 %v1411
    %1954 = vmatprep.subr.mxu0 %v1414
    %1955 = vmatpush1.msra.mxu0 %v1413
    %1956 = vmatprep.subr.mxu0 %v1416
    %1957 = vmatpush1.msra.mxu0 %v1415
    %1958 = vmatprep.subr.mxu0 %v1418
    %1959 = vmatpush1.msra.mxu0 %v1417
    %1960 = vmatprep.subr.mxu0 %v1420
    %1961 = vmatpush1.msra.mxu0 %v1419
    %1962 = vmatprep.subr.mxu0 0.0
    %1963 = vmatpush1.msra.mxu0 0.0
    %1964 = vmatprep.subr.mxu0 0.0
    %1965 = vmatpush1.msra.mxu0 0.0
    %1966 = vmatprep.subr.mxu0 0.0
    %1967 = vmatpush1.msra.mxu0 0.0
    %1968 = vmatprep.subr.mxu0 0.0
    %1969 = vmatpush1.msra.mxu0 0.0
    %1970 = vmatprep.mubr.f32.mxu0 %v1901
    %1971 = vmatmul.mubr.f32.gmra.mrb[0].mxu0 %v1890
    %v1972 = vpop.f32.mrb[0].mxu0
    %v1973 = vadd.f32 0.0, %v1972
    %v1974 = vpop.f32.mrb[0].mxu0
    %v1975 = vadd.f32 0.0, %v1974
    %1976 = vmatprep.mubr.f32.mxu0 %v1904
    %1977 = vmatmul.mubr.f32.gmra.mrb[0].mxu0 %v1896
    %v1978 = vpop.f32.mrb[0].mxu0
    %v1979 = vadd.f32 0.0, %v1978
    %v1980 = vpop.f32.mrb[0].mxu0
    %v1981 = vadd.f32 0.0, %v1980
    %1982 = vdwg.mxu0
    %v1983 = vadd.f32 %v1813, %v1973
    %v1984 = vadd.f32 %v1814, %v1975
    %v1985 = vadd.f32 %v1815, %v1979
    %v1986 = vadd.f32 %v1816, %v1981
    %vm1987 = vcmp.ge.f32.partialorder %v1983, 0.0
    %vm1988 = vcmp.ge.f32.partialorder %v1984, 0.0
    %vm1989 = vcmp.ge.f32.partialorder %v1985, 0.0
    %vm1990 = vcmp.ge.f32.partialorder %v1986, 0.0
    %v1991 = vmul.f32 %v1983, 0.01
    %v1992 = vmul.f32 %v1984, 0.01
    %v1993 = vmul.f32 %v1985, 0.01
    %v1994 = vmul.f32 %v1986, 0.01
    %v1995 = vsel %vm1987, %v1983, %v1991
    %v1996 = vsel %vm1988, %v1984, %v1992
    %v1997 = vsel %vm1989, %v1985, %v1993
    %v1998 = vsel %vm1990, %v1986, %v1994
    %vm1999 = vcmask 1045504
    %v2000 = vsel %vm1999, %v1997, 0.0
    %v2001 = vadd.f32 %v1995, %v2000
    %v2002 = vrot.slane %v2001, 4
    %v2003 = vadd.f32 %v2001, %v2002
    %v2004 = vrot.slane %v2003, 2
    %v2005 = vadd.f32 %v2003, %v2004
    %v2006 = vrot.slane %v2005, 1
    %v2007 = vadd.f32 %v2005, %v2006
    %v2008 = vsel %vm850, %v1996, 0.0
    %vm2009 = vcmask 783360
    %v2010 = vsel %vm2009, %v1998, 0.0
    %v2011 = vadd.f32 %v2008, %v2010
    %v2012 = vrot.slane %v2011, 4
    %v2013 = vadd.f32 %v2011, %v2012
    %v2014 = vrot.slane %v2013, 2
    %v2015 = vadd.f32 %v2013, %v2014
    %v2016 = vrot.slane %v2015, 1
    %v2017 = vadd.f32 %v2015, %v2016
    %v2019 = vsel %vm850, %v2017, 0
    %2021 = vmatprep.subr.mxu0 0.0
    %2022 = vmatpush1.msra.mxu0 %v1422
    %2023 = vmatprep.subr.mxu0 0.0
    %2024 = vmatpush1.msra.mxu0 %v1423
    %2025 = vmatprep.subr.mxu0 0.0
    %2026 = vmatpush1.msra.mxu0 %v1424
    %2027 = vmatprep.subr.mxu0 0.0
    %2028 = vmatpush1.msra.mxu0 %v1425
    %2029 = vmatprep.subr.mxu0 0.0
    %2030 = vmatpush1.msra.mxu0 %v1426
    %2031 = vmatprep.subr.mxu0 0.0
    %2032 = vmatpush1.msra.mxu0 %v1427
    %2033 = vmatprep.subr.mxu0 0.0
    %2034 = vmatpush1.msra.mxu0 %v1428
    %2035 = vmatprep.subr.mxu0 0.0
    %2036 = vmatpush1.msra.mxu0 %v1429
    %2037 = vmatprep.subr.mxu0 0.0
    %2038 = vmatpush1.msra.mxu0 %v1430
    %2039 = vmatprep.subr.mxu0 0.0
    %2040 = vmatpush1.msra.mxu0 %v1431
    %2041 = vmatprep.subr.mxu0 0.0
    %2042 = vmatpush1.msra.mxu0 %v1432
    %2043 = vmatprep.subr.mxu0 0.0
    %2044 = vmatpush1.msra.mxu0 %v1433
    %2045 = vmatprep.subr.mxu0 0.0
    %2046 = vmatpush1.msra.mxu0 %v1434
    %2047 = vmatprep.subr.mxu0 0.0
    %2048 = vmatpush1.msra.mxu0 %v1435
    %2049 = vmatprep.subr.mxu0 0.0
    %2050 = vmatpush1.msra.mxu0 %v1436
    %2051 = vmatprep.subr.mxu0 0.0
    %2052 = vmatpush1.msra.mxu0 %v1437
    %2053 = vmatprep.subr.mxu0 0.0
    %2054 = vmatpush1.msra.mxu0 %v1438
    %2055 = vmatprep.subr.mxu0 0.0
    %2056 = vmatpush1.msra.mxu0 %v1439
    %2057 = vmatprep.subr.mxu0 0.0
    %2058 = vmatpush1.msra.mxu0 %v1440
    %2059 = vmatprep.subr.mxu0 0.0
    %2060 = vmatpush1.msra.mxu0 %v1441
    %2061 = vmatprep.subr.mxu0 0.0
    %2062 = vmatpush1.msra.mxu0 %v1442
    %2063 = vmatprep.subr.mxu0 0.0
    %2064 = vmatpush1.msra.mxu0 %v1443
    %2065 = vmatprep.subr.mxu0 0.0
    %2066 = vmatpush1.msra.mxu0 %v1444
    %2067 = vmatprep.subr.mxu0 0.0
    %2068 = vmatpush1.msra.mxu0 %v1445
    %2069 = vmatprep.subr.mxu0 0.0
    %2070 = vmatpush1.msra.mxu0 %v1446
    %2071 = vmatprep.subr.mxu0 0.0
    %2072 = vmatpush1.msra.mxu0 %v1447
    %2073 = vmatprep.subr.mxu0 0.0
    %2074 = vmatpush1.msra.mxu0 %v1448
    %2075 = vmatprep.subr.mxu0 0.0
    %2076 = vmatpush1.msra.mxu0 %v1449
    %2077 = vmatprep.subr.mxu0 0.0
    %2078 = vmatpush1.msra.mxu0 0.0
    %2079 = vmatprep.subr.mxu0 0.0
    %2080 = vmatpush1.msra.mxu0 0.0
    %2081 = vmatprep.subr.mxu0 0.0
    %2082 = vmatpush1.msra.mxu0 0.0
    %2083 = vmatprep.subr.mxu0 0.0
    %2084 = vmatpush1.msra.mxu0 0.0
    %2085 = vmatprep.mubr.f32.mxu0 %v2019
    %2086 = vmatmul.mubr.f32.gmra.mrb[0].mxu0 %v2007
    %v2087 = vpop.f32.mrb[0].mxu0
    %v2088 = vadd.f32 0.0, %v2087
    %v2089 = vpop.f32.mrb[0].mxu0
    %2090 = vdwg.mxu0
    %v2091 = vmul.f32 %v2088, 0.010204081
    %vm2092 = vcmask 261120
    %v2094 = vsel %vm2092, %v2091, 0
    %2096 = vmatprep.subr.mxu0 %v1451
    %2097 = vmatpush1.msra.mxu0 %v1450
    %2098 = vmatprep.subr.mxu0 %v1453
    %2099 = vmatpush1.msra.mxu0 %v1452
    %2100 = vmatprep.subr.mxu0 %v1455
    %2101 = vmatpush1.msra.mxu0 %v1454
    %2102 = vmatprep.subr.mxu0 %v1457
    %2103 = vmatpush1.msra.mxu0 %v1456
    %2104 = vmatprep.subr.mxu0 0.0
    %2105 = vmatpush1.msra.mxu0 0.0
    %2106 = vmatprep.subr.mxu0 0.0
    %2107 = vmatpush1.msra.mxu0 0.0
    %2108 = vmatprep.subr.mxu0 0.0
    %2109 = vmatpush1.msra.mxu0 0.0
    %2110 = vmatprep.subr.mxu0 0.0
    %2111 = vmatpush1.msra.mxu0 0.0
    %2112 = vmatprep.subr.mxu0 0.0
    %2113 = vmatpush1.msra.mxu0 0.0
    %2114 = vmatprep.subr.mxu0 0.0
    %2115 = vmatpush1.msra.mxu0 0.0
    %2116 = vmatprep.subr.mxu0 0.0
    %2117 = vmatpush1.msra.mxu0 0.0
    %2118 = vmatprep.subr.mxu0 0.0
    %2119 = vmatpush1.msra.mxu0 0.0
    %2120 = vmatprep.subr.mxu0 0.0
    %2121 = vmatpush1.msra.mxu0 0.0
    %2122 = vmatprep.subr.mxu0 0.0
    %2123 = vmatpush1.msra.mxu0 0.0
    %2124 = vmatprep.subr.mxu0 0.0
    %2125 = vmatpush1.msra.mxu0 0.0
    %2126 = vmatprep.subr.mxu0 0.0
    %2127 = vmatpush1.msra.mxu0 0.0
    %2128 = vmatprep.subr.mxu0 0.0
    %2129 = vmatpush1.msra.mxu0 0.0
    %2130 = vmatprep.subr.mxu0 0.0
    %2131 = vmatpush1.msra.mxu0 0.0
    %2132 = vmatprep.subr.mxu0 0.0
    %2133 = vmatpush1.msra.mxu0 0.0
    %2134 = vmatprep.subr.mxu0 0.0
    %2135 = vmatpush1.msra.mxu0 0.0
    %2136 = vmatprep.subr.mxu0 0.0
    %2137 = vmatpush1.msra.mxu0 0.0
    %2138 = vmatprep.subr.mxu0 0.0
    %2139 = vmatpush1.msra.mxu0 0.0
    %2140 = vmatprep.subr.mxu0 0.0
    %2141 = vmatpush1.msra.mxu0 0.0
    %2142 = vmatprep.subr.mxu0 0.0
    %2143 = vmatpush1.msra.mxu0 0.0
    %2144 = vmatprep.subr.mxu0 0.0
    %2145 = vmatpush1.msra.mxu0 0.0
    %2146 = vmatprep.subr.mxu0 0.0
    %2147 = vmatpush1.msra.mxu0 0.0
    %2148 = vmatprep.subr.mxu0 0.0
    %2149 = vmatpush1.msra.mxu0 0.0
    %2150 = vmatprep.subr.mxu0 0.0
    %2151 = vmatpush1.msra.mxu0 0.0
    %2152 = vmatprep.subr.mxu0 0.0
    %2153 = vmatpush1.msra.mxu0 0.0
    %2154 = vmatprep.subr.mxu0 0.0
    %2155 = vmatpush1.msra.mxu0 0.0
    %2156 = vmatprep.subr.mxu0 0.0
    %2157 = vmatpush1.msra.mxu0 0.0
    %2158 = vmatprep.subr.mxu0 0.0
    %2159 = vmatpush1.msra.mxu0 0.0
    %2160 = vmatprep.mubr.f32.mxu0 0.0
    %2161 = vmatmul.mubr.f32.gmra.mrb[0].mxu0 %v2094
    %v2162 = vpop.f32.mrb[0].mxu0
    %v2163 = vadd.f32 0.0, %v2162
    %v2164 = vpop.f32.mrb[0].mxu0
    %v2165 = vadd.f32 0.0, %v2164
    %2166 = vdwg.mxu0
    %v2167 = vlaneseq
    %v2168 = vshrl.u32 %v2167, 7
    %v2169 = vsub.s32 0, %v2168
    %v2170 = vrot.slane %v2163, %v2169
    %v2171 = vlaneseq
    %v2172 = vshrl.u32 %v2171, 7
    %v2173 = vsub.s32 0, %v2172
    %v2174 = vrot.slane %v2165, %v2173
    %v2175 = vsub.f32 %v1995, %v2170
    %v2176 = vsub.f32 %v1996, %v2174
    %v2177 = vsub.f32 %v1997, %v2170
    %v2178 = vsub.f32 %v1998, %v2174
    %v2179 = vmul.f32 %v2175, %v2175
    %v2180 = vmul.f32 %v2176, %v2176
    %v2181 = vmul.f32 %v2177, %v2177
    %v2182 = vmul.f32 %v2178, %v2178
    %v2183 = vsel %vm1999, %v2181, 0.0
    %v2184 = vadd.f32 %v2179, %v2183
    %v2185 = vrot.slane %v2184, 4
    %v2186 = vadd.f32 %v2184, %v2185
    %v2187 = vrot.slane %v2186, 2
    %v2188 = vadd.f32 %v2186, %v2187
    %v2189 = vrot.slane %v2188, 1
    %v2190 = vadd.f32 %v2188, %v2189
    %v2191 = vsel %vm850, %v2180, 0.0
    %v2192 = vsel %vm2009, %v2182, 0.0
    %v2193 = vadd.f32 %v2191, %v2192
    %v2194 = vrot.slane %v2193, 4
    %v2195 = vadd.f32 %v2193, %v2194
    %v2196 = vrot.slane %v2195, 2
    %v2197 = vadd.f32 %v2195, %v2196
    %v2198 = vrot.slane %v2197, 1
    %v2199 = vadd.f32 %v2197, %v2198
    %v2201 = vsel %vm850, %v2199, 0
    %2203 = vmatprep.subr.mxu0 0.0
    %2204 = vmatpush1.msra.mxu0 %v1422
    %2205 = vmatprep.subr.mxu0 0.0
    %2206 = vmatpush1.msra.mxu0 %v1423
    %2207 = vmatprep.subr.mxu0 0.0
    %2208 = vmatpush1.msra.mxu0 %v1424
    %2209 = vmatprep.subr.mxu0 0.0
    %2210 = vmatpush1.msra.mxu0 %v1425
    %2211 = vmatprep.subr.mxu0 0.0
    %2212 = vmatpush1.msra.mxu0 %v1426
    %2213 = vmatprep.subr.mxu0 0.0
    %2214 = vmatpush1.msra.mxu0 %v1427
    %2215 = vmatprep.subr.mxu0 0.0
    %2216 = vmatpush1.msra.mxu0 %v1428
    %2217 = vmatprep.subr.mxu0 0.0
    %2218 = vmatpush1.msra.mxu0 %v1429
    %2219 = vmatprep.subr.mxu0 0.0
    %2220 = vmatpush1.msra.mxu0 %v1430
    %2221 = vmatprep.subr.mxu0 0.0
    %2222 = vmatpush1.msra.mxu0 %v1431
    %2223 = vmatprep.subr.mxu0 0.0
    %2224 = vmatpush1.msra.mxu0 %v1432
    %2225 = vmatprep.subr.mxu0 0.0
    %2226 = vmatpush1.msra.mxu0 %v1433
    %2227 = vmatprep.subr.mxu0 0.0
    %2228 = vmatpush1.msra.mxu0 %v1434
    %2229 = vmatprep.subr.mxu0 0.0
    %2230 = vmatpush1.msra.mxu0 %v1435
    %2231 = vmatprep.subr.mxu0 0.0
    %2232 = vmatpush1.msra.mxu0 %v1436
    %2233 = vmatprep.subr.mxu0 0.0
    %2234 = vmatpush1.msra.mxu0 %v1437
    %2235 = vmatprep.subr.mxu0 0.0
    %2236 = vmatpush1.msra.mxu0 %v1438
    %2237 = vmatprep.subr.mxu0 0.0
    %2238 = vmatpush1.msra.mxu0 %v1439
    %2239 = vmatprep.subr.mxu0 0.0
    %2240 = vmatpush1.msra.mxu0 %v1440
    %2241 = vmatprep.subr.mxu0 0.0
    %2242 = vmatpush1.msra.mxu0 %v1441
    %2243 = vmatprep.subr.mxu0 0.0
    %2244 = vmatpush1.msra.mxu0 %v1442
    %2245 = vmatprep.subr.mxu0 0.0
    %2246 = vmatpush1.msra.mxu0 %v1443
    %2247 = vmatprep.subr.mxu0 0.0
    %2248 = vmatpush1.msra.mxu0 %v1444
    %2249 = vmatprep.subr.mxu0 0.0
    %2250 = vmatpush1.msra.mxu0 %v1445
    %2251 = vmatprep.subr.mxu0 0.0
    %2252 = vmatpush1.msra.mxu0 %v1446
    %2253 = vmatprep.subr.mxu0 0.0
    %2254 = vmatpush1.msra.mxu0 %v1447
    %2255 = vmatprep.subr.mxu0 0.0
    %2256 = vmatpush1.msra.mxu0 %v1448
    %2257 = vmatprep.subr.mxu0 0.0
    %2258 = vmatpush1.msra.mxu0 %v1449
    %2259 = vmatprep.subr.mxu0 0.0
    %2260 = vmatpush1.msra.mxu0 0.0
    %2261 = vmatprep.subr.mxu0 0.0
    %2262 = vmatpush1.msra.mxu0 0.0
    %2263 = vmatprep.subr.mxu0 0.0
    %2264 = vmatpush1.msra.mxu0 0.0
    %2265 = vmatprep.subr.mxu0 0.0
    %2266 = vmatpush1.msra.mxu0 0.0
    %2267 = vmatprep.mubr.f32.mxu0 %v2201
    %2268 = vmatmul.mubr.f32.gmra.mrb[0].mxu0 %v2190
    %v2269 = vpop.f32.mrb[0].mxu0
    %v2270 = vadd.f32 0.0, %v2269
    %v2271 = vpop.f32.mrb[0].mxu0
    %2272 = vdwg.mxu0
    %v2273 = vmul.f32 %v2270, 0.010204081
    %v2274 = vadd.f32 %v2273, 1e-05
    %v2275 = vrsqrt.pop %v2274
    %v2276 = vmul.f32 %v1458, %v2275
    %v2278 = vsel %vm2092, %v2276, 0
    %2280 = vmatprep.subr.mxu0 %v1451
    %2281 = vmatpush1.msra.mxu0 %v1450
    %2282 = vmatprep.subr.mxu0 %v1453
    %2283 = vmatpush1.msra.mxu0 %v1452
    %2284 = vmatprep.subr.mxu0 %v1455
    %2285 = vmatpush1.msra.mxu0 %v1454
    %2286 = vmatprep.subr.mxu0 %v1457
    %2287 = vmatpush1.msra.mxu0 %v1456
    %2288 = vmatprep.subr.mxu0 0.0
    %2289 = vmatpush1.msra.mxu0 0.0
    %2290 = vmatprep.subr.mxu0 0.0
    %2291 = vmatpush1.msra.mxu0 0.0
    %2292 = vmatprep.subr.mxu0 0.0
    %2293 = vmatpush1.msra.mxu0 0.0
    %2294 = vmatprep.subr.mxu0 0.0
    %2295 = vmatpush1.msra.mxu0 0.0
    %2296 = vmatprep.subr.mxu0 0.0
    %2297 = vmatpush1.msra.mxu0 0.0
    %2298 = vmatprep.subr.mxu0 0.0
    %2299 = vmatpush1.msra.mxu0 0.0
    %2300 = vmatprep.subr.mxu0 0.0
    %2301 = vmatpush1.msra.mxu0 0.0
    %2302 = vmatprep.subr.mxu0 0.0
    %2303 = vmatpush1.msra.mxu0 0.0
    %2304 = vmatprep.subr.mxu0 0.0
    %2305 = vmatpush1.msra.mxu0 0.0
    %2306 = vmatprep.subr.mxu0 0.0
    %2307 = vmatpush1.msra.mxu0 0.0
    %2308 = vmatprep.subr.mxu0 0.0
    %2309 = vmatpush1.msra.mxu0 0.0
    %2310 = vmatprep.subr.mxu0 0.0
    %2311 = vmatpush1.msra.mxu0 0.0
    %2312 = vmatprep.subr.mxu0 0.0
    %2313 = vmatpush1.msra.mxu0 0.0
    %2314 = vmatprep.subr.mxu0 0.0
    %2315 = vmatpush1.msra.mxu0 0.0
    %2316 = vmatprep.subr.mxu0 0.0
    %2317 = vmatpush1.msra.mxu0 0.0
    %2318 = vmatprep.subr.mxu0 0.0
    %2319 = vmatpush1.msra.mxu0 0.0
    %2320 = vmatprep.subr.mxu0 0.0
    %2321 = vmatpush1.msra.mxu0 0.0
    %2322 = vmatprep.subr.mxu0 0.0
    %2323 = vmatpush1.msra.mxu0 0.0
    %2324 = vmatprep.subr.mxu0 0.0
    %2325 = vmatpush1.msra.mxu0 0.0
    %2326 = vmatprep.subr.mxu0 0.0
    %2327 = vmatpush1.msra.mxu0 0.0
    %2328 = vmatprep.subr.mxu0 0.0
    %2329 = vmatpush1.msra.mxu0 0.0
    %2330 = vmatprep.subr.mxu0 0.0
    %2331 = vmatpush1.msra.mxu0 0.0
    %2332 = vmatprep.subr.mxu0 0.0
    %2333 = vmatpush1.msra.mxu0 0.0
    %2334 = vmatprep.subr.mxu0 0.0
    %2335 = vmatpush1.msra.mxu0 0.0
    %2336 = vmatprep.subr.mxu0 0.0
    %2337 = vmatpush1.msra.mxu0 0.0
    %2338 = vmatprep.subr.mxu0 0.0
    %2339 = vmatpush1.msra.mxu0 0.0
    %2340 = vmatprep.subr.mxu0 0.0
    %2341 = vmatpush1.msra.mxu0 0.0
    %2342 = vmatprep.subr.mxu0 0.0
    %2343 = vmatpush1.msra.mxu0 0.0
    %2344 = vmatprep.mubr.f32.mxu0 0.0
    %2345 = vmatmul.mubr.f32.gmra.mrb[0].mxu0 %v2278
    %v2346 = vpop.f32.mrb[0].mxu0
    %v2347 = vadd.f32 0.0, %v2346
    %v2348 = vpop.f32.mrb[0].mxu0
    %v2349 = vadd.f32 0.0, %v2348
    %2350 = vdwg.mxu0
    %v2351 = vlaneseq
    %v2352 = vshrl.u32 %v2351, 7
    %v2353 = vsub.s32 0, %v2352
    %v2354 = vrot.slane %v2347, %v2353
    %v2355 = vlaneseq
    %v2356 = vshrl.u32 %v2355, 7
    %v2357 = vsub.s32 0, %v2356
    %v2358 = vrot.slane %v2349, %v2357
    %v2359 = vmul.f32 %v2175, %v2354
    %v2360 = vmul.f32 %v2176, %v2358
    %v2361 = vmul.f32 %v2177, %v2354
    %v2362 = vmul.f32 %v2178, %v2358
    %v2364 = vlaneseq
    %v2365 = vshrl.u32 %v2364, 7
    %v2366 = vsub.s32 0, %v2365
    %v2367 = vrot.slane %v1459, %v2366
    %v2368 = vlaneseq
    %v2369 = vshrl.u32 %v2368, 7
    %v2370 = vsub.s32 1, %v2369
    %v2371 = vrot.slane %v1459, %v2370
    %v2374 = vadd.f32 %v2359, %v2367
    %v2375 = vadd.f32 %v2360, %v2371
    %v2376 = vadd.f32 %v2361, %v2367
    %v2377 = vadd.f32 %v2362, %v2371
    %v2378 = vld [vmem:[%s15] sm:$0xff]
    %v2379 = vld [vmem:[%s15 + $0x8] sm:$0xff]
    %v2380 = vld [vmem:[%s15 + $0x10] sm:$0xff]
    %v2381 = vld [vmem:[%s16] sm:$0xff]
    %v2382 = vld [vmem:[%s16 + $0x8] sm:$0xff]
    %v2383 = vld [vmem:[%s16 + $0x10] sm:$0xff]
    %v2384 = vld [vmem:[%s16 + $0x18] sm:$0xff]
    %v2385 = vld [vmem:[%s16 + $0x20] sm:$0xff]
    %v2386 = vld [vmem:[%s16 + $0x28] sm:$0xff]
    %v2387 = vld [vmem:[%s16 + $0x30] sm:$0xff]
    %v2388 = vld [vmem:[%s16 + $0x38] sm:$0xff]
    %v2389 = vld [vmem:[%s16 + $0x40] sm:$0xff]
    %v2390 = vld [vmem:[%s16 + $0x48] sm:$0xff]
    %v2391 = vld [vmem:[%s16 + $0x50] sm:$0xff]
    %v2392 = vld [vmem:[%s16 + $0x58] sm:$0xff]
    %v2393 = vld [vmem:[%s16 + $0x60] sm:$0xff]
    %v2394 = vld [vmem:[%s16 + $0x68] sm:$0xff]
    %v2395 = vld [vmem:[%s16 + $0x70] sm:$0xff]
    %v2396 = vld [vmem:[%s16 + $0x78] sm:$0xff]
    %v2397 = vld [vmem:[%s16 + $0x80] sm:$0xff]
    %v2398 = vld [vmem:[%s16 + $0x88] sm:$0xff]
    %v2399 = vld [vmem:[%s16 + $0x90] sm:$0xff]
    %v2400 = vld [vmem:[%s16 + $0x98] sm:$0xff]
    %v2401 = vld [vmem:[%s16 + $0xa0] sm:$0xff]
    %v2402 = vld [vmem:[%s16 + $0xa8] sm:$0xff]
    %v2403 = vld [vmem:[%s16 + $0xb0] sm:$0xff]
    %v2404 = vld [vmem:[%s16 + $0xb8] sm:$0xff]
    %v2405 = vld [vmem:[%s16 + $0xc0] sm:$0xff]
    %v2406 = vld [vmem:[%s16 + $0xc8] sm:$0xff]
    %v2407 = vld [vmem:[%s16 + $0xd0] sm:$0xff]
    %v2408 = vld [vmem:[%s16 + $0xd8] sm:$0xff]
    %v2409 = vld [vmem:[%s16 + $0xe0] sm:$0xff]
    %v2410 = vld [vmem:[%s16 + $0xe8] sm:$0xff]
    %v2411 = vld [vmem:[%s16 + $0xf0] sm:$0xff]
    %v2412 = vld [vmem:[%s16 + $0xf8] sm:$0xff]
    %v2413 = vld [vmem:[%s16 + $0x100] sm:$0xff]
    %v2414 = vld [vmem:[%s16 + $0x108] sm:$0xff]
    %v2415 = vld [vmem:[%s16 + $0x110] sm:$0xff]
    %v2416 = vld [vmem:[%s16 + $0x118] sm:$0xff]
    %v2417 = vld [vmem:[%s16 + $0x120] sm:$0xff]
    %v2418 = vld [vmem:[%s16 + $0x128] sm:$0xff]
    %v2419 = vld [vmem:[%s16 + $0x130] sm:$0xff]
    %v2420 = vld [vmem:[%s16 + $0x138] sm:$0xff]
    %v2421 = vld [vmem:[%s16 + $0x140] sm:$0xff]
    %v2422 = vld [vmem:[%s16 + $0x148] sm:$0xff]
    %v2423 = vld [vmem:[%s16 + $0x150] sm:$0xff]
    %v2424 = vld [vmem:[%s16 + $0x158] sm:$0xff]
    %v2425 = vld [vmem:[%s16 + $0x160] sm:$0xff]
    %v2426 = vld [vmem:[%s16 + $0x168] sm:$0xff]
    %v2427 = vld [vmem:[%s16 + $0x170] sm:$0xff]
    %v2428 = vld [vmem:[%s16 + $0x178] sm:$0xff]
    %v2429 = vld [vmem:[%s16 + $0x180] sm:$0xff]
    %v2430 = vld [vmem:[%s16 + $0x188] sm:$0xff]
    %v2431 = vld [vmem:[%s16 + $0x190] sm:$0xff]
    %v2432 = vld [vmem:[%s16 + $0x198] sm:$0xff]
    %v2433 = vld [vmem:[%s16 + $0x1a0] sm:$0xff]
    %v2434 = vld [vmem:[%s16 + $0x1a8] sm:$0xff]
    %v2435 = vld [vmem:[%s16 + $0x1b0] sm:$0xff]
    %v2436 = vld [vmem:[%s16 + $0x1b8] sm:$0xff]
    %v2437 = vld [vmem:[%s16 + $0x1c0] sm:$0xff]
    %v2438 = vld [vmem:[%s16 + $0x1c8] sm:$0xff]
    %v2439 = vld [vmem:[%s16 + $0x1d0] sm:$0xff]
    %v2440 = vld [vmem:[%s16 + $0x1d8] sm:$0xff]
    %v2441 = vld [vmem:[%s16 + $0x1e0] sm:$0xff]
    %v2442 = vld [vmem:[%s16 + $0x1e8] sm:$0xff]
    %v2443 = vld [vmem:[%s16 + $0x1f0] sm:$0xff]
    %v2444 = vld [vmem:[%s16 + $0x1f8] sm:$0xff]
    %v2445 = vld [vmem:[%s16 + $0x200] sm:$0xff]
    %v2446 = vld [vmem:[%s16 + $0x208] sm:$0xff]
    %v2447 = vld [vmem:[%s16 + $0x210] sm:$0xff]
    %v2448 = vld [vmem:[%s16 + $0x218] sm:$0xff]
    %v2449 = vld [vmem:[%s16 + $0x220] sm:$0xff]
    %v2450 = vld [vmem:[%s16 + $0x228] sm:$0xff]
    %v2451 = vld [vmem:[%s16 + $0x230] sm:$0xff]
    %v2452 = vld [vmem:[%s16 + $0x238] sm:$0xff]
    %v2453 = vld [vmem:[%s16 + $0x240] sm:$0xff]
    %v2454 = vld [vmem:[%s16 + $0x248] sm:$0xff]
    %v2455 = vld [vmem:[%s16 + $0x250] sm:$0xff]
    %v2456 = vld [vmem:[%s16 + $0x258] sm:$0xff]
    %v2457 = vld [vmem:[%s16 + $0x260] sm:$0xff]
    %v2458 = vld [vmem:[%s16 + $0x268] sm:$0xff]
    %v2459 = vld [vmem:[%s16 + $0x270] sm:$0xff]
    %v2460 = vld [vmem:[%s16 + $0x278] sm:$0xff]
    %v2461 = vld [vmem:[%s16 + $0x280] sm:$0xff]
    %v2462 = vld [vmem:[%s16 + $0x288] sm:$0xff]
    %v2463 = vld [vmem:[%s16 + $0x290] sm:$0xff]
    %v2464 = vld [vmem:[%s16 + $0x298] sm:$0xff]
    %v2465 = vld [vmem:[%s16 + $0x2a0] sm:$0xff]
    %v2466 = vld [vmem:[%s16 + $0x2a8] sm:$0xff]
    %v2467 = vld [vmem:[%s16 + $0x2b0] sm:$0xff]
    %v2468 = vld [vmem:[%s16 + $0x2b8] sm:$0xff]
    %v2469 = vld [vmem:[%s16 + $0x2c0] sm:$0xff]
    %v2470 = vld [vmem:[%s16 + $0x2c8] sm:$0xff]
    %v2471 = vld [vmem:[%s16 + $0x2d0] sm:$0xff]
    %v2472 = vld [vmem:[%s16 + $0x2d8] sm:$0xff]
    %v2473 = vld [vmem:[%s16 + $0x2e0] sm:$0xff]
    %v2474 = vld [vmem:[%s16 + $0x2e8] sm:$0xff]
    %v2475 = vld [vmem:[%s16 + $0x2f0] sm:$0xff]
    %v2476 = vld [vmem:[%s16 + $0x2f8] sm:$0xff]
    %v2477 = vld [vmem:[%s16 + $0x300] sm:$0xff]
    %v2478 = vld [vmem:[%s16 + $0x308] sm:$0xff]
    %v2479 = vld [vmem:[%s16 + $0x310] sm:$0xff]
    %v2480 = vld [vmem:[%s16 + $0x318] sm:$0xff]
    %v2481 = vld [vmem:[%s16 + $0x320] sm:$0xff]
    %v2482 = vld [vmem:[%s16 + $0x328] sm:$0xff]
    %v2483 = vld [vmem:[%s16 + $0x330] sm:$0xff]
    %v2484 = vld [vmem:[%s16 + $0x338] sm:$0xff]
    %v2485 = vld [vmem:[%s16 + $0x340] sm:$0xff]
    %v2486 = vld [vmem:[%s16 + $0x348] sm:$0xff]
    %v2487 = vld [vmem:[%s16 + $0x350] sm:$0xff]
    %v2488 = vld [vmem:[%s16 + $0x358] sm:$0xff]
    %v2489 = vld [vmem:[%s16 + $0x360] sm:$0xff]
    %v2490 = vld [vmem:[%s16 + $0x368] sm:$0xff]
    %v2491 = vld [vmem:[%s16 + $0x370] sm:$0xff]
    %v2492 = vld [vmem:[%s16 + $0x378] sm:$0xff]
    %v2493 = vld [vmem:[%s16 + $0x380] sm:$0xff]
    %v2494 = vld [vmem:[%s16 + $0x388] sm:$0xff]
    %v2495 = vld [vmem:[%s16 + $0x390] sm:$0xff]
    %v2496 = vld [vmem:[%s16 + $0x398] sm:$0xff]
    %v2497 = vld [vmem:[%s16 + $0x3a0] sm:$0xff]
    %v2498 = vld [vmem:[%s16 + $0x3a8] sm:$0xff]
    %v2499 = vld [vmem:[%s16 + $0x3b0] sm:$0xff]
    %v2500 = vld [vmem:[%s16 + $0x3b8] sm:$0xff]
    %v2501 = vld [vmem:[%s16 + $0x3c0] sm:$0xff]
    %v2502 = vld [vmem:[%s16 + $0x3c8] sm:$0xff]
    %v2503 = vld [vmem:[%s16 + $0x3d0] sm:$0xff]
    %v2504 = vld [vmem:[%s16 + $0x3d8] sm:$0xff]
    %v2505 = vld [vmem:[%s16 + $0x3e0] sm:$0xff]
    %v2506 = vld [vmem:[%s16 + $0x3e8] sm:$0xff]
    %v2507 = vld [vmem:[%s16 + $0x3f0] sm:$0xff]
    %v2508 = vld [vmem:[%s16 + $0x3f8] sm:$0xff]
    %v2509 = vld [vmem:[%s16 + $0x400] sm:$0xff]
    %v2510 = vld [vmem:[%s16 + $0x408] sm:$0xff]
    %v2511 = vld [vmem:[%s16 + $0x410] sm:$0xff]
    %v2512 = vld [vmem:[%s16 + $0x418] sm:$0xff]
    %v2513 = vld [vmem:[%s16 + $0x420] sm:$0xff]
    %v2514 = vld [vmem:[%s16 + $0x428] sm:$0xff]
    %v2515 = vld [vmem:[%s16 + $0x430] sm:$0xff]
    %v2516 = vld [vmem:[%s16 + $0x438] sm:$0xff]
    %v2517 = vld [vmem:[%s16 + $0x440] sm:$0xff]
    %v2518 = vld [vmem:[%s16 + $0x448] sm:$0xff]
    %v2519 = vld [vmem:[%s16 + $0x450] sm:$0xff]
    %v2520 = vld [vmem:[%s16 + $0x458] sm:$0xff]
    %v2521 = vld [vmem:[%s16 + $0x460] sm:$0xff]
    %v2522 = vld [vmem:[%s16 + $0x468] sm:$0xff]
    %v2523 = vld [vmem:[%s16 + $0x470] sm:$0xff]
    %v2524 = vld [vmem:[%s16 + $0x478] sm:$0xff]
    %v2525 = vld [vmem:[%s16 + $0x480] sm:$0xff]
    %v2526 = vld [vmem:[%s16 + $0x488] sm:$0xff]
    %v2527 = vld [vmem:[%s16 + $0x490] sm:$0xff]
    %v2528 = vld [vmem:[%s16 + $0x498] sm:$0xff]
    %v2529 = vld [vmem:[%s16 + $0x4a0] sm:$0xff]
    %v2530 = vld [vmem:[%s16 + $0x4a8] sm:$0xff]
    %v2531 = vld [vmem:[%s16 + $0x4b0] sm:$0xff]
    %v2532 = vld [vmem:[%s16 + $0x4b8] sm:$0xff]
    %v2533 = vld [vmem:[%s16 + $0x4c0] sm:$0xff]
    %v2534 = vld [vmem:[%s16 + $0x4c8] sm:$0xff]
    %v2535 = vld [vmem:[%s16 + $0x4d0] sm:$0xff]
    %v2536 = vld [vmem:[%s16 + $0x4d8] sm:$0xff]
    %v2537 = vld [vmem:[%s16 + $0x4e0] sm:$0xff]
    %v2538 = vld [vmem:[%s16 + $0x4e8] sm:$0xff]
    %v2539 = vld [vmem:[%s16 + $0x4f0] sm:$0xff]
    %v2540 = vld [vmem:[%s16 + $0x4f8] sm:$0xff]
    %v2541 = vld [vmem:[%s16 + $0x500] sm:$0xff]
    %v2542 = vld [vmem:[%s16 + $0x508] sm:$0xff]
    %v2543 = vld [vmem:[%s16 + $0x510] sm:$0xff]
    %v2544 = vld [vmem:[%s16 + $0x518] sm:$0xff]
    %v2545 = vld [vmem:[%s16 + $0x520] sm:$0xff]
    %v2546 = vld [vmem:[%s16 + $0x528] sm:$0xff]
    %v2547 = vld [vmem:[%s16 + $0x530] sm:$0xff]
    %v2548 = vld [vmem:[%s16 + $0x538] sm:$0xff]
    %v2549 = vld [vmem:[%s17] sm:$0x3]
    %v2550 = vld [vmem:[%s18] sm:$0xff]
    %v2551 = vld [vmem:[%s18 + $0x8] sm:$0xff]
    %v2552 = vld [vmem:[%s18 + $0x10] sm:$0xff]
    %v2553 = vld [vmem:[%s18 + $0x18] sm:$0xff]
    %v2554 = vld [vmem:[%s18 + $0x20] sm:$0xff]
    %v2555 = vld [vmem:[%s18 + $0x28] sm:$0xff]
    %v2556 = vld [vmem:[%s18 + $0x30] sm:$0xff]
    %v2557 = vld [vmem:[%s18 + $0x38] sm:$0xff]
    %v2558 = vld [vmem:[%s18 + $0x40] sm:$0xff]
    %v2559 = vld [vmem:[%s18 + $0x48] sm:$0xff]
    %v2560 = vld [vmem:[%s18 + $0x50] sm:$0xff]
    %v2561 = vld [vmem:[%s18 + $0x58] sm:$0xff]
    %v2562 = vld [vmem:[%s18 + $0x60] sm:$0xff]
    %v2563 = vld [vmem:[%s18 + $0x68] sm:$0xff]
    %v2564 = vld [vmem:[%s18 + $0x70] sm:$0xff]
    %v2565 = vld [vmem:[%s18 + $0x78] sm:$0xff]
    %v2566 = vld [vmem:[%s18 + $0x80] sm:$0xff]
    %v2567 = vld [vmem:[%s18 + $0x88] sm:$0xff]
    %v2568 = vld [vmem:[%s18 + $0x90] sm:$0xff]
    %v2569 = vld [vmem:[%s18 + $0x98] sm:$0xff]
    %v2570 = vld [vmem:[%s18 + $0xa0] sm:$0xff]
    %v2571 = vld [vmem:[%s18 + $0xa8] sm:$0xff]
    %v2572 = vld [vmem:[%s18 + $0xb0] sm:$0xff]
    %v2573 = vld [vmem:[%s18 + $0xb8] sm:$0xff]
    %v2574 = vld [vmem:[%s18 + $0xc0] sm:$0xff]
    %v2575 = vld [vmem:[%s18 + $0xc8] sm:$0xff]
    %v2576 = vld [vmem:[%s18 + $0xd0] sm:$0xff]
    %v2577 = vld [vmem:[%s18 + $0xd8] sm:$0xff]
    %v2578 = vld [vmem:[%s18 + $0xe0] sm:$0xff]
    %v2579 = vld [vmem:[%s18 + $0xe8] sm:$0xff]
    %v2580 = vld [vmem:[%s18 + $0xf0] sm:$0xff]
    %v2581 = vld [vmem:[%s18 + $0xf8] sm:$0xff]
    %v2582 = vld [vmem:[%s19] sm:$0xff]
    %v2583 = vld [vmem:[%s19 + $0x8] sm:$0xff]
    %v2584 = vld [vmem:[%s19 + $0x10] sm:$0xff]
    %v2585 = vld [vmem:[%s19 + $0x18] sm:$0xff]
    %v2586 = vld [vmem:[%s19 + $0x20] sm:$0xff]
    %v2587 = vld [vmem:[%s19 + $0x28] sm:$0xff]
    %v2588 = vld [vmem:[%s19 + $0x30] sm:$0xff]
    %v2589 = vld [vmem:[%s19 + $0x38] sm:$0xff]
    %v2590 = vld [vmem:[%s19 + $0x40] sm:$0xff]
    %v2591 = vld [vmem:[%s19 + $0x48] sm:$0xff]
    %v2592 = vld [vmem:[%s19 + $0x50] sm:$0xff]
    %v2593 = vld [vmem:[%s19 + $0x58] sm:$0xff]
    %v2594 = vld [vmem:[%s19 + $0x60] sm:$0xff]
    %v2595 = vld [vmem:[%s19 + $0x68] sm:$0xff]
    %v2596 = vld [vmem:[%s19 + $0x70] sm:$0xff]
    %v2597 = vld [vmem:[%s19 + $0x78] sm:$0xff]
    %v2598 = vld [vmem:[%s20] sm:$0x1]
    %v2599 = vld [vmem:[%s21] sm:$0x3]
    %vm2600 = vcmask 113664
    %v2602 = vsel %vm2600, %v2378, 0
    %v2605 = vsel %vm1999, %v2376, 0
    %v2608 = vsel %vm1999, %v2377, 0
    %2610 = vmatprep.subr.mxu0 %v2375
    %2611 = vmatpush1.msra.mxu0 %v2374
    %2612 = vmatprep.subr.mxu0 %v2608
    %2613 = vmatpush1.msra.mxu0 %v2605
    %2614 = vmatprep.subr.mxu0 0.0
    %2615 = vmatpush1.msra.mxu0 0.0
    %2616 = vmatprep.subr.mxu0 0.0
    %2617 = vmatpush1.msra.mxu0 0.0
    %2618 = vmatprep.subr.mxu0 0.0
    %2619 = vmatpush1.msra.mxu0 0.0
    %2620 = vmatprep.subr.mxu0 0.0
    %2621 = vmatpush1.msra.mxu0 0.0
    %2622 = vmatprep.subr.mxu0 0.0
    %2623 = vmatpush1.msra.mxu0 0.0
    %2624 = vmatprep.subr.mxu0 0.0
    %2625 = vmatpush1.msra.mxu0 0.0
    %2626 = vmatprep.subr.mxu0 0.0
    %2627 = vmatpush1.msra.mxu0 0.0
    %2628 = vmatprep.subr.mxu0 0.0
    %2629 = vmatpush1.msra.mxu0 0.0
    %2630 = vmatprep.subr.mxu0 0.0
    %2631 = vmatpush1.msra.mxu0 0.0
    %2632 = vmatprep.subr.mxu0 0.0
    %2633 = vmatpush1.msra.mxu0 0.0
    %2634 = vmatprep.subr.mxu0 0.0
    %2635 = vmatpush1.msra.mxu0 0.0
    %2636 = vmatprep.subr.mxu0 0.0
    %2637 = vmatpush1.msra.mxu0 0.0
    %2638 = vmatprep.subr.mxu0 0.0
    %2639 = vmatpush1.msra.mxu0 0.0
    %2640 = vmatprep.subr.mxu0 0.0
    %2641 = vmatpush1.msra.mxu0 0.0
    %2642 = vmatprep.subr.mxu0 0.0
    %2643 = vmatpush1.msra.mxu0 0.0
    %2644 = vmatprep.subr.mxu0 0.0
    %2645 = vmatpush1.msra.mxu0 0.0
    %2646 = vmatprep.subr.mxu0 0.0
    %2647 = vmatpush1.msra.mxu0 0.0
    %2648 = vmatprep.subr.mxu0 0.0
    %2649 = vmatpush1.msra.mxu0 0.0
    %2650 = vmatprep.subr.mxu0 0.0
    %2651 = vmatpush1.msra.mxu0 0.0
    %2652 = vmatprep.subr.mxu0 0.0
    %2653 = vmatpush1.msra.mxu0 0.0
    %2654 = vmatprep.subr.mxu0 0.0
    %2655 = vmatpush1.msra.mxu0 0.0
    %2656 = vmatprep.subr.mxu0 0.0
    %2657 = vmatpush1.msra.mxu0 0.0
    %2658 = vmatprep.subr.mxu0 0.0
    %2659 = vmatpush1.msra.mxu0 0.0
    %2660 = vmatprep.subr.mxu0 0.0
    %2661 = vmatpush1.msra.mxu0 0.0
    %2662 = vmatprep.subr.mxu0 0.0
    %2663 = vmatpush1.msra.mxu0 0.0
    %2664 = vmatprep.subr.mxu0 0.0
    %2665 = vmatpush1.msra.mxu0 0.0
    %2666 = vmatprep.subr.mxu0 0.0
    %2667 = vmatpush1.msra.mxu0 0.0
    %2668 = vmatprep.subr.mxu0 0.0
    %2669 = vmatpush1.msra.mxu0 0.0
    %2670 = vmatprep.subr.mxu0 0.0
    %2671 = vmatpush1.msra.mxu0 0.0
    %2672 = vmatprep.subr.mxu0 0.0
    %2673 = vmatpush1.msra.mxu0 0.0
    %2674 = vmatprep.mubr.f32.mxu0 0.0
    %2675 = vmatmul.mubr.f32.gmra.mrb[0].mxu0 %v2602
    %v2676 = vpop.f32.mrb[0].mxu0
    %v2677 = vadd.f32 0.0, %v2676
    %v2678 = vpop.f32.mrb[0].mxu0
    %v2679 = vadd.f32 0.0, %v2678
    %2680 = vdwg.mxu0
    %v2682 = vsel %vm850, %v2679, 0
    %2684 = vmatprep.subr.mxu0 %v2382
    %2685 = vmatpush1.msra.mxu0 %v2381
    %2686 = vmatprep.subr.mxu0 %v2384
    %2687 = vmatpush1.msra.mxu0 %v2383
    %2688 = vmatprep.subr.mxu0 %v2386
    %2689 = vmatpush1.msra.mxu0 %v2385
    %2690 = vmatprep.subr.mxu0 %v2388
    %2691 = vmatpush1.msra.mxu0 %v2387
    %2692 = vmatprep.subr.mxu0 %v2390
    %2693 = vmatpush1.msra.mxu0 %v2389
    %2694 = vmatprep.subr.mxu0 %v2392
    %2695 = vmatpush1.msra.mxu0 %v2391
    %2696 = vmatprep.subr.mxu0 %v2394
    %2697 = vmatpush1.msra.mxu0 %v2393
    %2698 = vmatprep.subr.mxu0 %v2396
    %2699 = vmatpush1.msra.mxu0 %v2395
    %2700 = vmatprep.subr.mxu0 %v2398
    %2701 = vmatpush1.msra.mxu0 %v2397
    %2702 = vmatprep.subr.mxu0 %v2400
    %2703 = vmatpush1.msra.mxu0 %v2399
    %2704 = vmatprep.subr.mxu0 %v2402
    %2705 = vmatpush1.msra.mxu0 %v2401
    %2706 = vmatprep.subr.mxu0 %v2404
    %2707 = vmatpush1.msra.mxu0 %v2403
    %2708 = vmatprep.subr.mxu0 %v2406
    %2709 = vmatpush1.msra.mxu0 %v2405
    %2710 = vmatprep.subr.mxu0 %v2408
    %2711 = vmatpush1.msra.mxu0 %v2407
    %2712 = vmatprep.subr.mxu0 %v2410
    %2713 = vmatpush1.msra.mxu0 %v2409
    %2714 = vmatprep.subr.mxu0 %v2412
    %2715 = vmatpush1.msra.mxu0 %v2411
    %2716 = vmatprep.subr.mxu0 %v2414
    %2717 = vmatpush1.msra.mxu0 %v2413
    %2718 = vmatprep.subr.mxu0 %v2416
    %2719 = vmatpush1.msra.mxu0 %v2415
    %2720 = vmatprep.subr.mxu0 %v2418
    %2721 = vmatpush1.msra.mxu0 %v2417
    %2722 = vmatprep.subr.mxu0 %v2420
    %2723 = vmatpush1.msra.mxu0 %v2419
    %2724 = vmatprep.subr.mxu0 %v2422
    %2725 = vmatpush1.msra.mxu0 %v2421
    %2726 = vmatprep.subr.mxu0 %v2424
    %2727 = vmatpush1.msra.mxu0 %v2423
    %2728 = vmatprep.subr.mxu0 %v2426
    %2729 = vmatpush1.msra.mxu0 %v2425
    %2730 = vmatprep.subr.mxu0 %v2428
    %2731 = vmatpush1.msra.mxu0 %v2427
    %2732 = vmatprep.subr.mxu0 %v2430
    %2733 = vmatpush1.msra.mxu0 %v2429
    %2734 = vmatprep.subr.mxu0 %v2432
    %2735 = vmatpush1.msra.mxu0 %v2431
    %2736 = vmatprep.subr.mxu0 %v2434
    %2737 = vmatpush1.msra.mxu0 %v2433
    %2738 = vmatprep.subr.mxu0 %v2436
    %2739 = vmatpush1.msra.mxu0 %v2435
    %2740 = vmatprep.subr.mxu0 0.0
    %2741 = vmatpush1.msra.mxu0 0.0
    %2742 = vmatprep.subr.mxu0 0.0
    %2743 = vmatpush1.msra.mxu0 0.0
    %2744 = vmatprep.subr.mxu0 0.0
    %2745 = vmatpush1.msra.mxu0 0.0
    %2746 = vmatprep.subr.mxu0 0.0
    %2747 = vmatpush1.msra.mxu0 0.0
    %2748 = vmatprep.mubr.f32.mxu0 %v2682
    %2749 = vmatmul.mubr.f32.gmra.mrb[0].mxu0 %v2677
    %v2750 = vpop.f32.mrb[0].mxu0
    %v2751 = vadd.f32 0.0, %v2750
    %v2752 = vpop.f32.mrb[0].mxu0
    %v2753 = vadd.f32 0.0, %v2752
    %2754 = vdwg.mxu0
    %v2756 = vlaneseq
    %v2757 = vshrl.u32 %v2756, 7
    %v2758 = vsub.s32 0, %v2757
    %v2759 = vrot.slane %v2549, %v2758
    %v2760 = vlaneseq
    %v2761 = vshrl.u32 %v2760, 7
    %v2762 = vsub.s32 1, %v2761
    %v2763 = vrot.slane %v2549, %v2762
    %v2766 = vadd.f32 %v2759, %v2751
    %v2767 = vadd.f32 %v2763, %v2753
    %v2769 = vsel %vm2600, %v2379, 0
    %2771 = vmatprep.subr.mxu0 %v2375
    %2772 = vmatpush1.msra.mxu0 %v2374
    %2773 = vmatprep.subr.mxu0 %v2608
    %2774 = vmatpush1.msra.mxu0 %v2605
    %2775 = vmatprep.subr.mxu0 0.0
    %2776 = vmatpush1.msra.mxu0 0.0
    %2777 = vmatprep.subr.mxu0 0.0
    %2778 = vmatpush1.msra.mxu0 0.0
    %2779 = vmatprep.subr.mxu0 0.0
    %2780 = vmatpush1.msra.mxu0 0.0
    %2781 = vmatprep.subr.mxu0 0.0
    %2782 = vmatpush1.msra.mxu0 0.0
    %2783 = vmatprep.subr.mxu0 0.0
    %2784 = vmatpush1.msra.mxu0 0.0
    %2785 = vmatprep.subr.mxu0 0.0
    %2786 = vmatpush1.msra.mxu0 0.0
    %2787 = vmatprep.subr.mxu0 0.0
    %2788 = vmatpush1.msra.mxu0 0.0
    %2789 = vmatprep.subr.mxu0 0.0
    %2790 = vmatpush1.msra.mxu0 0.0
    %2791 = vmatprep.subr.mxu0 0.0
    %2792 = vmatpush1.msra.mxu0 0.0
    %2793 = vmatprep.subr.mxu0 0.0
    %2794 = vmatpush1.msra.mxu0 0.0
    %2795 = vmatprep.subr.mxu0 0.0
    %2796 = vmatpush1.msra.mxu0 0.0
    %2797 = vmatprep.subr.mxu0 0.0
    %2798 = vmatpush1.msra.mxu0 0.0
    %2799 = vmatprep.subr.mxu0 0.0
    %2800 = vmatpush1.msra.mxu0 0.0
    %2801 = vmatprep.subr.mxu0 0.0
    %2802 = vmatpush1.msra.mxu0 0.0
    %2803 = vmatprep.subr.mxu0 0.0
    %2804 = vmatpush1.msra.mxu0 0.0
    %2805 = vmatprep.subr.mxu0 0.0
    %2806 = vmatpush1.msra.mxu0 0.0
    %2807 = vmatprep.subr.mxu0 0.0
    %2808 = vmatpush1.msra.mxu0 0.0
    %2809 = vmatprep.subr.mxu0 0.0
    %2810 = vmatpush1.msra.mxu0 0.0
    %2811 = vmatprep.subr.mxu0 0.0
    %2812 = vmatpush1.msra.mxu0 0.0
    %2813 = vmatprep.subr.mxu0 0.0
    %2814 = vmatpush1.msra.mxu0 0.0
    %2815 = vmatprep.subr.mxu0 0.0
    %2816 = vmatpush1.msra.mxu0 0.0
    %2817 = vmatprep.subr.mxu0 0.0
    %2818 = vmatpush1.msra.mxu0 0.0
    %2819 = vmatprep.subr.mxu0 0.0
    %2820 = vmatpush1.msra.mxu0 0.0
    %2821 = vmatprep.subr.mxu0 0.0
    %2822 = vmatpush1.msra.mxu0 0.0
    %2823 = vmatprep.subr.mxu0 0.0
    %2824 = vmatpush1.msra.mxu0 0.0
    %2825 = vmatprep.subr.mxu0 0.0
    %2826 = vmatpush1.msra.mxu0 0.0
    %2827 = vmatprep.subr.mxu0 0.0
    %2828 = vmatpush1.msra.mxu0 0.0
    %2829 = vmatprep.subr.mxu0 0.0
    %2830 = vmatpush1.msra.mxu0 0.0
    %2831 = vmatprep.subr.mxu0 0.0
    %2832 = vmatpush1.msra.mxu0 0.0
    %2833 = vmatprep.subr.mxu0 0.0
    %2834 = vmatpush1.msra.mxu0 0.0
    %2835 = vmatprep.mubr.f32.mxu0 0.0
    %2836 = vmatmul.mubr.f32.gmra.mrb[0].mxu0 %v2769
    %v2837 = vpop.f32.mrb[0].mxu0
    %v2838 = vadd.f32 0.0, %v2837
    %v2839 = vpop.f32.mrb[0].mxu0
    %v2840 = vadd.f32 0.0, %v2839
    %2841 = vdwg.mxu0
    %v2843 = vsel %vm850, %v2840, 0
    %2845 = vmatprep.subr.mxu0 %v2438
    %2846 = vmatpush1.msra.mxu0 %v2437
    %2847 = vmatprep.subr.mxu0 %v2440
    %2848 = vmatpush1.msra.mxu0 %v2439
    %2849 = vmatprep.subr.mxu0 %v2442
    %2850 = vmatpush1.msra.mxu0 %v2441
    %2851 = vmatprep.subr.mxu0 %v2444
    %2852 = vmatpush1.msra.mxu0 %v2443
    %2853 = vmatprep.subr.mxu0 %v2446
    %2854 = vmatpush1.msra.mxu0 %v2445
    %2855 = vmatprep.subr.mxu0 %v2448
    %2856 = vmatpush1.msra.mxu0 %v2447
    %2857 = vmatprep.subr.mxu0 %v2450
    %2858 = vmatpush1.msra.mxu0 %v2449
    %2859 = vmatprep.subr.mxu0 %v2452
    %2860 = vmatpush1.msra.mxu0 %v2451
    %2861 = vmatprep.subr.mxu0 %v2454
    %2862 = vmatpush1.msra.mxu0 %v2453
    %2863 = vmatprep.subr.mxu0 %v2456
    %2864 = vmatpush1.msra.mxu0 %v2455
    %2865 = vmatprep.subr.mxu0 %v2458
    %2866 = vmatpush1.msra.mxu0 %v2457
    %2867 = vmatprep.subr.mxu0 %v2460
    %2868 = vmatpush1.msra.mxu0 %v2459
    %2869 = vmatprep.subr.mxu0 %v2462
    %2870 = vmatpush1.msra.mxu0 %v2461
    %2871 = vmatprep.subr.mxu0 %v2464
    %2872 = vmatpush1.msra.mxu0 %v2463
    %2873 = vmatprep.subr.mxu0 %v2466
    %2874 = vmatpush1.msra.mxu0 %v2465
    %2875 = vmatprep.subr.mxu0 %v2468
    %2876 = vmatpush1.msra.mxu0 %v2467
    %2877 = vmatprep.subr.mxu0 %v2470
    %2878 = vmatpush1.msra.mxu0 %v2469
    %2879 = vmatprep.subr.mxu0 %v2472
    %2880 = vmatpush1.msra.mxu0 %v2471
    %2881 = vmatprep.subr.mxu0 %v2474
    %2882 = vmatpush1.msra.mxu0 %v2473
    %2883 = vmatprep.subr.mxu0 %v2476
    %2884 = vmatpush1.msra.mxu0 %v2475
    %2885 = vmatprep.subr.mxu0 %v2478
    %2886 = vmatpush1.msra.mxu0 %v2477
    %2887 = vmatprep.subr.mxu0 %v2480
    %2888 = vmatpush1.msra.mxu0 %v2479
    %2889 = vmatprep.subr.mxu0 %v2482
    %2890 = vmatpush1.msra.mxu0 %v2481
    %2891 = vmatprep.subr.mxu0 %v2484
    %2892 = vmatpush1.msra.mxu0 %v2483
    %2893 = vmatprep.subr.mxu0 %v2486
    %2894 = vmatpush1.msra.mxu0 %v2485
    %2895 = vmatprep.subr.mxu0 %v2488
    %2896 = vmatpush1.msra.mxu0 %v2487
    %2897 = vmatprep.subr.mxu0 %v2490
    %2898 = vmatpush1.msra.mxu0 %v2489
    %2899 = vmatprep.subr.mxu0 %v2492
    %2900 = vmatpush1.msra.mxu0 %v2491
    %2901 = vmatprep.subr.mxu0 0.0
    %2902 = vmatpush1.msra.mxu0 0.0
    %2903 = vmatprep.subr.mxu0 0.0
    %2904 = vmatpush1.msra.mxu0 0.0
    %2905 = vmatprep.subr.mxu0 0.0
    %2906 = vmatpush1.msra.mxu0 0.0
    %2907 = vmatprep.subr.mxu0 0.0
    %2908 = vmatpush1.msra.mxu0 0.0
    %2909 = vmatprep.mubr.f32.mxu0 %v2843
    %2910 = vmatmul.mubr.f32.gmra.mrb[0].mxu0 %v2838
    %v2911 = vpop.f32.mrb[0].mxu0
    %v2912 = vadd.f32 0.0, %v2911
    %v2913 = vpop.f32.mrb[0].mxu0
    %v2914 = vadd.f32 0.0, %v2913
    %2915 = vdwg.mxu0
    %v2916 = vadd.f32 %v2766, %v2912
    %v2917 = vadd.f32 %v2767, %v2914
    %v2919 = vsel %vm2600, %v2380, 0
    %2921 = vmatprep.subr.mxu0 %v2375
    %2922 = vmatpush1.msra.mxu0 %v2374
    %2923 = vmatprep.subr.mxu0 %v2608
    %2924 = vmatpush1.msra.mxu0 %v2605
    %2925 = vmatprep.subr.mxu0 0.0
    %2926 = vmatpush1.msra.mxu0 0.0
    %2927 = vmatprep.subr.mxu0 0.0
    %2928 = vmatpush1.msra.mxu0 0.0
    %2929 = vmatprep.subr.mxu0 0.0
    %2930 = vmatpush1.msra.mxu0 0.0
    %2931 = vmatprep.subr.mxu0 0.0
    %2932 = vmatpush1.msra.mxu0 0.0
    %2933 = vmatprep.subr.mxu0 0.0
    %2934 = vmatpush1.msra.mxu0 0.0
    %2935 = vmatprep.subr.mxu0 0.0
    %2936 = vmatpush1.msra.mxu0 0.0
    %2937 = vmatprep.subr.mxu0 0.0
    %2938 = vmatpush1.msra.mxu0 0.0
    %2939 = vmatprep.subr.mxu0 0.0
    %2940 = vmatpush1.msra.mxu0 0.0
    %2941 = vmatprep.subr.mxu0 0.0
    %2942 = vmatpush1.msra.mxu0 0.0
    %2943 = vmatprep.subr.mxu0 0.0
    %2944 = vmatpush1.msra.mxu0 0.0
    %2945 = vmatprep.subr.mxu0 0.0
    %2946 = vmatpush1.msra.mxu0 0.0
    %2947 = vmatprep.subr.mxu0 0.0
    %2948 = vmatpush1.msra.mxu0 0.0
    %2949 = vmatprep.subr.mxu0 0.0
    %2950 = vmatpush1.msra.mxu0 0.0
    %2951 = vmatprep.subr.mxu0 0.0
    %2952 = vmatpush1.msra.mxu0 0.0
    %2953 = vmatprep.subr.mxu0 0.0
    %2954 = vmatpush1.msra.mxu0 0.0
    %2955 = vmatprep.subr.mxu0 0.0
    %2956 = vmatpush1.msra.mxu0 0.0
    %2957 = vmatprep.subr.mxu0 0.0
    %2958 = vmatpush1.msra.mxu0 0.0
    %2959 = vmatprep.subr.mxu0 0.0
    %2960 = vmatpush1.msra.mxu0 0.0
    %2961 = vmatprep.subr.mxu0 0.0
    %2962 = vmatpush1.msra.mxu0 0.0
    %2963 = vmatprep.subr.mxu0 0.0
    %2964 = vmatpush1.msra.mxu0 0.0
    %2965 = vmatprep.subr.mxu0 0.0
    %2966 = vmatpush1.msra.mxu0 0.0
    %2967 = vmatprep.subr.mxu0 0.0
    %2968 = vmatpush1.msra.mxu0 0.0
    %2969 = vmatprep.subr.mxu0 0.0
    %2970 = vmatpush1.msra.mxu0 0.0
    %2971 = vmatprep.subr.mxu0 0.0
    %2972 = vmatpush1.msra.mxu0 0.0
    %2973 = vmatprep.subr.mxu0 0.0
    %2974 = vmatpush1.msra.mxu0 0.0
    %2975 = vmatprep.subr.mxu0 0.0
    %2976 = vmatpush1.msra.mxu0 0.0
    %2977 = vmatprep.subr.mxu0 0.0
    %2978 = vmatpush1.msra.mxu0 0.0
    %2979 = vmatprep.subr.mxu0 0.0
    %2980 = vmatpush1.msra.mxu0 0.0
    %2981 = vmatprep.subr.mxu0 0.0
    %2982 = vmatpush1.msra.mxu0 0.0
    %2983 = vmatprep.subr.mxu0 0.0
    %2984 = vmatpush1.msra.mxu0 0.0
    %2985 = vmatprep.mubr.f32.mxu0 0.0
    %2986 = vmatmul.mubr.f32.gmra.mrb[0].mxu0 %v2919
    %v2987 = vpop.f32.mrb[0].mxu0
    %v2988 = vadd.f32 0.0, %v2987
    %v2989 = vpop.f32.mrb[0].mxu0
    %v2990 = vadd.f32 0.0, %v2989
    %2991 = vdwg.mxu0
    %v2993 = vsel %vm850, %v2990, 0
    %2995 = vmatprep.subr.mxu0 %v2494
    %2996 = vmatpush1.msra.mxu0 %v2493
    %2997 = vmatprep.subr.mxu0 %v2496
    %2998 = vmatpush1.msra.mxu0 %v2495
    %2999 = vmatprep.subr.mxu0 %v2498
    %3000 = vmatpush1.msra.mxu0 %v2497
    %3001 = vmatprep.subr.mxu0 %v2500
    %3002 = vmatpush1.msra.mxu0 %v2499
    %3003 = vmatprep.subr.mxu0 %v2502
    %3004 = vmatpush1.msra.mxu0 %v2501
    %3005 = vmatprep.subr.mxu0 %v2504
    %3006 = vmatpush1.msra.mxu0 %v2503
    %3007 = vmatprep.subr.mxu0 %v2506
    %3008 = vmatpush1.msra.mxu0 %v2505
    %3009 = vmatprep.subr.mxu0 %v2508
    %3010 = vmatpush1.msra.mxu0 %v2507
    %3011 = vmatprep.subr.mxu0 %v2510
    %3012 = vmatpush1.msra.mxu0 %v2509
    %3013 = vmatprep.subr.mxu0 %v2512
    %3014 = vmatpush1.msra.mxu0 %v2511
    %3015 = vmatprep.subr.mxu0 %v2514
    %3016 = vmatpush1.msra.mxu0 %v2513
    %3017 = vmatprep.subr.mxu0 %v2516
    %3018 = vmatpush1.msra.mxu0 %v2515
    %3019 = vmatprep.subr.mxu0 %v2518
    %3020 = vmatpush1.msra.mxu0 %v2517
    %3021 = vmatprep.subr.mxu0 %v2520
    %3022 = vmatpush1.msra.mxu0 %v2519
    %3023 = vmatprep.subr.mxu0 %v2522
    %3024 = vmatpush1.msra.mxu0 %v2521
    %3025 = vmatprep.subr.mxu0 %v2524
    %3026 = vmatpush1.msra.mxu0 %v2523
    %3027 = vmatprep.subr.mxu0 %v2526
    %3028 = vmatpush1.msra.mxu0 %v2525
    %3029 = vmatprep.subr.mxu0 %v2528
    %3030 = vmatpush1.msra.mxu0 %v2527
    %3031 = vmatprep.subr.mxu0 %v2530
    %3032 = vmatpush1.msra.mxu0 %v2529
    %3033 = vmatprep.subr.mxu0 %v2532
    %3034 = vmatpush1.msra.mxu0 %v2531
    %3035 = vmatprep.subr.mxu0 %v2534
    %3036 = vmatpush1.msra.mxu0 %v2533
    %3037 = vmatprep.subr.mxu0 %v2536
    %3038 = vmatpush1.msra.mxu0 %v2535
    %3039 = vmatprep.subr.mxu0 %v2538
    %3040 = vmatpush1.msra.mxu0 %v2537
    %3041 = vmatprep.subr.mxu0 %v2540
    %3042 = vmatpush1.msra.mxu0 %v2539
    %3043 = vmatprep.subr.mxu0 %v2542
    %3044 = vmatpush1.msra.mxu0 %v2541
    %3045 = vmatprep.subr.mxu0 %v2544
    %3046 = vmatpush1.msra.mxu0 %v2543
    %3047 = vmatprep.subr.mxu0 %v2546
    %3048 = vmatpush1.msra.mxu0 %v2545
    %3049 = vmatprep.subr.mxu0 %v2548
    %3050 = vmatpush1.msra.mxu0 %v2547
    %3051 = vmatprep.subr.mxu0 0.0
    %3052 = vmatpush1.msra.mxu0 0.0
    %3053 = vmatprep.subr.mxu0 0.0
    %3054 = vmatpush1.msra.mxu0 0.0
    %3055 = vmatprep.subr.mxu0 0.0
    %3056 = vmatpush1.msra.mxu0 0.0
    %3057 = vmatprep.subr.mxu0 0.0
    %3058 = vmatpush1.msra.mxu0 0.0
    %3059 = vmatprep.mubr.f32.mxu0 %v2993
    %3060 = vmatmul.mubr.f32.gmra.mrb[0].mxu0 %v2988
    %v3061 = vpop.f32.mrb[0].mxu0
    %v3062 = vadd.f32 0.0, %v3061
    %v3063 = vpop.f32.mrb[0].mxu0
    %v3064 = vadd.f32 0.0, %v3063
    %3065 = vdwg.mxu0
    %v3066 = vadd.f32 %v2916, %v3062
    %v3067 = vadd.f32 %v2917, %v3064
    %vm3068 = vcmp.ge.f32.partialorder %v3066, 0.0
    %vm3069 = vcmp.ge.f32.partialorder %v3067, 0.0
    %v3070 = vmul.f32 %v3066, 0.01
    %v3071 = vmul.f32 %v3067, 0.01
    %v3072 = vsel %vm3068, %v3066, %v3070
    %v3073 = vsel %vm3069, %v3067, %v3071
    %v3074 = vrot.slane %v3072, 4
    %v3075 = vadd.f32 %v3072, %v3074
    %v3076 = vrot.slane %v3075, 2
    %v3077 = vadd.f32 %v3075, %v3076
    %v3078 = vrot.slane %v3077, 1
    %v3079 = vadd.f32 %v3077, %v3078
    %v3080 = vrot.slane %v3073, 4
    %v3081 = vadd.f32 %v3073, %v3080
    %v3082 = vrot.slane %v3081, 2
    %v3083 = vadd.f32 %v3081, %v3082
    %v3084 = vrot.slane %v3083, 1
    %v3085 = vadd.f32 %v3083, %v3084
    %3086 = vmatprep.subr.mxu0 0.0
    %3087 = vmatpush1.msra.mxu0 %v2550
    %3088 = vmatprep.subr.mxu0 0.0
    %3089 = vmatpush1.msra.mxu0 %v2551
    %3090 = vmatprep.subr.mxu0 0.0
    %3091 = vmatpush1.msra.mxu0 %v2552
    %3092 = vmatprep.subr.mxu0 0.0
    %3093 = vmatpush1.msra.mxu0 %v2553
    %3094 = vmatprep.subr.mxu0 0.0
    %3095 = vmatpush1.msra.mxu0 %v2554
    %3096 = vmatprep.subr.mxu0 0.0
    %3097 = vmatpush1.msra.mxu0 %v2555
    %3098 = vmatprep.subr.mxu0 0.0
    %3099 = vmatpush1.msra.mxu0 %v2556
    %3100 = vmatprep.subr.mxu0 0.0
    %3101 = vmatpush1.msra.mxu0 %v2557
    %3102 = vmatprep.subr.mxu0 0.0
    %3103 = vmatpush1.msra.mxu0 %v2558
    %3104 = vmatprep.subr.mxu0 0.0
    %3105 = vmatpush1.msra.mxu0 %v2559
    %3106 = vmatprep.subr.mxu0 0.0
    %3107 = vmatpush1.msra.mxu0 %v2560
    %3108 = vmatprep.subr.mxu0 0.0
    %3109 = vmatpush1.msra.mxu0 %v2561
    %3110 = vmatprep.subr.mxu0 0.0
    %3111 = vmatpush1.msra.mxu0 %v2562
    %3112 = vmatprep.subr.mxu0 0.0
    %3113 = vmatpush1.msra.mxu0 %v2563
    %3114 = vmatprep.subr.mxu0 0.0
    %3115 = vmatpush1.msra.mxu0 %v2564
    %3116 = vmatprep.subr.mxu0 0.0
    %3117 = vmatpush1.msra.mxu0 %v2565
    %3118 = vmatprep.subr.mxu0 0.0
    %3119 = vmatpush1.msra.mxu0 %v2566
    %3120 = vmatprep.subr.mxu0 0.0
    %3121 = vmatpush1.msra.mxu0 %v2567
    %3122 = vmatprep.subr.mxu0 0.0
    %3123 = vmatpush1.msra.mxu0 %v2568
    %3124 = vmatprep.subr.mxu0 0.0
    %3125 = vmatpush1.msra.mxu0 %v2569
    %3126 = vmatprep.subr.mxu0 0.0
    %3127 = vmatpush1.msra.mxu0 %v2570
    %3128 = vmatprep.subr.mxu0 0.0
    %3129 = vmatpush1.msra.mxu0 %v2571
    %3130 = vmatprep.subr.mxu0 0.0
    %3131 = vmatpush1.msra.mxu0 %v2572
    %3132 = vmatprep.subr.mxu0 0.0
    %3133 = vmatpush1.msra.mxu0 %v2573
    %3134 = vmatprep.subr.mxu0 0.0
    %3135 = vmatpush1.msra.mxu0 %v2574
    %3136 = vmatprep.subr.mxu0 0.0
    %3137 = vmatpush1.msra.mxu0 %v2575
    %3138 = vmatprep.subr.mxu0 0.0
    %3139 = vmatpush1.msra.mxu0 %v2576
    %3140 = vmatprep.subr.mxu0 0.0
    %3141 = vmatpush1.msra.mxu0 %v2577
    %3142 = vmatprep.subr.mxu0 0.0
    %3143 = vmatpush1.msra.mxu0 %v2578
    %3144 = vmatprep.subr.mxu0 0.0
    %3145 = vmatpush1.msra.mxu0 %v2579
    %3146 = vmatprep.subr.mxu0 0.0
    %3147 = vmatpush1.msra.mxu0 %v2580
    %3148 = vmatprep.subr.mxu0 0.0
    %3149 = vmatpush1.msra.mxu0 %v2581
    %3150 = vmatprep.mubr.f32.mxu0 %v3085
    %3151 = vmatmul.mubr.f32.gmra.mrb[0].mxu0 %v3079
    %v3152 = vpop.f32.mrb[0].mxu0
    %v3153 = vadd.f32 0.0, %v3152
    %v3154 = vpop.f32.mrb[0].mxu0
    %3155 = vdwg.mxu0
    %v3156 = vmul.f32 %v3153, 0.03125
    %vm3157 = vcmask 523264
    %v3159 = vsel %vm3157, %v3156, 0
    %3161 = vmatprep.subr.mxu0 %v2583
    %3162 = vmatpush1.msra.mxu0 %v2582
    %3163 = vmatprep.subr.mxu0 %v2585
    %3164 = vmatpush1.msra.mxu0 %v2584
    %3165 = vmatprep.subr.mxu0 %v2587
    %3166 = vmatpush1.msra.mxu0 %v2586
    %3167 = vmatprep.subr.mxu0 %v2589
    %3168 = vmatpush1.msra.mxu0 %v2588
    %3169 = vmatprep.subr.mxu0 %v2591
    %3170 = vmatpush1.msra.mxu0 %v2590
    %3171 = vmatprep.subr.mxu0 %v2593
    %3172 = vmatpush1.msra.mxu0 %v2592
    %3173 = vmatprep.subr.mxu0 %v2595
    %3174 = vmatpush1.msra.mxu0 %v2594
    %3175 = vmatprep.subr.mxu0 %v2597
    %3176 = vmatpush1.msra.mxu0 %v2596
    %3177 = vmatprep.subr.mxu0 0.0
    %3178 = vmatpush1.msra.mxu0 0.0
    %3179 = vmatprep.subr.mxu0 0.0
    %3180 = vmatpush1.msra.mxu0 0.0
    %3181 = vmatprep.subr.mxu0 0.0
    %3182 = vmatpush1.msra.mxu0 0.0
    %3183 = vmatprep.subr.mxu0 0.0
    %3184 = vmatpush1.msra.mxu0 0.0
    %3185 = vmatprep.subr.mxu0 0.0
    %3186 = vmatpush1.msra.mxu0 0.0
    %3187 = vmatprep.subr.mxu0 0.0
    %3188 = vmatpush1.msra.mxu0 0.0
    %3189 = vmatprep.subr.mxu0 0.0
    %3190 = vmatpush1.msra.mxu0 0.0
    %3191 = vmatprep.subr.mxu0 0.0
    %3192 = vmatpush1.msra.mxu0 0.0
    %3193 = vmatprep.subr.mxu0 0.0
    %3194 = vmatpush1.msra.mxu0 0.0
    %3195 = vmatprep.subr.mxu0 0.0
    %3196 = vmatpush1.msra.mxu0 0.0
    %3197 = vmatprep.subr.mxu0 0.0
    %3198 = vmatpush1.msra.mxu0 0.0
    %3199 = vmatprep.subr.mxu0 0.0
    %3200 = vmatpush1.msra.mxu0 0.0
    %3201 = vmatprep.subr.mxu0 0.0
    %3202 = vmatpush1.msra.mxu0 0.0
    %3203 = vmatprep.subr.mxu0 0.0
    %3204 = vmatpush1.msra.mxu0 0.0
    %3205 = vmatprep.subr.mxu0 0.0
    %3206 = vmatpush1.msra.mxu0 0.0
    %3207 = vmatprep.subr.mxu0 0.0
    %3208 = vmatpush1.msra.mxu0 0.0
    %3209 = vmatprep.subr.mxu0 0.0
    %3210 = vmatpush1.msra.mxu0 0.0
    %3211 = vmatprep.subr.mxu0 0.0
    %3212 = vmatpush1.msra.mxu0 0.0
    %3213 = vmatprep.subr.mxu0 0.0
    %3214 = vmatpush1.msra.mxu0 0.0
    %3215 = vmatprep.subr.mxu0 0.0
    %3216 = vmatpush1.msra.mxu0 0.0
    %3217 = vmatprep.subr.mxu0 0.0
    %3218 = vmatpush1.msra.mxu0 0.0
    %3219 = vmatprep.subr.mxu0 0.0
    %3220 = vmatpush1.msra.mxu0 0.0
    %3221 = vmatprep.subr.mxu0 0.0
    %3222 = vmatpush1.msra.mxu0 0.0
    %3223 = vmatprep.subr.mxu0 0.0
    %3224 = vmatpush1.msra.mxu0 0.0
    %3225 = vmatprep.mubr.f32.mxu0 0.0
    %3226 = vmatmul.mubr.f32.gmra.mrb[0].mxu0 %v3159
    %v3227 = vpop.f32.mrb[0].mxu0
    %v3228 = vadd.f32 0.0, %v3227
    %v3229 = vpop.f32.mrb[0].mxu0
    %v3230 = vadd.f32 0.0, %v3229
    %3231 = vdwg.mxu0
    %v3232 = vlaneseq
    %v3233 = vshrl.u32 %v3232, 7
    %v3234 = vsub.s32 0, %v3233
    %v3235 = vrot.slane %v3228, %v3234
    %v3236 = vlaneseq
    %v3237 = vshrl.u32 %v3236, 7
    %v3238 = vsub.s32 0, %v3237
    %v3239 = vrot.slane %v3230, %v3238
    %v3240 = vsub.f32 %v3072, %v3235
    %v3241 = vsub.f32 %v3073, %v3239
    %v3242 = vmul.f32 %v3240, %v3240
    %v3243 = vmul.f32 %v3241, %v3241
    %v3244 = vrot.slane %v3242, 4
    %v3245 = vadd.f32 %v3242, %v3244
    %v3246 = vrot.slane %v3245, 2
    %v3247 = vadd.f32 %v3245, %v3246
    %v3248 = vrot.slane %v3247, 1
    %v3249 = vadd.f32 %v3247, %v3248
    %v3250 = vrot.slane %v3243, 4
    %v3251 = vadd.f32 %v3243, %v3250
    %v3252 = vrot.slane %v3251, 2
    %v3253 = vadd.f32 %v3251, %v3252
    %v3254 = vrot.slane %v3253, 1
    %v3255 = vadd.f32 %v3253, %v3254
    %3256 = vmatprep.subr.mxu0 0.0
    %3257 = vmatpush1.msra.mxu0 %v2550
    %3258 = vmatprep.subr.mxu0 0.0
    %3259 = vmatpush1.msra.mxu0 %v2551
    %3260 = vmatprep.subr.mxu0 0.0
    %3261 = vmatpush1.msra.mxu0 %v2552
    %3262 = vmatprep.subr.mxu0 0.0
    %3263 = vmatpush1.msra.mxu0 %v2553
    %3264 = vmatprep.subr.mxu0 0.0
    %3265 = vmatpush1.msra.mxu0 %v2554
    %3266 = vmatprep.subr.mxu0 0.0
    %3267 = vmatpush1.msra.mxu0 %v2555
    %3268 = vmatprep.subr.mxu0 0.0
    %3269 = vmatpush1.msra.mxu0 %v2556
    %3270 = vmatprep.subr.mxu0 0.0
    %3271 = vmatpush1.msra.mxu0 %v2557
    %3272 = vmatprep.subr.mxu0 0.0
    %3273 = vmatpush1.msra.mxu0 %v2558
    %3274 = vmatprep.subr.mxu0 0.0
    %3275 = vmatpush1.msra.mxu0 %v2559
    %3276 = vmatprep.subr.mxu0 0.0
    %3277 = vmatpush1.msra.mxu0 %v2560
    %3278 = vmatprep.subr.mxu0 0.0
    %3279 = vmatpush1.msra.mxu0 %v2561
    %3280 = vmatprep.subr.mxu0 0.0
    %3281 = vmatpush1.msra.mxu0 %v2562
    %3282 = vmatprep.subr.mxu0 0.0
    %3283 = vmatpush1.msra.mxu0 %v2563
    %3284 = vmatprep.subr.mxu0 0.0
    %3285 = vmatpush1.msra.mxu0 %v2564
    %3286 = vmatprep.subr.mxu0 0.0
    %3287 = vmatpush1.msra.mxu0 %v2565
    %3288 = vmatprep.subr.mxu0 0.0
    %3289 = vmatpush1.msra.mxu0 %v2566
    %3290 = vmatprep.subr.mxu0 0.0
    %3291 = vmatpush1.msra.mxu0 %v2567
    %3292 = vmatprep.subr.mxu0 0.0
    %3293 = vmatpush1.msra.mxu0 %v2568
    %3294 = vmatprep.subr.mxu0 0.0
    %3295 = vmatpush1.msra.mxu0 %v2569
    %3296 = vmatprep.subr.mxu0 0.0
    %3297 = vmatpush1.msra.mxu0 %v2570
    %3298 = vmatprep.subr.mxu0 0.0
    %3299 = vmatpush1.msra.mxu0 %v2571
    %3300 = vmatprep.subr.mxu0 0.0
    %3301 = vmatpush1.msra.mxu0 %v2572
    %3302 = vmatprep.subr.mxu0 0.0
    %3303 = vmatpush1.msra.mxu0 %v2573
    %3304 = vmatprep.subr.mxu0 0.0
    %3305 = vmatpush1.msra.mxu0 %v2574
    %3306 = vmatprep.subr.mxu0 0.0
    %3307 = vmatpush1.msra.mxu0 %v2575
    %3308 = vmatprep.subr.mxu0 0.0
    %3309 = vmatpush1.msra.mxu0 %v2576
    %3310 = vmatprep.subr.mxu0 0.0
    %3311 = vmatpush1.msra.mxu0 %v2577
    %3312 = vmatprep.subr.mxu0 0.0
    %3313 = vmatpush1.msra.mxu0 %v2578
    %3314 = vmatprep.subr.mxu0 0.0
    %3315 = vmatpush1.msra.mxu0 %v2579
    %3316 = vmatprep.subr.mxu0 0.0
    %3317 = vmatpush1.msra.mxu0 %v2580
    %3318 = vmatprep.subr.mxu0 0.0
    %3319 = vmatpush1.msra.mxu0 %v2581
    %3320 = vmatprep.mubr.f32.mxu0 %v3255
    %3321 = vmatmul.mubr.f32.gmra.mrb[0].mxu0 %v3249
    %v3322 = vpop.f32.mrb[0].mxu0
    %v3323 = vadd.f32 0.0, %v3322
    %v3324 = vpop.f32.mrb[0].mxu0
    %3325 = vdwg.mxu0
    %v3326 = vmul.f32 %v3323, 0.03125
    %v3327 = vadd.f32 %v3326, 1e-05
    %v3328 = vrsqrt.pop %v3327
    %v3329 = vmul.f32 %v2598, %v3328
    %v3331 = vsel %vm3157, %v3329, 0
    %3333 = vmatprep.subr.mxu0 %v2583
    %3334 = vmatpush1.msra.mxu0 %v2582
    %3335 = vmatprep.subr.mxu0 %v2585
    %3336 = vmatpush1.msra.mxu0 %v2584
    %3337 = vmatprep.subr.mxu0 %v2587
    %3338 = vmatpush1.msra.mxu0 %v2586
    %3339 = vmatprep.subr.mxu0 %v2589
    %3340 = vmatpush1.msra.mxu0 %v2588
    %3341 = vmatprep.subr.mxu0 %v2591
    %3342 = vmatpush1.msra.mxu0 %v2590
    %3343 = vmatprep.subr.mxu0 %v2593
    %3344 = vmatpush1.msra.mxu0 %v2592
    %3345 = vmatprep.subr.mxu0 %v2595
    %3346 = vmatpush1.msra.mxu0 %v2594
    %3347 = vmatprep.subr.mxu0 %v2597
    %3348 = vmatpush1.msra.mxu0 %v2596
    %3349 = vmatprep.subr.mxu0 0.0
    %3350 = vmatpush1.msra.mxu0 0.0
    %3351 = vmatprep.subr.mxu0 0.0
    %3352 = vmatpush1.msra.mxu0 0.0
    %3353 = vmatprep.subr.mxu0 0.0
    %3354 = vmatpush1.msra.mxu0 0.0
    %3355 = vmatprep.subr.mxu0 0.0
    %3356 = vmatpush1.msra.mxu0 0.0
    %3357 = vmatprep.subr.mxu0 0.0
    %3358 = vmatpush1.msra.mxu0 0.0
    %3359 = vmatprep.subr.mxu0 0.0
    %3360 = vmatpush1.msra.mxu0 0.0
    %3361 = vmatprep.subr.mxu0 0.0
    %3362 = vmatpush1.msra.mxu0 0.0
    %3363 = vmatprep.subr.mxu0 0.0
    %3364 = vmatpush1.msra.mxu0 0.0
    %3365 = vmatprep.subr.mxu0 0.0
    %3366 = vmatpush1.msra.mxu0 0.0
    %3367 = vmatprep.subr.mxu0 0.0
    %3368 = vmatpush1.msra.mxu0 0.0
    %3369 = vmatprep.subr.mxu0 0.0
    %3370 = vmatpush1.msra.mxu0 0.0
    %3371 = vmatprep.subr.mxu0 0.0
    %3372 = vmatpush1.msra.mxu0 0.0
    %3373 = vmatprep.subr.mxu0 0.0
    %3374 = vmatpush1.msra.mxu0 0.0
    %3375 = vmatprep.subr.mxu0 0.0
    %3376 = vmatpush1.msra.mxu0 0.0
    %3377 = vmatprep.subr.mxu0 0.0
    %3378 = vmatpush1.msra.mxu0 0.0
    %3379 = vmatprep.subr.mxu0 0.0
    %3380 = vmatpush1.msra.mxu0 0.0
    %3381 = vmatprep.subr.mxu0 0.0
    %3382 = vmatpush1.msra.mxu0 0.0
    %3383 = vmatprep.subr.mxu0 0.0
    %3384 = vmatpush1.msra.mxu0 0.0
    %3385 = vmatprep.subr.mxu0 0.0
    %3386 = vmatpush1.msra.mxu0 0.0
    %3387 = vmatprep.subr.mxu0 0.0
    %3388 = vmatpush1.msra.mxu0 0.0
    %3389 = vmatprep.subr.mxu0 0.0
    %3390 = vmatpush1.msra.mxu0 0.0
    %3391 = vmatprep.subr.mxu0 0.0
    %3392 = vmatpush1.msra.mxu0 0.0
    %3393 = vmatprep.subr.mxu0 0.0
    %3394 = vmatpush1.msra.mxu0 0.0
    %3395 = vmatprep.subr.mxu0 0.0
    %3396 = vmatpush1.msra.mxu0 0.0
    %3397 = vmatprep.mubr.f32.mxu0 0.0
    %3398 = vmatmul.mubr.f32.gmra.mrb[0].mxu0 %v3331
    %v3399 = vpop.f32.mrb[0].mxu0
    %v3400 = vadd.f32 0.0, %v3399
    %v3401 = vpop.f32.mrb[0].mxu0
    %v3402 = vadd.f32 0.0, %v3401
    %3403 = vdwg.mxu0
    %v3404 = vlaneseq
    %v3405 = vshrl.u32 %v3404, 7
    %v3406 = vsub.s32 0, %v3405
    %v3407 = vrot.slane %v3400, %v3406
    %v3408 = vlaneseq
    %v3409 = vshrl.u32 %v3408, 7
    %v3410 = vsub.s32 0, %v3409
    %v3411 = vrot.slane %v3402, %v3410
    %v3412 = vmul.f32 %v3240, %v3407
    %v3413 = vmul.f32 %v3241, %v3411
    %v3415 = vlaneseq
    %v3416 = vshrl.u32 %v3415, 7
    %v3417 = vsub.s32 0, %v3416
    %v3418 = vrot.slane %v2599, %v3417
    %v3419 = vlaneseq
    %v3420 = vshrl.u32 %v3419, 7
    %v3421 = vsub.s32 1, %v3420
    %v3422 = vrot.slane %v2599, %v3421
    %v3425 = vadd.f32 %v3412, %v3418
    %v3426 = vadd.f32 %v3413, %v3422
    %v3427 = vld [vmem:[%s22] sm:$0x3]
    %v3428 = vld [vmem:[%s22 + $0x2] sm:$0x3]
    %v3429 = vld [vmem:[%s22 + $0x4] sm:$0x3]
    %v3430 = vld [vmem:[%s22 + $0x6] sm:$0x3]
    %v3431 = vld [vmem:[%s23] sm:$0xff]
    %v3432 = vld [vmem:[%s23 + $0x8] sm:$0xff]
    %v3433 = vld [vmem:[%s23 + $0x10] sm:$0xff]
    %v3434 = vld [vmem:[%s23 + $0x18] sm:$0xff]
    %v3435 = vld [vmem:[%s23 + $0x20] sm:$0xff]
    %v3436 = vld [vmem:[%s23 + $0x28] sm:$0xff]
    %v3437 = vld [vmem:[%s23 + $0x30] sm:$0xff]
    %v3438 = vld [vmem:[%s23 + $0x38] sm:$0xff]
    %v3439 = vld [vmem:[%s23 + $0x40] sm:$0xff]
    %v3440 = vld [vmem:[%s23 + $0x48] sm:$0xff]
    %v3441 = vld [vmem:[%s23 + $0x50] sm:$0xff]
    %v3442 = vld [vmem:[%s23 + $0x58] sm:$0xff]
    %v3443 = vld [vmem:[%s23 + $0x60] sm:$0xff]
    %v3444 = vld [vmem:[%s23 + $0x68] sm:$0xff]
    %v3445 = vld [vmem:[%s23 + $0x70] sm:$0xff]
    %v3446 = vld [vmem:[%s23 + $0x78] sm:$0xff]
    %v3447 = vld [vmem:[%s23 + $0x80] sm:$0xff]
    %v3448 = vld [vmem:[%s23 + $0x88] sm:$0xff]
    %v3449 = vld [vmem:[%s23 + $0x90] sm:$0xff]
    %v3450 = vld [vmem:[%s23 + $0x98] sm:$0xff]
    %v3451 = vld [vmem:[%s23 + $0xa0] sm:$0xff]
    %v3452 = vld [vmem:[%s23 + $0xa8] sm:$0xff]
    %v3453 = vld [vmem:[%s23 + $0xb0] sm:$0xff]
    %v3454 = vld [vmem:[%s23 + $0xb8] sm:$0xff]
    %v3455 = vld [vmem:[%s23 + $0xc0] sm:$0xff]
    %v3456 = vld [vmem:[%s23 + $0xc8] sm:$0xff]
    %v3457 = vld [vmem:[%s23 + $0xd0] sm:$0xff]
    %v3458 = vld [vmem:[%s23 + $0xd8] sm:$0xff]
    %v3459 = vld [vmem:[%s23 + $0xe0] sm:$0xff]
    %v3460 = vld [vmem:[%s23 + $0xe8] sm:$0xff]
    %v3461 = vld [vmem:[%s23 + $0xf0] sm:$0xff]
    %v3462 = vld [vmem:[%s23 + $0xf8] sm:$0xff]
    %v3463 = vld [vmem:[%s23 + $0x100] sm:$0xff]
    %v3464 = vld [vmem:[%s23 + $0x108] sm:$0xff]
    %v3465 = vld [vmem:[%s23 + $0x110] sm:$0xff]
    %v3466 = vld [vmem:[%s23 + $0x118] sm:$0xff]
    %v3467 = vld [vmem:[%s23 + $0x120] sm:$0xff]
    %v3468 = vld [vmem:[%s23 + $0x128] sm:$0xff]
    %v3469 = vld [vmem:[%s23 + $0x130] sm:$0xff]
    %v3470 = vld [vmem:[%s23 + $0x138] sm:$0xff]
    %v3471 = vld [vmem:[%s23 + $0x140] sm:$0xff]
    %v3472 = vld [vmem:[%s23 + $0x148] sm:$0xff]
    %v3473 = vld [vmem:[%s23 + $0x150] sm:$0xff]
    %v3474 = vld [vmem:[%s23 + $0x158] sm:$0xff]
    %v3475 = vld [vmem:[%s23 + $0x160] sm:$0xff]
    %v3476 = vld [vmem:[%s23 + $0x168] sm:$0xff]
    %v3477 = vld [vmem:[%s23 + $0x170] sm:$0xff]
    %v3478 = vld [vmem:[%s23 + $0x178] sm:$0xff]
    %v3479 = vld [vmem:[%s23 + $0x180] sm:$0xff]
    %v3480 = vld [vmem:[%s23 + $0x188] sm:$0xff]
    %v3481 = vld [vmem:[%s23 + $0x190] sm:$0xff]
    %v3482 = vld [vmem:[%s23 + $0x198] sm:$0xff]
    %v3483 = vld [vmem:[%s23 + $0x1a0] sm:$0xff]
    %v3484 = vld [vmem:[%s23 + $0x1a8] sm:$0xff]
    %v3485 = vld [vmem:[%s23 + $0x1b0] sm:$0xff]
    %v3486 = vld [vmem:[%s23 + $0x1b8] sm:$0xff]
    %v3487 = vld [vmem:[%s23 + $0x1c0] sm:$0xff]
    %v3488 = vld [vmem:[%s23 + $0x1c8] sm:$0xff]
    %v3489 = vld [vmem:[%s23 + $0x1d0] sm:$0xff]
    %v3490 = vld [vmem:[%s23 + $0x1d8] sm:$0xff]
    %v3491 = vld [vmem:[%s23 + $0x1e0] sm:$0xff]
    %v3492 = vld [vmem:[%s23 + $0x1e8] sm:$0xff]
    %v3493 = vld [vmem:[%s23 + $0x1f0] sm:$0xff]
    %v3494 = vld [vmem:[%s23 + $0x1f8] sm:$0xff]
    %v3495 = vld [vmem:[%s23 + $0x200] sm:$0xff]
    %v3496 = vld [vmem:[%s23 + $0x208] sm:$0xff]
    %v3497 = vld [vmem:[%s23 + $0x210] sm:$0xff]
    %v3498 = vld [vmem:[%s23 + $0x218] sm:$0xff]
    %v3499 = vld [vmem:[%s23 + $0x220] sm:$0xff]
    %v3500 = vld [vmem:[%s23 + $0x228] sm:$0xff]
    %v3501 = vld [vmem:[%s23 + $0x230] sm:$0xff]
    %v3502 = vld [vmem:[%s23 + $0x238] sm:$0xff]
    %v3503 = vld [vmem:[%s23 + $0x240] sm:$0xff]
    %v3504 = vld [vmem:[%s23 + $0x248] sm:$0xff]
    %v3505 = vld [vmem:[%s23 + $0x250] sm:$0xff]
    %v3506 = vld [vmem:[%s23 + $0x258] sm:$0xff]
    %v3507 = vld [vmem:[%s23 + $0x260] sm:$0xff]
    %v3508 = vld [vmem:[%s23 + $0x268] sm:$0xff]
    %v3509 = vld [vmem:[%s23 + $0x270] sm:$0xff]
    %v3510 = vld [vmem:[%s23 + $0x278] sm:$0xff]
    %v3511 = vld [vmem:[%s23 + $0x280] sm:$0xff]
    %v3512 = vld [vmem:[%s23 + $0x288] sm:$0xff]
    %v3513 = vld [vmem:[%s23 + $0x290] sm:$0xff]
    %v3514 = vld [vmem:[%s23 + $0x298] sm:$0xff]
    %v3515 = vld [vmem:[%s23 + $0x2a0] sm:$0xff]
    %v3516 = vld [vmem:[%s23 + $0x2a8] sm:$0xff]
    %v3517 = vld [vmem:[%s23 + $0x2b0] sm:$0xff]
    %v3518 = vld [vmem:[%s23 + $0x2b8] sm:$0xff]
    %v3519 = vld [vmem:[%s23 + $0x2c0] sm:$0xff]
    %v3520 = vld [vmem:[%s23 + $0x2c8] sm:$0xff]
    %v3521 = vld [vmem:[%s23 + $0x2d0] sm:$0xff]
    %v3522 = vld [vmem:[%s23 + $0x2d8] sm:$0xff]
    %v3523 = vld [vmem:[%s23 + $0x2e0] sm:$0xff]
    %v3524 = vld [vmem:[%s23 + $0x2e8] sm:$0xff]
    %v3525 = vld [vmem:[%s23 + $0x2f0] sm:$0xff]
    %v3526 = vld [vmem:[%s23 + $0x2f8] sm:$0xff]
    %v3527 = vld [vmem:[%s23 + $0x300] sm:$0xff]
    %v3528 = vld [vmem:[%s23 + $0x308] sm:$0xff]
    %v3529 = vld [vmem:[%s23 + $0x310] sm:$0xff]
    %v3530 = vld [vmem:[%s23 + $0x318] sm:$0xff]
    %v3531 = vld [vmem:[%s23 + $0x320] sm:$0xff]
    %v3532 = vld [vmem:[%s23 + $0x328] sm:$0xff]
    %v3533 = vld [vmem:[%s23 + $0x330] sm:$0xff]
    %v3534 = vld [vmem:[%s23 + $0x338] sm:$0xff]
    %v3535 = vld [vmem:[%s23 + $0x340] sm:$0xff]
    %v3536 = vld [vmem:[%s23 + $0x348] sm:$0xff]
    %v3537 = vld [vmem:[%s23 + $0x350] sm:$0xff]
    %v3538 = vld [vmem:[%s23 + $0x358] sm:$0xff]
    %v3539 = vld [vmem:[%s23 + $0x360] sm:$0xff]
    %v3540 = vld [vmem:[%s23 + $0x368] sm:$0xff]
    %v3541 = vld [vmem:[%s23 + $0x370] sm:$0xff]
    %v3542 = vld [vmem:[%s23 + $0x378] sm:$0xff]
    %v3543 = vld [vmem:[%s23 + $0x380] sm:$0xff]
    %v3544 = vld [vmem:[%s23 + $0x388] sm:$0xff]
    %v3545 = vld [vmem:[%s23 + $0x390] sm:$0xff]
    %v3546 = vld [vmem:[%s23 + $0x398] sm:$0xff]
    %v3547 = vld [vmem:[%s23 + $0x3a0] sm:$0xff]
    %v3548 = vld [vmem:[%s23 + $0x3a8] sm:$0xff]
    %v3549 = vld [vmem:[%s23 + $0x3b0] sm:$0xff]
    %v3550 = vld [vmem:[%s23 + $0x3b8] sm:$0xff]
    %v3551 = vld [vmem:[%s23 + $0x3c0] sm:$0xff]
    %v3552 = vld [vmem:[%s23 + $0x3c8] sm:$0xff]
    %v3553 = vld [vmem:[%s23 + $0x3d0] sm:$0xff]
    %v3554 = vld [vmem:[%s23 + $0x3d8] sm:$0xff]
    %v3555 = vld [vmem:[%s23 + $0x3e0] sm:$0xff]
    %v3556 = vld [vmem:[%s23 + $0x3e8] sm:$0xff]
    %v3557 = vld [vmem:[%s23 + $0x3f0] sm:$0xff]
    %v3558 = vld [vmem:[%s23 + $0x3f8] sm:$0xff]
    %v3559 = vld [vmem:[%s24] sm:$0x1]
    %v3560 = vld [vmem:[%s25] sm:$0x3]
    %vm3561 = vcmask 64512
    %v3563 = vsel %vm3561, %v3427, 0
    %3565 = vmatprep.subr.mxu0 %v3426
    %3566 = vmatpush1.msra.mxu0 %v3425
    %3567 = vmatprep.subr.mxu0 0.0
    %3568 = vmatpush1.msra.mxu0 0.0
    %3569 = vmatprep.subr.mxu0 0.0
    %3570 = vmatpush1.msra.mxu0 0.0
    %3571 = vmatprep.subr.mxu0 0.0
    %3572 = vmatpush1.msra.mxu0 0.0
    %3573 = vmatprep.subr.mxu0 0.0
    %3574 = vmatpush1.msra.mxu0 0.0
    %3575 = vmatprep.subr.mxu0 0.0
    %3576 = vmatpush1.msra.mxu0 0.0
    %3577 = vmatprep.subr.mxu0 0.0
    %3578 = vmatpush1.msra.mxu0 0.0
    %3579 = vmatprep.subr.mxu0 0.0
    %3580 = vmatpush1.msra.mxu0 0.0
    %3581 = vmatprep.subr.mxu0 0.0
    %3582 = vmatpush1.msra.mxu0 0.0
    %3583 = vmatprep.subr.mxu0 0.0
    %3584 = vmatpush1.msra.mxu0 0.0
    %3585 = vmatprep.subr.mxu0 0.0
    %3586 = vmatpush1.msra.mxu0 0.0
    %3587 = vmatprep.subr.mxu0 0.0
    %3588 = vmatpush1.msra.mxu0 0.0
    %3589 = vmatprep.subr.mxu0 0.0
    %3590 = vmatpush1.msra.mxu0 0.0
    %3591 = vmatprep.subr.mxu0 0.0
    %3592 = vmatpush1.msra.mxu0 0.0
    %3593 = vmatprep.subr.mxu0 0.0
    %3594 = vmatpush1.msra.mxu0 0.0
    %3595 = vmatprep.subr.mxu0 0.0
    %3596 = vmatpush1.msra.mxu0 0.0
    %3597 = vmatprep.subr.mxu0 0.0
    %3598 = vmatpush1.msra.mxu0 0.0
    %3599 = vmatprep.subr.mxu0 0.0
    %3600 = vmatpush1.msra.mxu0 0.0
    %3601 = vmatprep.subr.mxu0 0.0
    %3602 = vmatpush1.msra.mxu0 0.0
    %3603 = vmatprep.subr.mxu0 0.0
    %3604 = vmatpush1.msra.mxu0 0.0
    %3605 = vmatprep.subr.mxu0 0.0
    %3606 = vmatpush1.msra.mxu0 0.0
    %3607 = vmatprep.subr.mxu0 0.0
    %3608 = vmatpush1.msra.mxu0 0.0
    %3609 = vmatprep.subr.mxu0 0.0
    %3610 = vmatpush1.msra.mxu0 0.0
    %3611 = vmatprep.subr.mxu0 0.0
    %3612 = vmatpush1.msra.mxu0 0.0
    %3613 = vmatprep.subr.mxu0 0.0
    %3614 = vmatpush1.msra.mxu0 0.0
    %3615 = vmatprep.subr.mxu0 0.0
    %3616 = vmatpush1.msra.mxu0 0.0
    %3617 = vmatprep.subr.mxu0 0.0
    %3618 = vmatpush1.msra.mxu0 0.0
    %3619 = vmatprep.subr.mxu0 0.0
    %3620 = vmatpush1.msra.mxu0 0.0
    %3621 = vmatprep.subr.mxu0 0.0
    %3622 = vmatpush1.msra.mxu0 0.0
    %3623 = vmatprep.subr.mxu0 0.0
    %3624 = vmatpush1.msra.mxu0 0.0
    %3625 = vmatprep.subr.mxu0 0.0
    %3626 = vmatpush1.msra.mxu0 0.0
    %3627 = vmatprep.subr.mxu0 0.0
    %3628 = vmatpush1.msra.mxu0 0.0
    %3629 = vmatprep.mubr.f32.mxu0 0.0
    %3630 = vmatmul.mubr.f32.gmra.mrb[0].mxu0 %v3563
    %v3631 = vpop.f32.mrb[0].mxu0
    %v3632 = vadd.f32 0.0, %v3631
    %v3633 = vpop.f32.mrb[0].mxu0
    %v3634 = vadd.f32 0.0, %v3633
    %3635 = vdwg.mxu0
    %3636 = vmatprep.subr.mxu0 0.0
    %3637 = vmatpush1.msra.mxu0 %v3431
    %3638 = vmatprep.subr.mxu0 0.0
    %3639 = vmatpush1.msra.mxu0 %v3432
    %3640 = vmatprep.subr.mxu0 0.0
    %3641 = vmatpush1.msra.mxu0 %v3433
    %3642 = vmatprep.subr.mxu0 0.0
    %3643 = vmatpush1.msra.mxu0 %v3434
    %3644 = vmatprep.subr.mxu0 0.0
    %3645 = vmatpush1.msra.mxu0 %v3435
    %3646 = vmatprep.subr.mxu0 0.0
    %3647 = vmatpush1.msra.mxu0 %v3436
    %3648 = vmatprep.subr.mxu0 0.0
    %3649 = vmatpush1.msra.mxu0 %v3437
    %3650 = vmatprep.subr.mxu0 0.0
    %3651 = vmatpush1.msra.mxu0 %v3438
    %3652 = vmatprep.subr.mxu0 0.0
    %3653 = vmatpush1.msra.mxu0 %v3439
    %3654 = vmatprep.subr.mxu0 0.0
    %3655 = vmatpush1.msra.mxu0 %v3440
    %3656 = vmatprep.subr.mxu0 0.0
    %3657 = vmatpush1.msra.mxu0 %v3441
    %3658 = vmatprep.subr.mxu0 0.0
    %3659 = vmatpush1.msra.mxu0 %v3442
    %3660 = vmatprep.subr.mxu0 0.0
    %3661 = vmatpush1.msra.mxu0 %v3443
    %3662 = vmatprep.subr.mxu0 0.0
    %3663 = vmatpush1.msra.mxu0 %v3444
    %3664 = vmatprep.subr.mxu0 0.0
    %3665 = vmatpush1.msra.mxu0 %v3445
    %3666 = vmatprep.subr.mxu0 0.0
    %3667 = vmatpush1.msra.mxu0 %v3446
    %3668 = vmatprep.subr.mxu0 0.0
    %3669 = vmatpush1.msra.mxu0 %v3447
    %3670 = vmatprep.subr.mxu0 0.0
    %3671 = vmatpush1.msra.mxu0 %v3448
    %3672 = vmatprep.subr.mxu0 0.0
    %3673 = vmatpush1.msra.mxu0 %v3449
    %3674 = vmatprep.subr.mxu0 0.0
    %3675 = vmatpush1.msra.mxu0 %v3450
    %3676 = vmatprep.subr.mxu0 0.0
    %3677 = vmatpush1.msra.mxu0 %v3451
    %3678 = vmatprep.subr.mxu0 0.0
    %3679 = vmatpush1.msra.mxu0 %v3452
    %3680 = vmatprep.subr.mxu0 0.0
    %3681 = vmatpush1.msra.mxu0 %v3453
    %3682 = vmatprep.subr.mxu0 0.0
    %3683 = vmatpush1.msra.mxu0 %v3454
    %3684 = vmatprep.subr.mxu0 0.0
    %3685 = vmatpush1.msra.mxu0 %v3455
    %3686 = vmatprep.subr.mxu0 0.0
    %3687 = vmatpush1.msra.mxu0 %v3456
    %3688 = vmatprep.subr.mxu0 0.0
    %3689 = vmatpush1.msra.mxu0 %v3457
    %3690 = vmatprep.subr.mxu0 0.0
    %3691 = vmatpush1.msra.mxu0 %v3458
    %3692 = vmatprep.subr.mxu0 0.0
    %3693 = vmatpush1.msra.mxu0 %v3459
    %3694 = vmatprep.subr.mxu0 0.0
    %3695 = vmatpush1.msra.mxu0 %v3460
    %3696 = vmatprep.subr.mxu0 0.0
    %3697 = vmatpush1.msra.mxu0 %v3461
    %3698 = vmatprep.subr.mxu0 0.0
    %3699 = vmatpush1.msra.mxu0 %v3462
    %3700 = vmatprep.mubr.f32.mxu0 %v3634
    %3701 = vmatmul.mubr.f32.gmra.mrb[0].mxu0 %v3632
    %v3702 = vpop.f32.mrb[0].mxu0
    %v3703 = vadd.f32 0.0, %v3702
    %v3704 = vpop.f32.mrb[0].mxu0
    %3705 = vdwg.mxu0
    %v3707 = vlaneseq
    %v3708 = vshrl.u32 %v3707, 7
    %v3709 = vsub.s32 0, %v3708
    %v3710 = vrot.slane %v3559, %v3709
    %v3712 = vadd.f32 %v3710, %v3703
    %v3714 = vsel %vm3561, %v3428, 0
    %3716 = vmatprep.subr.mxu0 %v3426
    %3717 = vmatpush1.msra.mxu0 %v3425
    %3718 = vmatprep.subr.mxu0 0.0
    %3719 = vmatpush1.msra.mxu0 0.0
    %3720 = vmatprep.subr.mxu0 0.0
    %3721 = vmatpush1.msra.mxu0 0.0
    %3722 = vmatprep.subr.mxu0 0.0
    %3723 = vmatpush1.msra.mxu0 0.0
    %3724 = vmatprep.subr.mxu0 0.0
    %3725 = vmatpush1.msra.mxu0 0.0
    %3726 = vmatprep.subr.mxu0 0.0
    %3727 = vmatpush1.msra.mxu0 0.0
    %3728 = vmatprep.subr.mxu0 0.0
    %3729 = vmatpush1.msra.mxu0 0.0
    %3730 = vmatprep.subr.mxu0 0.0
    %3731 = vmatpush1.msra.mxu0 0.0
    %3732 = vmatprep.subr.mxu0 0.0
    %3733 = vmatpush1.msra.mxu0 0.0
    %3734 = vmatprep.subr.mxu0 0.0
    %3735 = vmatpush1.msra.mxu0 0.0
    %3736 = vmatprep.subr.mxu0 0.0
    %3737 = vmatpush1.msra.mxu0 0.0
    %3738 = vmatprep.subr.mxu0 0.0
    %3739 = vmatpush1.msra.mxu0 0.0
    %3740 = vmatprep.subr.mxu0 0.0
    %3741 = vmatpush1.msra.mxu0 0.0
    %3742 = vmatprep.subr.mxu0 0.0
    %3743 = vmatpush1.msra.mxu0 0.0
    %3744 = vmatprep.subr.mxu0 0.0
    %3745 = vmatpush1.msra.mxu0 0.0
    %3746 = vmatprep.subr.mxu0 0.0
    %3747 = vmatpush1.msra.mxu0 0.0
    %3748 = vmatprep.subr.mxu0 0.0
    %3749 = vmatpush1.msra.mxu0 0.0
    %3750 = vmatprep.subr.mxu0 0.0
    %3751 = vmatpush1.msra.mxu0 0.0
    %3752 = vmatprep.subr.mxu0 0.0
    %3753 = vmatpush1.msra.mxu0 0.0
    %3754 = vmatprep.subr.mxu0 0.0
    %3755 = vmatpush1.msra.mxu0 0.0
    %3756 = vmatprep.subr.mxu0 0.0
    %3757 = vmatpush1.msra.mxu0 0.0
    %3758 = vmatprep.subr.mxu0 0.0
    %3759 = vmatpush1.msra.mxu0 0.0
    %3760 = vmatprep.subr.mxu0 0.0
    %3761 = vmatpush1.msra.mxu0 0.0
    %3762 = vmatprep.subr.mxu0 0.0
    %3763 = vmatpush1.msra.mxu0 0.0
    %3764 = vmatprep.subr.mxu0 0.0
    %3765 = vmatpush1.msra.mxu0 0.0
    %3766 = vmatprep.subr.mxu0 0.0
    %3767 = vmatpush1.msra.mxu0 0.0
    %3768 = vmatprep.subr.mxu0 0.0
    %3769 = vmatpush1.msra.mxu0 0.0
    %3770 = vmatprep.subr.mxu0 0.0
    %3771 = vmatpush1.msra.mxu0 0.0
    %3772 = vmatprep.subr.mxu0 0.0
    %3773 = vmatpush1.msra.mxu0 0.0
    %3774 = vmatprep.subr.mxu0 0.0
    %3775 = vmatpush1.msra.mxu0 0.0
    %3776 = vmatprep.subr.mxu0 0.0
    %3777 = vmatpush1.msra.mxu0 0.0
    %3778 = vmatprep.subr.mxu0 0.0
    %3779 = vmatpush1.msra.mxu0 0.0
    %3780 = vmatprep.mubr.f32.mxu0 0.0
    %3781 = vmatmul.mubr.f32.gmra.mrb[0].mxu0 %v3714
    %v3782 = vpop.f32.mrb[0].mxu0
    %v3783 = vadd.f32 0.0, %v3782
    %v3784 = vpop.f32.mrb[0].mxu0
    %v3785 = vadd.f32 0.0, %v3784
    %3786 = vdwg.mxu0
    %3787 = vmatprep.subr.mxu0 0.0
    %3788 = vmatpush1.msra.mxu0 %v3463
    %3789 = vmatprep.subr.mxu0 0.0
    %3790 = vmatpush1.msra.mxu0 %v3464
    %3791 = vmatprep.subr.mxu0 0.0
    %3792 = vmatpush1.msra.mxu0 %v3465
    %3793 = vmatprep.subr.mxu0 0.0
    %3794 = vmatpush1.msra.mxu0 %v3466
    %3795 = vmatprep.subr.mxu0 0.0
    %3796 = vmatpush1.msra.mxu0 %v3467
    %3797 = vmatprep.subr.mxu0 0.0
    %3798 = vmatpush1.msra.mxu0 %v3468
    %3799 = vmatprep.subr.mxu0 0.0
    %3800 = vmatpush1.msra.mxu0 %v3469
    %3801 = vmatprep.subr.mxu0 0.0
    %3802 = vmatpush1.msra.mxu0 %v3470
    %3803 = vmatprep.subr.mxu0 0.0
    %3804 = vmatpush1.msra.mxu0 %v3471
    %3805 = vmatprep.subr.mxu0 0.0
    %3806 = vmatpush1.msra.mxu0 %v3472
    %3807 = vmatprep.subr.mxu0 0.0
    %3808 = vmatpush1.msra.mxu0 %v3473
    %3809 = vmatprep.subr.mxu0 0.0
    %3810 = vmatpush1.msra.mxu0 %v3474
    %3811 = vmatprep.subr.mxu0 0.0
    %3812 = vmatpush1.msra.mxu0 %v3475
    %3813 = vmatprep.subr.mxu0 0.0
    %3814 = vmatpush1.msra.mxu0 %v3476
    %3815 = vmatprep.subr.mxu0 0.0
    %3816 = vmatpush1.msra.mxu0 %v3477
    %3817 = vmatprep.subr.mxu0 0.0
    %3818 = vmatpush1.msra.mxu0 %v3478
    %3819 = vmatprep.subr.mxu0 0.0
    %3820 = vmatpush1.msra.mxu0 %v3479
    %3821 = vmatprep.subr.mxu0 0.0
    %3822 = vmatpush1.msra.mxu0 %v3480
    %3823 = vmatprep.subr.mxu0 0.0
    %3824 = vmatpush1.msra.mxu0 %v3481
    %3825 = vmatprep.subr.mxu0 0.0
    %3826 = vmatpush1.msra.mxu0 %v3482
    %3827 = vmatprep.subr.mxu0 0.0
    %3828 = vmatpush1.msra.mxu0 %v3483
    %3829 = vmatprep.subr.mxu0 0.0
    %3830 = vmatpush1.msra.mxu0 %v3484
    %3831 = vmatprep.subr.mxu0 0.0
    %3832 = vmatpush1.msra.mxu0 %v3485
    %3833 = vmatprep.subr.mxu0 0.0
    %3834 = vmatpush1.msra.mxu0 %v3486
    %3835 = vmatprep.subr.mxu0 0.0
    %3836 = vmatpush1.msra.mxu0 %v3487
    %3837 = vmatprep.subr.mxu0 0.0
    %3838 = vmatpush1.msra.mxu0 %v3488
    %3839 = vmatprep.subr.mxu0 0.0
    %3840 = vmatpush1.msra.mxu0 %v3489
    %3841 = vmatprep.subr.mxu0 0.0
    %3842 = vmatpush1.msra.mxu0 %v3490
    %3843 = vmatprep.subr.mxu0 0.0
    %3844 = vmatpush1.msra.mxu0 %v3491
    %3845 = vmatprep.subr.mxu0 0.0
    %3846 = vmatpush1.msra.mxu0 %v3492
    %3847 = vmatprep.subr.mxu0 0.0
    %3848 = vmatpush1.msra.mxu0 %v3493
    %3849 = vmatprep.subr.mxu0 0.0
    %3850 = vmatpush1.msra.mxu0 %v3494
    %3851 = vmatprep.mubr.f32.mxu0 %v3785
    %3852 = vmatmul.mubr.f32.gmra.mrb[0].mxu0 %v3783
    %v3853 = vpop.f32.mrb[0].mxu0
    %v3854 = vadd.f32 0.0, %v3853
    %v3855 = vpop.f32.mrb[0].mxu0
    %3856 = vdwg.mxu0
    %v3857 = vadd.f32 %v3712, %v3854
    %v3859 = vsel %vm3561, %v3429, 0
    %3861 = vmatprep.subr.mxu0 %v3426
    %3862 = vmatpush1.msra.mxu0 %v3425
    %3863 = vmatprep.subr.mxu0 0.0
    %3864 = vmatpush1.msra.mxu0 0.0
    %3865 = vmatprep.subr.mxu0 0.0
    %3866 = vmatpush1.msra.mxu0 0.0
    %3867 = vmatprep.subr.mxu0 0.0
    %3868 = vmatpush1.msra.mxu0 0.0
    %3869 = vmatprep.subr.mxu0 0.0
    %3870 = vmatpush1.msra.mxu0 0.0
    %3871 = vmatprep.subr.mxu0 0.0
    %3872 = vmatpush1.msra.mxu0 0.0
    %3873 = vmatprep.subr.mxu0 0.0
    %3874 = vmatpush1.msra.mxu0 0.0
    %3875 = vmatprep.subr.mxu0 0.0
    %3876 = vmatpush1.msra.mxu0 0.0
    %3877 = vmatprep.subr.mxu0 0.0
    %3878 = vmatpush1.msra.mxu0 0.0
    %3879 = vmatprep.subr.mxu0 0.0
    %3880 = vmatpush1.msra.mxu0 0.0
    %3881 = vmatprep.subr.mxu0 0.0
    %3882 = vmatpush1.msra.mxu0 0.0
    %3883 = vmatprep.subr.mxu0 0.0
    %3884 = vmatpush1.msra.mxu0 0.0
    %3885 = vmatprep.subr.mxu0 0.0
    %3886 = vmatpush1.msra.mxu0 0.0
    %3887 = vmatprep.subr.mxu0 0.0
    %3888 = vmatpush1.msra.mxu0 0.0
    %3889 = vmatprep.subr.mxu0 0.0
    %3890 = vmatpush1.msra.mxu0 0.0
    %3891 = vmatprep.subr.mxu0 0.0
    %3892 = vmatpush1.msra.mxu0 0.0
    %3893 = vmatprep.subr.mxu0 0.0
    %3894 = vmatpush1.msra.mxu0 0.0
    %3895 = vmatprep.subr.mxu0 0.0
    %3896 = vmatpush1.msra.mxu0 0.0
    %3897 = vmatprep.subr.mxu0 0.0
    %3898 = vmatpush1.msra.mxu0 0.0
    %3899 = vmatprep.subr.mxu0 0.0
    %3900 = vmatpush1.msra.mxu0 0.0
    %3901 = vmatprep.subr.mxu0 0.0
    %3902 = vmatpush1.msra.mxu0 0.0
    %3903 = vmatprep.subr.mxu0 0.0
    %3904 = vmatpush1.msra.mxu0 0.0
    %3905 = vmatprep.subr.mxu0 0.0
    %3906 = vmatpush1.msra.mxu0 0.0
    %3907 = vmatprep.subr.mxu0 0.0
    %3908 = vmatpush1.msra.mxu0 0.0
    %3909 = vmatprep.subr.mxu0 0.0
    %3910 = vmatpush1.msra.mxu0 0.0
    %3911 = vmatprep.subr.mxu0 0.0
    %3912 = vmatpush1.msra.mxu0 0.0
    %3913 = vmatprep.subr.mxu0 0.0
    %3914 = vmatpush1.msra.mxu0 0.0
    %3915 = vmatprep.subr.mxu0 0.0
    %3916 = vmatpush1.msra.mxu0 0.0
    %3917 = vmatprep.subr.mxu0 0.0
    %3918 = vmatpush1.msra.mxu0 0.0
    %3919 = vmatprep.subr.mxu0 0.0
    %3920 = vmatpush1.msra.mxu0 0.0
    %3921 = vmatprep.subr.mxu0 0.0
    %3922 = vmatpush1.msra.mxu0 0.0
    %3923 = vmatprep.subr.mxu0 0.0
    %3924 = vmatpush1.msra.mxu0 0.0
    %3925 = vmatprep.mubr.f32.mxu0 0.0
    %3926 = vmatmul.mubr.f32.gmra.mrb[0].mxu0 %v3859
    %v3927 = vpop.f32.mrb[0].mxu0
    %v3928 = vadd.f32 0.0, %v3927
    %v3929 = vpop.f32.mrb[0].mxu0
    %v3930 = vadd.f32 0.0, %v3929
    %3931 = vdwg.mxu0
    %3932 = vmatprep.subr.mxu0 0.0
    %3933 = vmatpush1.msra.mxu0 %v3495
    %3934 = vmatprep.subr.mxu0 0.0
    %3935 = vmatpush1.msra.mxu0 %v3496
    %3936 = vmatprep.subr.mxu0 0.0
    %3937 = vmatpush1.msra.mxu0 %v3497
    %3938 = vmatprep.subr.mxu0 0.0
    %3939 = vmatpush1.msra.mxu0 %v3498
    %3940 = vmatprep.subr.mxu0 0.0
    %3941 = vmatpush1.msra.mxu0 %v3499
    %3942 = vmatprep.subr.mxu0 0.0
    %3943 = vmatpush1.msra.mxu0 %v3500
    %3944 = vmatprep.subr.mxu0 0.0
    %3945 = vmatpush1.msra.mxu0 %v3501
    %3946 = vmatprep.subr.mxu0 0.0
    %3947 = vmatpush1.msra.mxu0 %v3502
    %3948 = vmatprep.subr.mxu0 0.0
    %3949 = vmatpush1.msra.mxu0 %v3503
    %3950 = vmatprep.subr.mxu0 0.0
    %3951 = vmatpush1.msra.mxu0 %v3504
    %3952 = vmatprep.subr.mxu0 0.0
    %3953 = vmatpush1.msra.mxu0 %v3505
    %3954 = vmatprep.subr.mxu0 0.0
    %3955 = vmatpush1.msra.mxu0 %v3506
    %3956 = vmatprep.subr.mxu0 0.0
    %3957 = vmatpush1.msra.mxu0 %v3507
    %3958 = vmatprep.subr.mxu0 0.0
    %3959 = vmatpush1.msra.mxu0 %v3508
    %3960 = vmatprep.subr.mxu0 0.0
    %3961 = vmatpush1.msra.mxu0 %v3509
    %3962 = vmatprep.subr.mxu0 0.0
    %3963 = vmatpush1.msra.mxu0 %v3510
    %3964 = vmatprep.subr.mxu0 0.0
    %3965 = vmatpush1.msra.mxu0 %v3511
    %3966 = vmatprep.subr.mxu0 0.0
    %3967 = vmatpush1.msra.mxu0 %v3512
    %3968 = vmatprep.subr.mxu0 0.0
    %3969 = vmatpush1.msra.mxu0 %v3513
    %3970 = vmatprep.subr.mxu0 0.0
    %3971 = vmatpush1.msra.mxu0 %v3514
    %3972 = vmatprep.subr.mxu0 0.0
    %3973 = vmatpush1.msra.mxu0 %v3515
    %3974 = vmatprep.subr.mxu0 0.0
    %3975 = vmatpush1.msra.mxu0 %v3516
    %3976 = vmatprep.subr.mxu0 0.0
    %3977 = vmatpush1.msra.mxu0 %v3517
    %3978 = vmatprep.subr.mxu0 0.0
    %3979 = vmatpush1.msra.mxu0 %v3518
    %3980 = vmatprep.subr.mxu0 0.0
    %3981 = vmatpush1.msra.mxu0 %v3519
    %3982 = vmatprep.subr.mxu0 0.0
    %3983 = vmatpush1.msra.mxu0 %v3520
    %3984 = vmatprep.subr.mxu0 0.0
    %3985 = vmatpush1.msra.mxu0 %v3521
    %3986 = vmatprep.subr.mxu0 0.0
    %3987 = vmatpush1.msra.mxu0 %v3522
    %3988 = vmatprep.subr.mxu0 0.0
    %3989 = vmatpush1.msra.mxu0 %v3523
    %3990 = vmatprep.subr.mxu0 0.0
    %3991 = vmatpush1.msra.mxu0 %v3524
    %3992 = vmatprep.subr.mxu0 0.0
    %3993 = vmatpush1.msra.mxu0 %v3525
    %3994 = vmatprep.subr.mxu0 0.0
    %3995 = vmatpush1.msra.mxu0 %v3526
    %3996 = vmatprep.mubr.f32.mxu0 %v3930
    %3997 = vmatmul.mubr.f32.gmra.mrb[0].mxu0 %v3928
    %v3998 = vpop.f32.mrb[0].mxu0
    %v3999 = vadd.f32 0.0, %v3998
    %v4000 = vpop.f32.mrb[0].mxu0
    %4001 = vdwg.mxu0
    %v4002 = vadd.f32 %v3857, %v3999
    %v4004 = vsel %vm3561, %v3430, 0
    %4006 = vmatprep.subr.mxu0 %v3426
    %4007 = vmatpush1.msra.mxu0 %v3425
    %4008 = vmatprep.subr.mxu0 0.0
    %4009 = vmatpush1.msra.mxu0 0.0
    %4010 = vmatprep.subr.mxu0 0.0
    %4011 = vmatpush1.msra.mxu0 0.0
    %4012 = vmatprep.subr.mxu0 0.0
    %4013 = vmatpush1.msra.mxu0 0.0
    %4014 = vmatprep.subr.mxu0 0.0
    %4015 = vmatpush1.msra.mxu0 0.0
    %4016 = vmatprep.subr.mxu0 0.0
    %4017 = vmatpush1.msra.mxu0 0.0
    %4018 = vmatprep.subr.mxu0 0.0
    %4019 = vmatpush1.msra.mxu0 0.0
    %4020 = vmatprep.subr.mxu0 0.0
    %4021 = vmatpush1.msra.mxu0 0.0
    %4022 = vmatprep.subr.mxu0 0.0
    %4023 = vmatpush1.msra.mxu0 0.0
    %4024 = vmatprep.subr.mxu0 0.0
    %4025 = vmatpush1.msra.mxu0 0.0
    %4026 = vmatprep.subr.mxu0 0.0
    %4027 = vmatpush1.msra.mxu0 0.0
    %4028 = vmatprep.subr.mxu0 0.0
    %4029 = vmatpush1.msra.mxu0 0.0
    %4030 = vmatprep.subr.mxu0 0.0
    %4031 = vmatpush1.msra.mxu0 0.0
    %4032 = vmatprep.subr.mxu0 0.0
    %4033 = vmatpush1.msra.mxu0 0.0
    %4034 = vmatprep.subr.mxu0 0.0
    %4035 = vmatpush1.msra.mxu0 0.0
    %4036 = vmatprep.subr.mxu0 0.0
    %4037 = vmatpush1.msra.mxu0 0.0
    %4038 = vmatprep.subr.mxu0 0.0
    %4039 = vmatpush1.msra.mxu0 0.0
    %4040 = vmatprep.subr.mxu0 0.0
    %4041 = vmatpush1.msra.mxu0 0.0
    %4042 = vmatprep.subr.mxu0 0.0
    %4043 = vmatpush1.msra.mxu0 0.0
    %4044 = vmatprep.subr.mxu0 0.0
    %4045 = vmatpush1.msra.mxu0 0.0
    %4046 = vmatprep.subr.mxu0 0.0
    %4047 = vmatpush1.msra.mxu0 0.0
    %4048 = vmatprep.subr.mxu0 0.0
    %4049 = vmatpush1.msra.mxu0 0.0
    %4050 = vmatprep.subr.mxu0 0.0
    %4051 = vmatpush1.msra.mxu0 0.0
    %4052 = vmatprep.subr.mxu0 0.0
    %4053 = vmatpush1.msra.mxu0 0.0
    %4054 = vmatprep.subr.mxu0 0.0
    %4055 = vmatpush1.msra.mxu0 0.0
    %4056 = vmatprep.subr.mxu0 0.0
    %4057 = vmatpush1.msra.mxu0 0.0
    %4058 = vmatprep.subr.mxu0 0.0
    %4059 = vmatpush1.msra.mxu0 0.0
    %4060 = vmatprep.subr.mxu0 0.0
    %4061 = vmatpush1.msra.mxu0 0.0
    %4062 = vmatprep.subr.mxu0 0.0
    %4063 = vmatpush1.msra.mxu0 0.0
    %4064 = vmatprep.subr.mxu0 0.0
    %4065 = vmatpush1.msra.mxu0 0.0
    %4066 = vmatprep.subr.mxu0 0.0
    %4067 = vmatpush1.msra.mxu0 0.0
    %4068 = vmatprep.subr.mxu0 0.0
    %4069 = vmatpush1.msra.mxu0 0.0
    %4070 = vmatprep.mubr.f32.mxu0 0.0
    %4071 = vmatmul.mubr.f32.gmra.mrb[0].mxu0 %v4004
    %v4072 = vpop.f32.mrb[0].mxu0
    %v4073 = vadd.f32 0.0, %v4072
    %v4074 = vpop.f32.mrb[0].mxu0
    %v4075 = vadd.f32 0.0, %v4074
    %4076 = vdwg.mxu0
    %4077 = vmatprep.subr.mxu0 0.0
    %4078 = vmatpush1.msra.mxu0 %v3527
    %4079 = vmatprep.subr.mxu0 0.0
    %4080 = vmatpush1.msra.mxu0 %v3528
    %4081 = vmatprep.subr.mxu0 0.0
    %4082 = vmatpush1.msra.mxu0 %v3529
    %4083 = vmatprep.subr.mxu0 0.0
    %4084 = vmatpush1.msra.mxu0 %v3530
    %4085 = vmatprep.subr.mxu0 0.0
    %4086 = vmatpush1.msra.mxu0 %v3531
    %4087 = vmatprep.subr.mxu0 0.0
    %4088 = vmatpush1.msra.mxu0 %v3532
    %4089 = vmatprep.subr.mxu0 0.0
    %4090 = vmatpush1.msra.mxu0 %v3533
    %4091 = vmatprep.subr.mxu0 0.0
    %4092 = vmatpush1.msra.mxu0 %v3534
    %4093 = vmatprep.subr.mxu0 0.0
    %4094 = vmatpush1.msra.mxu0 %v3535
    %4095 = vmatprep.subr.mxu0 0.0
    %4096 = vmatpush1.msra.mxu0 %v3536
    %4097 = vmatprep.subr.mxu0 0.0
    %4098 = vmatpush1.msra.mxu0 %v3537
    %4099 = vmatprep.subr.mxu0 0.0
    %4100 = vmatpush1.msra.mxu0 %v3538
    %4101 = vmatprep.subr.mxu0 0.0
    %4102 = vmatpush1.msra.mxu0 %v3539
    %4103 = vmatprep.subr.mxu0 0.0
    %4104 = vmatpush1.msra.mxu0 %v3540
    %4105 = vmatprep.subr.mxu0 0.0
    %4106 = vmatpush1.msra.mxu0 %v3541
    %4107 = vmatprep.subr.mxu0 0.0
    %4108 = vmatpush1.msra.mxu0 %v3542
    %4109 = vmatprep.subr.mxu0 0.0
    %4110 = vmatpush1.msra.mxu0 %v3543
    %4111 = vmatprep.subr.mxu0 0.0
    %4112 = vmatpush1.msra.mxu0 %v3544
    %4113 = vmatprep.subr.mxu0 0.0
    %4114 = vmatpush1.msra.mxu0 %v3545
    %4115 = vmatprep.subr.mxu0 0.0
    %4116 = vmatpush1.msra.mxu0 %v3546
    %4117 = vmatprep.subr.mxu0 0.0
    %4118 = vmatpush1.msra.mxu0 %v3547
    %4119 = vmatprep.subr.mxu0 0.0
    %4120 = vmatpush1.msra.mxu0 %v3548
    %4121 = vmatprep.subr.mxu0 0.0
    %4122 = vmatpush1.msra.mxu0 %v3549
    %4123 = vmatprep.subr.mxu0 0.0
    %4124 = vmatpush1.msra.mxu0 %v3550
    %4125 = vmatprep.subr.mxu0 0.0
    %4126 = vmatpush1.msra.mxu0 %v3551
    %4127 = vmatprep.subr.mxu0 0.0
    %4128 = vmatpush1.msra.mxu0 %v3552
    %4129 = vmatprep.subr.mxu0 0.0
    %4130 = vmatpush1.msra.mxu0 %v3553
    %4131 = vmatprep.subr.mxu0 0.0
    %4132 = vmatpush1.msra.mxu0 %v3554
    %4133 = vmatprep.subr.mxu0 0.0
    %4134 = vmatpush1.msra.mxu0 %v3555
    %4135 = vmatprep.subr.mxu0 0.0
    %4136 = vmatpush1.msra.mxu0 %v3556
    %4137 = vmatprep.subr.mxu0 0.0
    %4138 = vmatpush1.msra.mxu0 %v3557
    %4139 = vmatprep.subr.mxu0 0.0
    %4140 = vmatpush1.msra.mxu0 %v3558
    %4141 = vmatprep.mubr.f32.mxu0 %v4075
    %4142 = vmatmul.mubr.f32.gmra.mrb[0].mxu0 %v4073
    %v4143 = vpop.f32.mrb[0].mxu0
    %v4144 = vadd.f32 0.0, %v4143
    %v4145 = vpop.f32.mrb[0].mxu0
    %4146 = vdwg.mxu0
    %v4147 = vadd.f32 %v4002, %v4144
    %v4148 = vmul.f32 %v4147, 0.5
    %v4149 = vmul.f32 %v4148, 1.442695
    %v4150 = vpow.pop %v4149
    %4152 = vrot.lane.b32.xlu0 %v4150, 120
    %v4153 = vpop.permute.xlu0 %4152
    %v4155 = vmul.f32 %v3560, %v4153
    %v4156 = vadd.f32 %v4147, %v4155
    %vm4157 = vcmask 58368
    %4158 = vst.msk [vmem:[#allocation2] sm:$0x3] %vm4157, %v4156
    %4159 = vst.msk [vmem:[#allocation4] sm:$0x3] %vm4157, %v4147
    %4161 = vrot.lane.b32.xlu0 %v4147, 120
    %v4162 = vpop.permute.xlu0 %4161
    %4164 = vst.msk [vmem:[#allocation6] sm:$0x3] %vm4157, %v4162
    // Predicated region
    $region106: #{encoder_forward.1} parent=1 // pred_check
      _
    $region107: #{encoder_forward.1} parent=1 // pred_check_branch
      %4166 = sbr.rel (0) target = $region109
    $region108: #{encoder_forward.1} parent=1 // pred_region
      %s4168 = ssub.s32 32, 32
      %4169 = vsyncadd [#allocation3], %s4168
      %s4171 = sshll.u32 [#allocation2], 4
      %s4172 = int_to_ptr.vmem [resolvable:$true] %s4171
      %4174 = dma.vmem_to_hbm [thread:$0]  %s4172, 32, %s26, [#allocation3]
    $region109: #{encoder_forward.1} parent=1 // pred_fallthru
      _
    // Predicated region
    $region110: #{encoder_forward.1} parent=1 // pred_check
      _
    $region111: #{encoder_forward.1} parent=1 // pred_check_branch
      %4176 = sbr.rel (0) target = $region113
    $region112: #{encoder_forward.1} parent=1 // pred_region
      %s4178 = ssub.s32 32, 32
      %4179 = vsyncadd [#allocation5], %s4178
      %s4181 = sshll.u32 [#allocation4], 4
      %s4182 = int_to_ptr.vmem [resolvable:$true] %s4181
      %4184 = dma.vmem_to_hbm [thread:$0]  %s4182, 32, %s27, [#allocation5]
    $region113: #{encoder_forward.1} parent=1 // pred_fallthru
      _
    // Predicated region
    $region114: #{encoder_forward.1} parent=1 // pred_check
      _
    $region115: #{encoder_forward.1} parent=1 // pred_check_branch
      %4186 = sbr.rel (0) target = $region117
    $region116: #{encoder_forward.1} parent=1 // pred_region
      %s4188 = ssub.s32 32, 32
      %4189 = vsyncadd [#allocation5], %s4188
      %s4191 = sshll.u32 [#allocation6], 4
      %s4192 = int_to_ptr.vmem [resolvable:$true] %s4191
      %4194 = dma.vmem_to_hbm [thread:$0]  %s4192, 32, %s28, [#allocation5]
    $region117: #{encoder_forward.1} parent=1 // pred_fallthru
      _
    // Predicated region
    $region118: #{encoder_forward.1} parent=1 // pred_check
      _
    $region119: #{encoder_forward.1} parent=1 // pred_check_branch
      %4196 = sbr.rel (0) target = $region121
    $region120: #{encoder_forward.1} parent=1 // pred_region
      %4197 = dma.done [#allocation3], 32
    $region121: #{encoder_forward.1} parent=1 // pred_fallthru
      _
    // Predicated region
    $region122: #{encoder_forward.1} parent=1 // pred_check
      _
    $region123: #{encoder_forward.1} parent=1 // pred_check_branch
      %4199 = sbr.rel (0) target = $region125
    $region124: #{encoder_forward.1} parent=1 // pred_region
      %4200 = dma.done [#allocation5], 32
    $region125: #{encoder_forward.1} parent=1 // pred_fallthru
      _
    // Predicated region
    $region126: #{encoder_forward.1} parent=1 // pred_check
      _
    $region127: #{encoder_forward.1} parent=1 // pred_check_branch
      %4202 = sbr.rel (0) target = $region129
    $region128: #{encoder_forward.1} parent=1 // pred_region
      %4203 = dma.done [#allocation5], 32
    $region129: #{encoder_forward.1} parent=1 // pred_fallthru
      _
    %4204 = vsyncpa [#allocation3], 1
    %4205 = vsyncpa [#allocation5], 1

</llo_original>
